<compile_context>
chip_gen: v7x
topology: tpu7x:2x2x1
jax: 0.10.0
libtpu: 0.0.40
codegen_flags: <defaults>
</compile_context>

<pallas_src>
import functools

import jax
import jax.numpy as jnp
from jax import lax
from jax.experimental import pallas as pl
from jax.experimental.pallas import tpu as pltpu

LANE = 128


def _vmem_limit_bytes():
    """Per-generation scoped-VMEM budget: half of physical, clamped to [32, 96] MiB."""
    cap = 128 * 1024 * 1024
    try:
        cap = int(getattr(pltpu.get_tpu_info(), "vmem_capacity_bytes", cap))
    except Exception:
        pass
    return int(min(96 * 1024 * 1024, max(32 * 1024 * 1024, cap // 2)))


_VMEM_LIMIT = _vmem_limit_bytes()


# ----------------------------------------------------------------------------
# small static helpers
# ----------------------------------------------------------------------------
def _round_up(x, m):
    return (x + m - 1) // m * m


def _pick_row_tile(ho, wo, max_rows, prefer_multi):
    """Largest output-row tile TH dividing Ho with TH*Wo <= max_rows (and TH*Wo a
    sublane multiple unless TH == Ho). If prefer_multi, prefer >= 2 tiles so a
    parallel grid axis with extent >= 2 exists (v7x 2-TC sharding)."""
    cands = [th for th in range(1, ho + 1) if ho % th == 0]

    def ok(th):
        rows = th * wo
        return rows <= max_rows and (rows % 8 == 0 or th == ho)

    valid = [th for th in cands if ok(th)]
    if not valid:
        return ho
    if prefer_multi:
        multi = [th for th in valid if ho // th >= 2]
        if multi:
            return max(multi)
    return max(valid)


def _pick_m_tile(m, max_tile=4096):
    """Large lane-dense M tile for the mem-bound epilogue / matmul kernels."""
    for tm in (4096, 2048, 1024, 512, 256, 128, 64, 32, 16, 8):
        if tm <= max_tile and m % tm == 0 and m // tm >= 2:
            return tm
    return m


# ----------------------------------------------------------------------------
# Pallas kernels
# ----------------------------------------------------------------------------
def _matmul_stats_kernel(x_ref, w_ref, o_ref, stats_ref):
    """o = x @ w (MXU, f32 accumulate) + per-tile channel [sum, sumsq] for BN."""
    acc = jnp.dot(x_ref[...], w_ref[...], preferred_element_type=jnp.float32)
    o_ref[...] = acc.astype(o_ref.dtype)
    stats_ref[0, 0:1, :] = jnp.sum(acc, axis=0, keepdims=True)
    stats_ref[0, 1:2, :] = jnp.sum(acc * acc, axis=0, keepdims=True)


def _conv_stats_kernel(x_ref, w_ref, o_ref, stats_ref, *, k, th, wo):
    """KxK stride-1 conv as ONE K-packed MXU matmul per row tile.

    x_ref:     (1, Hp, Wp, CI) bf16 -- full padded image (resident across tiles)
    w_ref:     (k*k*CI, CO)    bf16 -- taps packed along the contraction dim
    o_ref:     (1, th*Wo, CO)  bf16 -- pre-BN conv output tile
    stats_ref: (1, 1, 2, CO)   f32  -- per-tile [sum, sumsq] over rows (for BN)
    """
    ci = x_ref.shape[-1]
    halo = th + k - 1
    r0 = pl.program_id(1) * th
    # Column-packed halo slab: (halo, wo, k*ci).  Only k-1 of the column slices
    # are sublane-unaligned (vs k*k per-tap slices in the unpacked formulation);
    # the concatenations are lane-aligned (ci multiples of 128).
    colcat = jnp.concatenate(
        [x_ref[0, pl.ds(r0, halo), j:j + wo, :] for j in range(k)], axis=-1)
    # Row-shift pack along K -> (th, wo, k*k*ci); accumulation happens in-MXU.
    packed = jnp.concatenate([colcat[i:i + th] for i in range(k)], axis=-1)
    packed = packed.reshape(th * wo, k * k * ci)
    acc = jnp.dot(packed, w_ref[...], preferred_element_type=jnp.float32)
    o_ref[0] = acc.astype(o_ref.dtype)
    stats_ref[0, 0, 0:1, :] = jnp.sum(acc, axis=0, keepdims=True)
    stats_ref[0, 0, 1:2, :] = jnp.sum(acc * acc, axis=0, keepdims=True)


def _affine_relu_kernel(h_ref, scale_ref, shift_ref, o_ref):
    """BN-apply (precomputed per-channel scale/shift) + ReLU."""
    h = h_ref[...].astype(jnp.float32)
    o_ref[...] = jnp.maximum(h * scale_ref[...] + shift_ref[...], 0.0).astype(o_ref.dtype)


def _final_fused_kernel(h2_ref, x_ref, wsc_ref, bsc_ref, scale_ref, shift_ref, o_ref):
    """BN2-apply + ReLU, shortcut 1x1 conv (MXU) + bias, residual add, final ReLU."""
    a2 = jnp.maximum(h2_ref[...].astype(jnp.float32) * scale_ref[...] + shift_ref[...], 0.0)
    sc = jnp.dot(x_ref[...], wsc_ref[...], preferred_element_type=jnp.float32) + bsc_ref[...]
    o_ref[...] = jnp.maximum(a2 + sc, 0.0).astype(o_ref.dtype)


# ----------------------------------------------------------------------------
# Pallas wrappers
# ----------------------------------------------------------------------------
def matmul_stats(x, w):
    """x: (M, K) bf16, w: (K, CO) bf16 -> (o (M, CO) bf16, stats (nt, 2, CO) f32)."""
    m, kdim = x.shape
    co = w.shape[-1]
    tm = _pick_m_tile(m)
    nt = m // tm
    return pl.pallas_call(
        _matmul_stats_kernel,
        out_shape=(
            jax.ShapeDtypeStruct((m, co), jnp.bfloat16),
            jax.ShapeDtypeStruct((nt, 2, co), jnp.float32),
        ),
        grid_spec=pltpu.PrefetchScalarGridSpec(
            num_scalar_prefetch=0,
            grid=(nt,),
            in_specs=[
                pl.BlockSpec((tm, kdim), lambda i: (i, 0)),
                pl.BlockSpec((kdim, co), lambda i: (0, 0)),
            ],
            out_specs=[
                pl.BlockSpec((tm, co), lambda i: (i, 0)),
                pl.BlockSpec((1, 2, co), lambda i: (i, 0, 0)),
            ],
        ),
        compiler_params=pltpu.CompilerParams(
            dimension_semantics=("parallel",), vmem_limit_bytes=_VMEM_LIMIT),
    )(x, w)


def conv2d_stats(x_pad, w_packed, k):
    """x_pad: (N, Hp, Wp, CI) bf16 (spatially padded), w_packed: (k*k*CI, CO) bf16.

    Returns pre-BN conv output (N, Ho*Wo, CO) bf16, per-tile stats
    (N, n_tiles, 2, CO) f32, and Ho, Wo.  Stride-1 only.
    """
    n, hp, wp, ci = x_pad.shape
    co = w_packed.shape[-1]
    ho, wo = hp - k + 1, wp - k + 1
    # Keep the K-packed matmul operand (th*wo, k*k*ci) bf16 around <= ~12 MiB.
    max_rows = min(2048, max(64, (12 * 1024 * 1024) // (k * k * ci * 2)))
    th = _pick_row_tile(ho, wo, max_rows, prefer_multi=(n == 1))
    nth = ho // th

    h, st = pl.pallas_call(
        functools.partial(_conv_stats_kernel, k=k, th=th, wo=wo),
        out_shape=(
            jax.ShapeDtypeStruct((n, ho * wo, co), jnp.bfloat16),
            jax.ShapeDtypeStruct((n, nth, 2, co), jnp.float32),
        ),
        grid_spec=pltpu.PrefetchScalarGridSpec(
            num_scalar_prefetch=0,
            grid=(n, nth),
            in_specs=[
                # TODO(synk): halo-tiled input spec for very large images (v7x).
                pl.BlockSpec((1, hp, wp, ci), lambda b, t: (b, 0, 0, 0)),
                pl.BlockSpec((k * k * ci, co), lambda b, t: (0, 0)),
            ],
            out_specs=[
                pl.BlockSpec((1, th * wo, co), lambda b, t: (b, t, 0)),
                pl.BlockSpec((1, 1, 2, co), lambda b, t: (b, t, 0, 0)),
            ],
        ),
        compiler_params=pltpu.CompilerParams(
            dimension_semantics=("parallel", "parallel"),
            vmem_limit_bytes=_VMEM_LIMIT,
        ),
    )(x_pad, w_packed)
    return h, st, ho, wo


def affine_relu(h, scale, shift):
    """h: (M, C) bf16; out = relu(h*scale + shift) per channel, bf16."""
    m, c = h.shape
    tm = _pick_m_tile(m)
    return pl.pallas_call(
        _affine_relu_kernel,
        out_shape=jax.ShapeDtypeStruct((m, c), jnp.bfloat16),
        grid_spec=pltpu.PrefetchScalarGridSpec(
            num_scalar_prefetch=0,
            grid=(m // tm,),
            in_specs=[
                pl.BlockSpec((tm, c), lambda i: (i, 0)),
                pl.BlockSpec((1, c), lambda i: (0, 0)),
                pl.BlockSpec((1, c), lambda i: (0, 0)),
            ],
            out_specs=pl.BlockSpec((tm, c), lambda i: (i, 0)),
        ),
        compiler_params=pltpu.CompilerParams(
            dimension_semantics=("parallel",), vmem_limit_bytes=_VMEM_LIMIT),
    )(h, scale.reshape(1, c).astype(jnp.float32), shift.reshape(1, c).astype(jnp.float32))


def final_fused(h2, x_sc, wsc, bsc, scale, shift):
    """out = relu( relu(h2*scale+shift) + x_sc @ wsc + bsc )   (bf16 store)."""
    m, c = h2.shape
    ksc = x_sc.shape[1]
    tm = _pick_m_tile(m)
    return pl.pallas_call(
        _final_fused_kernel,
        out_shape=jax.ShapeDtypeStruct((m, c), jnp.bfloat16),
        grid_spec=pltpu.PrefetchScalarGridSpec(
            num_scalar_prefetch=0,
            grid=(m // tm,),
            in_specs=[
                pl.BlockSpec((tm, c), lambda i: (i, 0)),
                pl.BlockSpec((tm, ksc), lambda i: (i, 0)),
                pl.BlockSpec((ksc, c), lambda i: (0, 0)),
                pl.BlockSpec((1, c), lambda i: (0, 0)),
                pl.BlockSpec((1, c), lambda i: (0, 0)),
                pl.BlockSpec((1, c), lambda i: (0, 0)),
            ],
            out_specs=pl.BlockSpec((tm, c), lambda i: (i, 0)),
        ),
        compiler_params=pltpu.CompilerParams(
            dimension_semantics=("parallel",), vmem_limit_bytes=_VMEM_LIMIT),
    )(h2, x_sc, wsc, bsc, scale.reshape(1, c), shift.reshape(1, c))


# ----------------------------------------------------------------------------
# Glue (plain JAX, tiny/one-shot)
# ----------------------------------------------------------------------------
def _prep_conv_weight(w_oihw, cpi, cpo):
    """PyTorch (O, I, kh, kw) -> K-packed (kh*kw*CPI, CPO) bf16, row order
    (i*kw + j)*CPI + c_in  (matches the in-kernel tap packing)."""
    o, i, kh, kw = w_oihw.shape
    wm = jnp.transpose(w_oihw, (2, 3, 1, 0))                    # (kh, kw, I, O)
    wm = jnp.pad(wm, ((0, 0), (0, 0), (0, cpi - i), (0, cpo - o)))
    return wm.reshape(kh * kw * cpi, cpo).astype(jnp.bfloat16)


def _bn_scale_shift(stats, gamma, beta, count, eps=1e-5):
    """Reduce per-tile [sum, sumsq] -> per-channel BN scale/shift (f32, tiny).

    TODO(synk): E[x^2]-E[x]^2 in f32 can cancel for large-mean activations; a
    shifted/Welford reduction would be more robust."""
    co = stats.shape[-1]
    s = jnp.sum(stats.reshape(-1, 2, co), axis=0)               # (2, C)
    mean = s[0] / count
    var = jnp.maximum(s[1] / count - mean * mean, 0.0)          # biased var (training BN)
    scale = gamma * lax.rsqrt(var + eps)
    shift = beta - mean * scale
    return scale, shift


# ----------------------------------------------------------------------------
# ResidualBlock forward
# ----------------------------------------------------------------------------
@functools.partial(jax.jit, static_argnames=("stride", "padding"))
def residual_block_forward(x_nchw, params, *, stride=1, padding=1):
    # TODO(synk): stride > 1 not supported in the Pallas conv path.
    assert stride == 1
    n, cin, hh, ww = x_nchw.shape
    cout, _, k, _ = params["w1"].shape
    # Residual add requires "same" conv output size at stride 1.
    assert 2 * padding == k - 1
    cp = _round_up(cout, LANE)
    ho, wo = hh, ww
    m = n * ho * wo

    # NCHW -> NHWC, spatial zero-pad (small: real input channels only).
    x_nhwc = jnp.transpose(x_nchw, (0, 2, 3, 1)).astype(jnp.float32)
    x_sp = jnp.pad(x_nhwc, ((0, 0), (padding, padding), (padding, padding), (0, 0)))

    g1 = jnp.pad(params["g1"].astype(jnp.float32), (0, cp - cout))
    be1 = jnp.pad(params["be1"].astype(jnp.float32), (0, cp - cout))
    g2 = jnp.pad(params["g2"].astype(jnp.float32), (0, cp - cout))
    be2 = jnp.pad(params["be2"].astype(jnp.float32), (0, cp - cout))
    bsc = jnp.pad(params["b_sc"], (0, cp - cout)).astype(jnp.float32).reshape(1, cp)
    wsc_2d = params["w_sc"][:, :, 0, 0].T                       # (Cin, Cout)

    # ---- Layer 0: conv3x3 (+ BN stats) --------------------------------------
    kk_cin = k * k * cin
    if kk_cin <= LANE:
        # K-packed im2col path: one dense K=128 matmul, 9x less MXU work than
        # shifted K=128-per-tap matmuls over the channel-padded input.  The slab
        # is the same HBM size as a 128-channel-padded input would have been.
        slab = jnp.concatenate(
            [x_sp[:, i:i + ho, j:j + wo, :] for i in range(k) for j in range(k)],
            axis=-1)                                             # (n, ho, wo, k*k*cin)
        slab = jnp.pad(slab, ((0, 0), (0, 0), (0, 0), (0, LANE - kk_cin)))
        slab = slab.reshape(m, LANE).astype(jnp.bfloat16)
        w1p = jnp.transpose(params["w1"], (2, 3, 1, 0)).reshape(kk_cin, cout)
        w1p = jnp.pad(w1p, ((0, LANE - kk_cin), (0, cp - cout))).astype(jnp.bfloat16)
        h1, st1 = matmul_stats(slab, w1p)
        # Shortcut reuses the slab: its centre tap is exactly x[r, c, :], so no
        # separate x_flat materialization is needed.
        center = (k // 2) * k + (k // 2)
        wsc = jnp.zeros((LANE, cp), jnp.float32)
        wsc = wsc.at[center * cin:(center + 1) * cin, :cout].set(wsc_2d)
        wsc = wsc.astype(jnp.bfloat16)
        sc_in = slab
    else:
        # General fallback: channel-padded input + K-packed shifted-conv kernel.
        cpi = _round_up(cin, LANE)
        x_cp = jnp.pad(x_sp, ((0, 0), (0, 0), (0, 0), (0, cpi - cin))).astype(jnp.bfloat16)
        w1g = _prep_conv_weight(params["w1"], cpi, cp)
        h1_img, st1, _, _ = conv2d_stats(x_cp, w1g, k)
        h1 = h1_img.reshape(m, cp)
        wsc = jnp.pad(wsc_2d, ((0, cpi - cin), (0, cp - cout))).astype(jnp.bfloat16)
        # Shortcut input: interior slice of the already-padded buffer.
        sc_in = x_cp[:, padding:padding + ho, padding:padding + wo, :].reshape(m, cpi)

    scale1, shift1 = _bn_scale_shift(st1, g1, be1, m)
    a1 = affine_relu(h1, scale1, shift1)                         # (m, cp) bf16

    # ---- Layer 1: conv3x3 (+ BN stats) --------------------------------------
    # TODO(synk): this pad is an extra HBM round trip of the activation; could be
    # removed by fusing BN1+ReLU+halo handling into the conv2 kernel.
    a1_sp = jnp.pad(a1.reshape(n, ho, wo, cp),
                    ((0, 0), (padding, padding), (padding, padding), (0, 0)))
    w2p = _prep_conv_weight(params["w2"], cp, cp)
    h2_img, st2, ho2, wo2 = conv2d_stats(a1_sp, w2p, k)
    scale2, shift2 = _bn_scale_shift(st2, g2, be2, n * ho2 * wo2)

    # ---- Fused epilogue: BN2+ReLU, shortcut matmul + bias, add, final ReLU ---
    out = final_fused(h2_img.reshape(n * ho2 * wo2, cp), sc_in, wsc, bsc, scale2, shift2)

    out = out.reshape(n, ho2, wo2, cp)[..., :cout].astype(jnp.float32)
    return jnp.transpose(out, (0, 3, 1, 2))                      # back to NCHW


# ----------------------------------------------------------------------------
# Pure-JAX reference (for correctness check)
# ----------------------------------------------------------------------------
def residual_block_reference(x, params, stride=1, padding=1):
    def conv(x, w, b, s, p):
        out = lax.conv_general_dilated(
            x, w, (s, s), [(p, p), (p, p)],
            dimension_numbers=("NCHW", "OIHW", "NCHW"),
        )
        if b is not None:
            out = out + b[None, :, None, None]
        return out

    def bn(x, g, b):
        mean = x.mean(axis=(0, 2, 3), keepdims=True)
        var = ((x - mean) ** 2).mean(axis=(0, 2, 3), keepdims=True)
        return (x - mean) * lax.rsqrt(var + 1e-5) * g[None, :, None, None] + b[None, :, None, None]

    sc = conv(x, params["w_sc"], params["b_sc"], stride, 0)
    h = jnp.maximum(bn(conv(x, params["w1"], None, stride, padding),
                       params["g1"], params["be1"]), 0.0)
    h = jnp.maximum(bn(conv(h, params["w2"], None, 1, padding),
                       params["g2"], params["be2"]), 0.0)
    return jnp.maximum(h + sc, 0.0)


# ----------------------------------------------------------------------------
# Main
# ----------------------------------------------------------------------------
if __name__ == "__main__":
    key = jax.random.PRNGKey(0)
    kx, k1, k2, k3, k4 = jax.random.split(key, 5)

    N, Cin, Cout, H, W = 2, 4, 8, 16, 16
    K = 3
    stride, padding = 1, 1

    x = jax.random.normal(kx, (N, Cin, H, W), jnp.float32)

    params = {
        # conv weights: PyTorch (O, I, kh, kw), bias=False for the two 3x3 convs
        "w1": 0.1 * jax.random.normal(k1, (Cout, Cin, K, K), jnp.float32),
        "w2": 0.1 * jax.random.normal(k2, (Cout, Cout, K, K), jnp.float32),
        # shortcut 1x1 conv (bias=True, nn.Conv2d default)
        "w_sc": 0.1 * jax.random.normal(k3, (Cout, Cin, 1, 1), jnp.float32),
        "b_sc": 0.01 * jax.random.normal(k4, (Cout,), jnp.float32),
        # BatchNorm affine params (PyTorch init: weight=1, bias=0)
        "g1": jnp.ones((Cout,), jnp.float32),
        "be1": jnp.zeros((Cout,), jnp.float32),
        "g2": jnp.ones((Cout,), jnp.float32),
        "be2": jnp.zeros((Cout,), jnp.float32),
    }

    out = residual_block_forward(x, params, stride=stride, padding=padding)
    out = jax.block_until_ready(out)

    # Reference with bf16-rounded MXU operands (kernel uses bf16 inputs, f32 accum).
    def _bf16_round(a):
        return a.astype(jnp.bfloat16).astype(jnp.float32)

    ref_params = dict(params)
    for name in ("w1", "w2", "w_sc"):
        ref_params[name] = _bf16_round(params[name])
    ref = residual_block_reference(_bf16_round(x), ref_params, stride=stride, padding=padding)
    ref = jax.block_until_ready(ref)

    assert out.shape == (N, Cout, H, W), out.shape
    max_err = float(jnp.max(jnp.abs(out - ref)))
    assert jnp.allclose(out, ref, rtol=5e-2, atol=5e-2), max_err

    print("KERNEL_OK")
</pallas_src>

<mosaic_0001>
module attributes {stable_mosaic.version = 11 : i64} {
  func.func @_matmul_stats_kernel(%arg0: i32, %arg1: memref<256x128xbf16, #tpu.memory_space<vmem>>, %arg2: memref<128x128xbf16, #tpu.memory_space<vmem>>, %arg3: memref<256x128xbf16, #tpu.memory_space<vmem>>, %arg4: memref<1x2x128xf32, #tpu.memory_space<vmem>>) attributes {dimension_semantics = [#tpu.dimension_semantics<parallel>], iteration_bounds = array<i64: 2>, scalar_prefetch = 0 : i64, scratch_operands = 0 : i64, tpu.core_type = #tpu.core_type<tc>, window_params = [{transform_indices = @transform_0, window_bounds = array<i64: 256, 128>}, {pipeline_mode = #tpu.pipeline_mode<synchronous>, transform_indices = @transform_1, window_bounds = array<i64: 128, 128>}, {transform_indices = @transform_2, window_bounds = array<i64: 256, 128>}, {transform_indices = @transform_3, window_bounds = array<i64: 1, 2, 128>}]} {
    %c0 = arith.constant 0 : index
    %c0_0 = arith.constant 0 : index
    %0 = vector.load %arg1[%c0, %c0_0] : memref<256x128xbf16, #tpu.memory_space<vmem>>, vector<256x128xbf16>
    %c0_1 = arith.constant 0 : index
    %c0_2 = arith.constant 0 : index
    %1 = vector.load %arg2[%c0_1, %c0_2] : memref<128x128xbf16, #tpu.memory_space<vmem>>, vector<128x128xbf16>
    %cst = arith.constant dense<0.000000e+00> : vector<256x128xf32>
    %2 = tpu.matmul %0, %1, %cst {dimension_numbers = #tpu.dot_dimension_numbers<[1], [0], [0], [1], [0, 0, 1, 1], [], []>} : vector<256x128xbf16>, vector<128x128xbf16>, vector<256x128xf32> -> vector<256x128xf32>
    %3 = arith.truncf %2 : vector<256x128xf32> to vector<256x128xbf16>
    %c0_3 = arith.constant 0 : index
    %c0_4 = arith.constant 0 : index
    %4 = vector.load %arg3[%c0_3, %c0_4] : memref<256x128xbf16, #tpu.memory_space<vmem>>, vector<256x128xbf16>
    tpu.vector_store %arg3[%c0_3, %c0_4], %3 {strides = array<i32>} : memref<256x128xbf16, #tpu.memory_space<vmem>>, vector<256x128xbf16>,
    %cst_5 = arith.constant dense<0.000000e+00> : vector<128xf32>
    %5 = vector.multi_reduction <add>, %2, %cst_5 [0] : vector<256x128xf32> to vector<128xf32>
    %6 = vector.shape_cast %5 : vector<128xf32> to vector<1x128xf32>
    %c0_6 = arith.constant 0 : index
    %c0_7 = arith.constant 0 : index
    %c0_8 = arith.constant 0 : index
    %7 = vector.load %arg4[%c0_6, %c0_7, %c0_8] : memref<1x2x128xf32, #tpu.memory_space<vmem>>, vector<1x1x128xf32>
    %8 = vector.shape_cast %7 : vector<1x1x128xf32> to vector<1x128xf32>
    %9 = vector.shape_cast %6 : vector<1x128xf32> to vector<1x1x128xf32>
    tpu.vector_store %arg4[%c0_6, %c0_7, %c0_8], %9 {strides = array<i32>} : memref<1x2x128xf32, #tpu.memory_space<vmem>>, vector<1x1x128xf32>,
    %10 = arith.mulf %2, %2 : vector<256x128xf32>
    %cst_9 = arith.constant dense<0.000000e+00> : vector<128xf32>
    %11 = vector.multi_reduction <add>, %10, %cst_9 [0] : vector<256x128xf32> to vector<128xf32>
    %12 = vector.shape_cast %11 : vector<128xf32> to vector<1x128xf32>
    %c0_10 = arith.constant 0 : index
    %c1 = arith.constant 1 : index
    %c0_11 = arith.constant 0 : index
    %13 = vector.load %arg4[%c0_10, %c1, %c0_11] : memref<1x2x128xf32, #tpu.memory_space<vmem>>, vector<1x1x128xf32>
    %14 = vector.shape_cast %13 : vector<1x1x128xf32> to vector<1x128xf32>
    %15 = vector.shape_cast %12 : vector<1x128xf32> to vector<1x1x128xf32>
    tpu.vector_store %arg4[%c0_10, %c1, %c0_11], %15 {strides = array<i32>} : memref<1x2x128xf32, #tpu.memory_space<vmem>>, vector<1x1x128xf32>,
    return
  }
  func.func @transform_0(%arg0: i32) -> (i32, i32) {
    %c0_i32 = arith.constant 0 : i32
    %c0_i32_0 = arith.constant 0 : i32
    return %arg0, %c0_i32 : i32, i32
  }
  func.func @transform_1(%arg0: i32) -> (i32, i32) {
    %c0_i32 = arith.constant 0 : i32
    %c0_i32_0 = arith.constant 0 : i32
    %c0_i32_1 = arith.constant 0 : i32
    return %c0_i32, %c0_i32_0 : i32, i32
  }
  func.func @transform_2(%arg0: i32) -> (i32, i32) {
    %c0_i32 = arith.constant 0 : i32
    %c0_i32_0 = arith.constant 0 : i32
    return %arg0, %c0_i32 : i32, i32
  }
  func.func @transform_3(%arg0: i32) -> (i32, i32, i32) {
    %c0_i32 = arith.constant 0 : i32
    %c0_i32_0 = arith.constant 0 : i32
    %c0_i32_1 = arith.constant 0 : i32
    return %arg0, %c0_i32, %c0_i32_0 : i32, i32, i32
  }
}

module attributes {stable_mosaic.version = 11 : i64} {
  func.func @_affine_relu_kernel(%arg0: i32, %arg1: memref<256x128xbf16, #tpu.memory_space<vmem>>, %arg2: memref<1x128xf32, #tpu.memory_space<vmem>>, %arg3: memref<1x128xf32, #tpu.memory_space<vmem>>, %arg4: memref<256x128xbf16, #tpu.memory_space<vmem>>) attributes {dimension_semantics = [#tpu.dimension_semantics<parallel>], iteration_bounds = array<i64: 2>, scalar_prefetch = 0 : i64, scratch_operands = 0 : i64, tpu.core_type = #tpu.core_type<tc>, window_params = [{transform_indices = @transform_0, window_bounds = array<i64: 256, 128>}, {pipeline_mode = #tpu.pipeline_mode<synchronous>, transform_indices = @transform_1, window_bounds = array<i64: 1, 128>}, {pipeline_mode = #tpu.pipeline_mode<synchronous>, transform_indices = @transform_2, window_bounds = array<i64: 1, 128>}, {transform_indices = @transform_3, window_bounds = array<i64: 256, 128>}]} {
    %c0 = arith.constant 0 : index
    %c0_0 = arith.constant 0 : index
    %0 = vector.load %arg1[%c0, %c0_0] : memref<256x128xbf16, #tpu.memory_space<vmem>>, vector<256x128xbf16>
    %1 = arith.extf %0 : vector<256x128xbf16> to vector<256x128xf32>
    %c0_1 = arith.constant 0 : index
    %c0_2 = arith.constant 0 : index
    %2 = vector.load %arg2[%c0_1, %c0_2] : memref<1x128xf32, #tpu.memory_space<vmem>>, vector<1x128xf32>
    %3 = vector.broadcast %2 : vector<1x128xf32> to vector<256x128xf32>
    %4 = arith.mulf %1, %3 : vector<256x128xf32>
    %c0_3 = arith.constant 0 : index
    %c0_4 = arith.constant 0 : index
    %5 = vector.load %arg3[%c0_3, %c0_4] : memref<1x128xf32, #tpu.memory_space<vmem>>, vector<1x128xf32>
    %6 = vector.broadcast %5 : vector<1x128xf32> to vector<256x128xf32>
    %7 = arith.addf %4, %6 : vector<256x128xf32>
    %cst = arith.constant 0.000000e+00 : f32
    %8 = vector.broadcast %cst : f32 to vector<256x128xf32>
    %9 = arith.maximumf %7, %8 : vector<256x128xf32>
    %10 = arith.truncf %9 : vector<256x128xf32> to vector<256x128xbf16>
    %c0_5 = arith.constant 0 : index
    %c0_6 = arith.constant 0 : index
    %11 = vector.load %arg4[%c0_5, %c0_6] : memref<256x128xbf16, #tpu.memory_space<vmem>>, vector<256x128xbf16>
    tpu.vector_store %arg4[%c0_5, %c0_6], %10 {strides = array<i32>} : memref<256x128xbf16, #tpu.memory_space<vmem>>, vector<256x128xbf16>,
    return
  }
  func.func @transform_0(%arg0: i32) -> (i32, i32) {
    %c0_i32 = arith.constant 0 : i32
    %c0_i32_0 = arith.constant 0 : i32
    return %arg0, %c0_i32 : i32, i32
  }
  func.func @transform_1(%arg0: i32) -> (i32, i32) {
    %c0_i32 = arith.constant 0 : i32
    %c0_i32_0 = arith.constant 0 : i32
    %c0_i32_1 = arith.constant 0 : i32
    return %c0_i32, %c0_i32_0 : i32, i32
  }
  func.func @transform_2(%arg0: i32) -> (i32, i32) {
    %c0_i32 = arith.constant 0 : i32
    %c0_i32_0 = arith.constant 0 : i32
    %c0_i32_1 = arith.constant 0 : i32
    return %c0_i32, %c0_i32_0 : i32, i32
  }
  func.func @transform_3(%arg0: i32) -> (i32, i32) {
    %c0_i32 = arith.constant 0 : i32
    %c0_i32_0 = arith.constant 0 : i32
    return %arg0, %c0_i32 : i32, i32
  }
}

module attributes {stable_mosaic.version = 11 : i64} {
  func.func @_conv_stats_kernel(%arg0: i32, %arg1: i32, %arg2: memref<1x18x18x128xbf16, #tpu.memory_space<vmem>>, %arg3: memref<1152x128xbf16, #tpu.memory_space<vmem>>, %arg4: memref<1x256x128xbf16, #tpu.memory_space<vmem>>, %arg5: memref<1x1x2x128xf32, #tpu.memory_space<vmem>>) attributes {dimension_semantics = [#tpu.dimension_semantics<parallel>, #tpu.dimension_semantics<parallel>], iteration_bounds = array<i64: 2, 1>, scalar_prefetch = 0 : i64, scratch_operands = 0 : i64, tpu.core_type = #tpu.core_type<tc>, window_params = [{transform_indices = @transform_0, window_bounds = array<i64: 1, 18, 18, 128>}, {pipeline_mode = #tpu.pipeline_mode<synchronous>, transform_indices = @transform_1, window_bounds = array<i64: 1152, 128>}, {transform_indices = @transform_2, window_bounds = array<i64: 1, 256, 128>}, {transform_indices = @transform_3, window_bounds = array<i64: 1, 1, 2, 128>}]} {
    %c16_i32 = arith.constant 16 : i32
    %0 = arith.muli %arg1, %c16_i32 : i32
    %c0 = arith.constant 0 : index
    %1 = arith.index_cast %0 : i32 to index
    %c0_0 = arith.constant 0 : index
    %c0_1 = arith.constant 0 : index
    %2 = vector.load %arg2[%c0, %1, %c0_0, %c0_1] : memref<1x18x18x128xbf16, #tpu.memory_space<vmem>>, vector<1x18x16x128xbf16>
    %3 = vector.shape_cast %2 : vector<1x18x16x128xbf16> to vector<18x16x128xbf16>
    %c0_2 = arith.constant 0 : index
    %4 = arith.index_cast %0 : i32 to index
    %c1 = arith.constant 1 : index
    %c0_3 = arith.constant 0 : index
    %5 = vector.load %arg2[%c0_2, %4, %c1, %c0_3] : memref<1x18x18x128xbf16, #tpu.memory_space<vmem>>, vector<1x18x16x128xbf16>
    %6 = vector.shape_cast %5 : vector<1x18x16x128xbf16> to vector<18x16x128xbf16>
    %c0_4 = arith.constant 0 : index
    %7 = arith.index_cast %0 : i32 to index
    %c2 = arith.constant 2 : index
    %c0_5 = arith.constant 0 : index
    %8 = vector.load %arg2[%c0_4, %7, %c2, %c0_5] : memref<1x18x18x128xbf16, #tpu.memory_space<vmem>>, vector<1x18x16x128xbf16>
    %9 = vector.shape_cast %8 : vector<1x18x16x128xbf16> to vector<18x16x128xbf16>
    %10 = tpu.concatenate %3, %6, %9 in 2 : vector<18x16x128xbf16>, vector<18x16x128xbf16>, vector<18x16x128xbf16> -> vector<18x16x384xbf16>
    %11 = vector.extract_strided_slice %10 {offsets = [0, 0, 0], sizes = [16, 16, 384], strides = [1, 1, 1]} : vector<18x16x384xbf16> to vector<16x16x384xbf16>
    %12 = vector.extract_strided_slice %10 {offsets = [1, 0, 0], sizes = [16, 16, 384], strides = [1, 1, 1]} : vector<18x16x384xbf16> to vector<16x16x384xbf16>
    %13 = vector.extract_strided_slice %10 {offsets = [2, 0, 0], sizes = [16, 16, 384], strides = [1, 1, 1]} : vector<18x16x384xbf16> to vector<16x16x384xbf16>
    %14 = tpu.concatenate %11, %12, %13 in 2 : vector<16x16x384xbf16>, vector<16x16x384xbf16>, vector<16x16x384xbf16> -> vector<16x16x1152xbf16>
    %15 = vector.shape_cast %14 : vector<16x16x1152xbf16> to vector<256x1152xbf16>
    %c0_6 = arith.constant 0 : index
    %c0_7 = arith.constant 0 : index
    %16 = vector.load %arg3[%c0_6, %c0_7] : memref<1152x128xbf16, #tpu.memory_space<vmem>>, vector<1152x128xbf16>
    %cst = arith.constant dense<0.000000e+00> : vector<256x128xf32>
    %17 = tpu.matmul %15, %16, %cst {dimension_numbers = #tpu.dot_dimension_numbers<[1], [0], [0], [1], [0, 0, 1, 1], [], []>} : vector<256x1152xbf16>, vector<1152x128xbf16>, vector<256x128xf32> -> vector<256x128xf32>
    %18 = arith.truncf %17 : vector<256x128xf32> to vector<256x128xbf16>
    %c0_8 = arith.constant 0 : index
    %c0_9 = arith.constant 0 : index
    %c0_10 = arith.constant 0 : index
    %19 = vector.load %arg4[%c0_8, %c0_9, %c0_10] : memref<1x256x128xbf16, #tpu.memory_space<vmem>>, vector<1x256x128xbf16>
    %20 = vector.shape_cast %19 : vector<1x256x128xbf16> to vector<256x128xbf16>
    %21 = vector.shape_cast %18 : vector<256x128xbf16> to vector<1x256x128xbf16>
    tpu.vector_store %arg4[%c0_8, %c0_9, %c0_10], %21 {strides = array<i32>} : memref<1x256x128xbf16, #tpu.memory_space<vmem>>, vector<1x256x128xbf16>,
    %cst_11 = arith.constant dense<0.000000e+00> : vector<128xf32>
    %22 = vector.multi_reduction <add>, %17, %cst_11 [0] : vector<256x128xf32> to vector<128xf32>
    %23 = vector.shape_cast %22 : vector<128xf32> to vector<1x128xf32>
    %c0_12 = arith.constant 0 : index
    %c0_13 = arith.constant 0 : index
    %c0_14 = arith.constant 0 : index
    %c0_15 = arith.constant 0 : index
    %24 = vector.load %arg5[%c0_12, %c0_13, %c0_14, %c0_15] : memref<1x1x2x128xf32, #tpu.memory_space<vmem>>, vector<1x1x1x128xf32>
    %25 = vector.shape_cast %24 : vector<1x1x1x128xf32> to vector<1x128xf32>
    %26 = vector.shape_cast %23 : vector<1x128xf32> to vector<1x1x1x128xf32>
    tpu.vector_store %arg5[%c0_12, %c0_13, %c0_14, %c0_15], %26 {strides = array<i32>} : memref<1x1x2x128xf32, #tpu.memory_space<vmem>>, vector<1x1x1x128xf32>,
    %27 = arith.mulf %17, %17 : vector<256x128xf32>
    %cst_16 = arith.constant dense<0.000000e+00> : vector<128xf32>
    %28 = vector.multi_reduction <add>, %27, %cst_16 [0] : vector<256x128xf32> to vector<128xf32>
    %29 = vector.shape_cast %28 : vector<128xf32> to vector<1x128xf32>
    %c0_17 = arith.constant 0 : index
    %c0_18 = arith.constant 0 : index
    %c1_19 = arith.constant 1 : index
    %c0_20 = arith.constant 0 : index
    %30 = vector.load %arg5[%c0_17, %c0_18, %c1_19, %c0_20] : memref<1x1x2x128xf32, #tpu.memory_space<vmem>>, vector<1x1x1x128xf32>
    %31 = vector.shape_cast %30 : vector<1x1x1x128xf32> to vector<1x128xf32>
    %32 = vector.shape_cast %29 : vector<1x128xf32> to vector<1x1x1x128xf32>
    tpu.vector_store %arg5[%c0_17, %c0_18, %c1_19, %c0_20], %32 {strides = array<i32>} : memref<1x1x2x128xf32, #tpu.memory_space<vmem>>, vector<1x1x1x128xf32>,
    return
  }
  func.func @transform_0(%arg0: i32, %arg1: i32) -> (i32, i32, i32, i32) {
    %c0_i32 = arith.constant 0 : i32
    %c0_i32_0 = arith.constant 0 : i32
    %c0_i32_1 = arith.constant 0 : i32
    %c0_i32_2 = arith.constant 0 : i32
    return %arg0, %c0_i32, %c0_i32_0, %c0_i32_1 : i32, i32, i32, i32
  }
  func.func @transform_1(%arg0: i32, %arg1: i32) -> (i32, i32) {
    %c0_i32 = arith.constant 0 : i32
    %c0_i32_0 = arith.constant 0 : i32
    %c0_i32_1 = arith.constant 0 : i32
    return %c0_i32, %c0_i32_0 : i32, i32
  }
  func.func @transform_2(%arg0: i32, %arg1: i32) -> (i32, i32, i32) {
    %c0_i32 = arith.constant 0 : i32
    %c0_i32_0 = arith.constant 0 : i32
    return %arg0, %arg1, %c0_i32 : i32, i32, i32
  }
  func.func @transform_3(%arg0: i32, %arg1: i32) -> (i32, i32, i32, i32) {
    %c0_i32 = arith.constant 0 : i32
    %c0_i32_0 = arith.constant 0 : i32
    %c0_i32_1 = arith.constant 0 : i32
    return %arg0, %arg1, %c0_i32, %c0_i32_0 : i32, i32, i32, i32
  }
}

module attributes {stable_mosaic.version = 11 : i64} {
  func.func @_final_fused_kernel(%arg0: i32, %arg1: memref<256x128xbf16, #tpu.memory_space<vmem>>, %arg2: memref<256x128xbf16, #tpu.memory_space<vmem>>, %arg3: memref<128x128xbf16, #tpu.memory_space<vmem>>, %arg4: memref<1x128xf32, #tpu.memory_space<vmem>>, %arg5: memref<1x128xf32, #tpu.memory_space<vmem>>, %arg6: memref<1x128xf32, #tpu.memory_space<vmem>>, %arg7: memref<256x128xbf16, #tpu.memory_space<vmem>>) attributes {dimension_semantics = [#tpu.dimension_semantics<parallel>], iteration_bounds = array<i64: 2>, scalar_prefetch = 0 : i64, scratch_operands = 0 : i64, tpu.core_type = #tpu.core_type<tc>, window_params = [{transform_indices = @transform_0, window_bounds = array<i64: 256, 128>}, {transform_indices = @transform_1, window_bounds = array<i64: 256, 128>}, {pipeline_mode = #tpu.pipeline_mode<synchronous>, transform_indices = @transform_2, window_bounds = array<i64: 128, 128>}, {pipeline_mode = #tpu.pipeline_mode<synchronous>, transform_indices = @transform_3, window_bounds = array<i64: 1, 128>}, {pipeline_mode = #tpu.pipeline_mode<synchronous>, transform_indices = @transform_4, window_bounds = array<i64: 1, 128>}, {pipeline_mode = #tpu.pipeline_mode<synchronous>, transform_indices = @transform_5, window_bounds = array<i64: 1, 128>}, {transform_indices = @transform_6, window_bounds = array<i64: 256, 128>}]} {
    %c0 = arith.constant 0 : index
    %c0_0 = arith.constant 0 : index
    %0 = vector.load %arg1[%c0, %c0_0] : memref<256x128xbf16, #tpu.memory_space<vmem>>, vector<256x128xbf16>
    %1 = arith.extf %0 : vector<256x128xbf16> to vector<256x128xf32>
    %c0_1 = arith.constant 0 : index
    %c0_2 = arith.constant 0 : index
    %2 = vector.load %arg5[%c0_1, %c0_2] : memref<1x128xf32, #tpu.memory_space<vmem>>, vector<1x128xf32>
    %3 = vector.broadcast %2 : vector<1x128xf32> to vector<256x128xf32>
    %4 = arith.mulf %1, %3 : vector<256x128xf32>
    %c0_3 = arith.constant 0 : index
    %c0_4 = arith.constant 0 : index
    %5 = vector.load %arg6[%c0_3, %c0_4] : memref<1x128xf32, #tpu.memory_space<vmem>>, vector<1x128xf32>
    %6 = vector.broadcast %5 : vector<1x128xf32> to vector<256x128xf32>
    %7 = arith.addf %4, %6 : vector<256x128xf32>
    %cst = arith.constant 0.000000e+00 : f32
    %8 = vector.broadcast %cst : f32 to vector<256x128xf32>
    %9 = arith.maximumf %7, %8 : vector<256x128xf32>
    %c0_5 = arith.constant 0 : index
    %c0_6 = arith.constant 0 : index
    %10 = vector.load %arg2[%c0_5, %c0_6] : memref<256x128xbf16, #tpu.memory_space<vmem>>, vector<256x128xbf16>
    %c0_7 = arith.constant 0 : index
    %c0_8 = arith.constant 0 : index
    %11 = vector.load %arg3[%c0_7, %c0_8] : memref<128x128xbf16, #tpu.memory_space<vmem>>, vector<128x128xbf16>
    %cst_9 = arith.constant dense<0.000000e+00> : vector<256x128xf32>
    %12 = tpu.matmul %10, %11, %cst_9 {dimension_numbers = #tpu.dot_dimension_numbers<[1], [0], [0], [1], [0, 0, 1, 1], [], []>} : vector<256x128xbf16>, vector<128x128xbf16>, vector<256x128xf32> -> vector<256x128xf32>
    %c0_10 = arith.constant 0 : index
    %c0_11 = arith.constant 0 : index
    %13 = vector.load %arg4[%c0_10, %c0_11] : memref<1x128xf32, #tpu.memory_space<vmem>>, vector<1x128xf32>
    %14 = vector.broadcast %13 : vector<1x128xf32> to vector<256x128xf32>
    %15 = arith.addf %12, %14 : vector<256x128xf32>
    %16 = arith.addf %9, %15 : vector<256x128xf32>
    %cst_12 = arith.constant 0.000000e+00 : f32
    %17 = vector.broadcast %cst_12 : f32 to vector<256x128xf32>
    %18 = arith.maximumf %16, %17 : vector<256x128xf32>
    %19 = arith.truncf %18 : vector<256x128xf32> to vector<256x128xbf16>
    %c0_13 = arith.constant 0 : index
    %c0_14 = arith.constant 0 : index
    %20 = vector.load %arg7[%c0_13, %c0_14] : memref<256x128xbf16, #tpu.memory_space<vmem>>, vector<256x128xbf16>
    tpu.vector_store %arg7[%c0_13, %c0_14], %19 {strides = array<i32>} : memref<256x128xbf16, #tpu.memory_space<vmem>>, vector<256x128xbf16>,
    return
  }
  func.func @transform_0(%arg0: i32) -> (i32, i32) {
    %c0_i32 = arith.constant 0 : i32
    %c0_i32_0 = arith.constant 0 : i32
    return %arg0, %c0_i32 : i32, i32
  }
  func.func @transform_1(%arg0: i32) -> (i32, i32) {
    %c0_i32 = arith.constant 0 : i32
    %c0_i32_0 = arith.constant 0 : i32
    return %arg0, %c0_i32 : i32, i32
  }
  func.func @transform_2(%arg0: i32) -> (i32, i32) {
    %c0_i32 = arith.constant 0 : i32
    %c0_i32_0 = arith.constant 0 : i32
    %c0_i32_1 = arith.constant 0 : i32
    return %c0_i32, %c0_i32_0 : i32, i32
  }
  func.func @transform_3(%arg0: i32) -> (i32, i32) {
    %c0_i32 = arith.constant 0 : i32
    %c0_i32_0 = arith.constant 0 : i32
    %c0_i32_1 = arith.constant 0 : i32
    return %c0_i32, %c0_i32_0 : i32, i32
  }
  func.func @transform_4(%arg0: i32) -> (i32, i32) {
    %c0_i32 = arith.constant 0 : i32
    %c0_i32_0 = arith.constant 0 : i32
    %c0_i32_1 = arith.constant 0 : i32
    return %c0_i32, %c0_i32_0 : i32, i32
  }
  func.func @transform_5(%arg0: i32) -> (i32, i32) {
    %c0_i32 = arith.constant 0 : i32
    %c0_i32_0 = arith.constant 0 : i32
    %c0_i32_1 = arith.constant 0 : i32
    return %c0_i32, %c0_i32_0 : i32, i32
  }
  func.func @transform_6(%arg0: i32) -> (i32, i32) {
    %c0_i32 = arith.constant 0 : i32
    %c0_i32_0 = arith.constant 0 : i32
    return %arg0, %c0_i32 : i32, i32
  }
}

</mosaic_0001>

<llo_original>
// kernel: residual_block_forward.4
$region0: #{residual_block_forward.4}
  #allocation0 [shape = 'u32[]', space=smem, size = 0x4, offset = 0x4, fixed_abs, tag = 'smem constant byte address 0x4 - core index']
  #allocation1 [shape = 'u32[144,128]{1,0:T(1,128)}', space=vmem, size = 0x12000, scoped, tag = 'internal scratch']
  %s0 = inlined_call_operand.hbm [shape: bf16[512,128], index: 0, kind: input, shape index: {}]
  %s1 = inlined_call_operand.hbm [shape: bf16[128,128], index: 1, kind: input, shape index: {}]
  %s2 = inlined_call_operand.hbm [shape: bf16[512,128], index: 2, kind: output, shape index: {0}]
  %s3 = inlined_call_operand.hbm [shape: f32[2,2,128], index: 3, kind: output, shape index: {1}]
  %4 = xla_tuple %s2, %s3
  %s5 = sld [smem:[#allocation0]]
  $region57: #{residual_block_forward.4} parent=0
    _
  %s7 = ssub.s32 1, %s5
  %s8 = scalar_select 0, %s7, %s5
  $region1: #{residual_block_forward.4} parent=0
    #allocation2 [shape = 'u8[131072]{0}', space=vmem, size = 0x20000, scoped, tag = 'input window, operand 0']
    #allocation3 [shape = 's32[2]{0}', space=sflag, size = 0x8, scoped, tag = 'scoped memory for residual_block_forward.4']
    #allocation4 [shape = 's32[2]{0}', space=sflag, size = 0x8, scoped, tag = 'scoped memory for residual_block_forward.4']
    #allocation5 [shape = 'u8[32768]{0}', space=vmem, size = 0x8000, scoped, tag = 'input window, operand 1, single buffered']
    #allocation6 [shape = 's32[1]{0}', space=sflag, size = 0x4, scoped, tag = 'scoped memory for residual_block_forward.4']
    #allocation7 [shape = 'u8[131072]{0}', space=vmem, size = 0x20000, scoped, tag = 'output window, operand 0']
    #allocation8 [shape = 'u8[2048]{0}', space=vmem, size = 0x800, scoped, tag = 'output window, operand 1']
    #allocation9 [shape = 's32[2]{0}', space=sflag, size = 0x8, scoped, tag = 'scoped memory for residual_block_forward.4']
    %9 = vsyncpa [#allocation3], 0
    %s10 = scalar_lea.sflag [#allocation3], 1
    %11 = vsyncpa %s10, 0
    %12 = vsyncpa [#allocation6], 0
    %13 = vsyncpa [#allocation4], 0
    %s14 = scalar_lea.sflag [#allocation4], 1
    %15 = vsyncpa %s14, 0
    %16 = vsyncpa [#allocation9], 0
    %s17 = scalar_lea.sflag [#allocation9], 1
    %18 = vsyncpa %s17, 0
    loop: start=0, step=1, limit=4
    $region2: #{residual_block_forward.4} parent=1 // loop_pre_header
      _
    $region3: #{residual_block_forward.4} parent=1 // loop_header
      %s20 = sphi 0, %s24
      %p21 = scmp.ge.s32.totalorder %s20, 4
      %s30 = sphi 0, %s32
      %s33 = sphi 0, %s30
      %s34 = sphi 0, %s33
      %s50 = sphi 0, %s34
      %s54 = sphi 0, %s54
      %s56 = sphi 0, %s54
      %s57 = sphi 0, %s56
      %s71 = sphi 0, %s57
      %s77 = sphi 0, %s79
      %s80 = sphi 0, %s77
      %s81 = sphi 0, %s80
      %s97 = sphi 0, %s81
      %s103 = sphi 0, %s105
      %s106 = sphi 0, %s103
      %s107 = sphi 0, %s106
      %s123 = sphi 0, %s107
    $region4: #{residual_block_forward.4} parent=1 // loop_header_branch
      %23 = sbr.rel (%p21) target = $region8
    $region5: #{residual_block_forward.4} parent=1 // loop_body
      %s25 = ssub.s32 %s20, 1
      %s26 = ssub.s32 %s20, 2
      %s27 = sadd.s32 %s20, 1
      %s28 = ssub.s32 %s20, %s27
      %p29 = scmp.eq.s32.totalorder %s28, 0
      %s31 = sadd.s32 %s30, 1
      %s32 = scalar_select %p29, %s30, %s31
      %p35 = pneg %p29
      %p36 = scmp.eq.s32.totalorder %s20, 1
      %p37 = por %p35, %p36
      %p38 = scmp.ne.s32.totalorder %s30, %s33
      %p39 = scmp.eq.s32.totalorder %s20, 0
      %p40 = por %p38, %p39
      %p41 = scmp.ne.s32.totalorder %s30, %s33
      %p42 = scmp.eq.s32.totalorder %s25, 1
      %p43 = por %p41, %p42
      %p44 = scmp.ne.s32.totalorder %s33, %s34
      %p45 = scmp.eq.s32.totalorder %s25, 0
      %p46 = por %p44, %p45
      %p47 = scmp.ne.s32.totalorder %s33, %s34
      %p48 = scmp.eq.s32.totalorder %s26, 1
      %p49 = por %p47, %p48
      %p51 = scmp.ne.s32.totalorder %s34, %s50
      %p52 = scmp.eq.s32.totalorder %s26, 0
      %p53 = por %p51, %p52
      %s55 = sadd.s32 %s54, 1
      %p58 = scmp.eq.s32.totalorder %s20, 1
      %p59 = scmp.ne.s32.totalorder %s54, %s56
      %p60 = scmp.eq.s32.totalorder %s20, 0
      %p61 = por %p59, %p60
      %p62 = scmp.ne.s32.totalorder %s54, %s56
      %p63 = scmp.eq.s32.totalorder %s25, 1
      %p64 = por %p62, %p63
      %p65 = scmp.ne.s32.totalorder %s56, %s57
      %p66 = scmp.eq.s32.totalorder %s25, 0
      %p67 = por %p65, %p66
      %p68 = scmp.ne.s32.totalorder %s56, %s57
      %p69 = scmp.eq.s32.totalorder %s26, 1
      %p70 = por %p68, %p69
      %p72 = scmp.ne.s32.totalorder %s57, %s71
      %p73 = scmp.eq.s32.totalorder %s26, 0
      %p74 = por %p72, %p73
      %s75 = ssub.s32 %s20, %s27
      %p76 = scmp.eq.s32.totalorder %s75, 0
      %s78 = sadd.s32 %s77, 1
      %s79 = scalar_select %p76, %s77, %s78
      %p82 = pneg %p76
      %p83 = scmp.eq.s32.totalorder %s20, 1
      %p84 = por %p82, %p83
      %p85 = scmp.ne.s32.totalorder %s77, %s80
      %p86 = scmp.eq.s32.totalorder %s20, 0
      %p87 = por %p85, %p86
      %p88 = scmp.ne.s32.totalorder %s77, %s80
      %p89 = scmp.eq.s32.totalorder %s25, 1
      %p90 = por %p88, %p89
      %p91 = scmp.ne.s32.totalorder %s80, %s81
      %p92 = scmp.eq.s32.totalorder %s25, 0
      %p93 = por %p91, %p92
      %p94 = scmp.ne.s32.totalorder %s80, %s81
      %p95 = scmp.eq.s32.totalorder %s26, 1
      %p96 = por %p94, %p95
      %p98 = scmp.ne.s32.totalorder %s81, %s97
      %p99 = scmp.eq.s32.totalorder %s26, 0
      %p100 = por %p98, %p99
      %s101 = ssub.s32 %s20, %s27
      %p102 = scmp.eq.s32.totalorder %s101, 0
      %s104 = sadd.s32 %s103, 1
      %s105 = scalar_select %p102, %s103, %s104
      %p108 = pneg %p102
      %p109 = scmp.eq.s32.totalorder %s20, 1
      %p110 = por %p108, %p109
      %p111 = scmp.ne.s32.totalorder %s103, %s106
      %p112 = scmp.eq.s32.totalorder %s20, 0
      %p113 = por %p111, %p112
      %p114 = scmp.ne.s32.totalorder %s103, %s106
      %p115 = scmp.eq.s32.totalorder %s25, 1
      %p116 = por %p114, %p115
      %p117 = scmp.ne.s32.totalorder %s106, %s107
      %p118 = scmp.eq.s32.totalorder %s25, 0
      %p119 = por %p117, %p118
      %p120 = scmp.ne.s32.totalorder %s106, %s107
      %p121 = scmp.eq.s32.totalorder %s26, 1
      %p122 = por %p120, %p121
      %p124 = scmp.ne.s32.totalorder %s107, %s123
      %p125 = scmp.eq.s32.totalorder %s26, 0
      %p126 = por %p124, %p125
      %p127 = scmp.le.s32.totalorder 1, %s20
      %p128 = scmp.lt.s32.totalorder %s20, 3
      %p129 = pnand %p127, %p128
      %p130 = pneg %p129
      // Predicated region
      $region9: #{residual_block_forward.4} parent=5 // pred_check
        _
      $region10: #{residual_block_forward.4} parent=5 // pred_check_branch
        %132 = sbr.rel (%p129) target = $region12
      $region11: #{residual_block_forward.4} parent=5 // pred_region
        %s133 = ssub.s32 %s20, 1
        // Predicated region
        $region13: #{residual_block_forward.4} parent=11 // pred_check
          %p134 = pneg %p67
        $region14: #{residual_block_forward.4} parent=11 // pred_check_branch
          %136 = sbr.rel (%p134) target = $region16
        $region15: #{residual_block_forward.4} parent=11 // pred_region
          %s138 = ssub.s32 1024, 1024
          %139 = vsyncadd [#allocation6], %s138
          %s140 = sshll.u32 [#allocation5], 4
          %s141 = int_to_ptr.vmem [resolvable:$true] %s140
          %146 = dma.hbm_to_vmem [thread:$0]  %s1, 1024, %s141, [#allocation6], 64, 64, 4
        $region16: #{residual_block_forward.4} parent=11 // pred_fallthru
          _
      $region12: #{residual_block_forward.4} parent=5 // pred_fallthru
        _
      %p147 = scmp.lt.s32.totalorder %s20, 2
      // Predicated region
      $region17: #{residual_block_forward.4} parent=5 // pred_check
        %p148 = pneg %p147
      $region18: #{residual_block_forward.4} parent=5 // pred_check_branch
        %150 = sbr.rel (%p148) target = $region20
      $region19: #{residual_block_forward.4} parent=5 // pred_region
        // Predicated region
        $region21: #{residual_block_forward.4} parent=19 // pred_check
          %p151 = pneg %p40
        $region22: #{residual_block_forward.4} parent=19 // pred_check_branch
          %153 = sbr.rel (%p151) target = $region24
        $region23: #{residual_block_forward.4} parent=19 // pred_region
          %s154 = sand.u32 %s30, 1
          %s155 = scalar_lea.sflag [#allocation3], %s154
          %s156 = sand.u32 %s30, 1
          %s157 = smul.addr %s156, 128
          %s158 = scalar_lea.vmem [#allocation2], %s157
          %s159 = smul.u32 32, %s20
          %s161 = ssub.s32 2048, 2048
          %162 = vsyncadd %s155, %s161
          %s163 = smul.addr %s159, 64
          %s164 = scalar_lea.hbm %s0, %s163
          %s165 = sshll.u32 %s158, 4
          %s166 = int_to_ptr.vmem [resolvable:$true] %s165
          %171 = dma.hbm_to_vmem [thread:$0]  %s164, 2048, %s166, %s155, 64, 64, 4
        $region24: #{residual_block_forward.4} parent=19 // pred_fallthru
          _
      $region20: #{residual_block_forward.4} parent=5 // pred_fallthru
        _
      %p172 = scmp.le.s32.totalorder 1, %s20
      %p173 = scmp.lt.s32.totalorder %s20, 3
      %p174 = pnand %p172, %p173
      %p175 = pneg %p174
      // Predicated region
      $region25: #{residual_block_forward.4} parent=5 // pred_check
        _
      $region26: #{residual_block_forward.4} parent=5 // pred_check_branch
        %177 = sbr.rel (%p174) target = $region28
      $region27: #{residual_block_forward.4} parent=5 // pred_region
        %s178 = ssub.s32 %s20, 1
        %s179 = sand.u32 %s33, 1
        %s180 = scalar_lea.sflag [#allocation3], %s179
        %s181 = sand.u32 %s33, 1
        %s182 = smul.addr %s181, 128
        %s183 = scalar_lea.vmem [#allocation2], %s182
        // Predicated region
        $region29: #{residual_block_forward.4} parent=27 // pred_check
          %p184 = pneg %p46
        $region30: #{residual_block_forward.4} parent=27 // pred_check_branch
          %186 = sbr.rel (%p184) target = $region32
        $region31: #{residual_block_forward.4} parent=27 // pred_region
          %187 = dma.done %s180, 2048
        $region32: #{residual_block_forward.4} parent=27 // pred_fallthru
          _
        // Predicated region
        $region33: #{residual_block_forward.4} parent=27 // pred_check
          %p188 = pneg %p67
        $region34: #{residual_block_forward.4} parent=27 // pred_check_branch
          %190 = sbr.rel (%p188) target = $region36
        $region35: #{residual_block_forward.4} parent=27 // pred_region
          %191 = dma.done [#allocation6], 1024
        $region36: #{residual_block_forward.4} parent=27 // pred_fallthru
          _
        %s192 = sand.u32 %s33, 1
        %s193 = scalar_lea.sflag [#allocation3], %s192
        %s194 = sand.u32 %s33, 1
        %s195 = smul.addr %s194, 128
        %s196 = scalar_lea.vmem [#allocation2], %s195
        %p197 = pneg %p46
        %p198 = pneg %p43
        %p199 = pneg %p67
        %p200 = pneg %p64
        %p201 = pneg %p93
        %p202 = pneg %p90
        %s203 = sand.u32 %s80, 1
        %s204 = scalar_lea.sflag [#allocation4], %s203
        %s205 = sand.u32 %s80, 1
        %s206 = smul.addr %s205, 128
        %s207 = scalar_lea.vmem [#allocation7], %s206
        %p208 = pneg %p119
        %p209 = pneg %p116
        %s210 = sand.u32 %s106, 1
        %s211 = scalar_lea.sflag [#allocation9], %s210
        %s212 = sand.u32 %s106, 1
        %s213 = smul.addr %s212, 2
        %s214 = scalar_lea.vmem [#allocation8], %s213
        %s215 = smul.u32 32, %s25
        %s216 = smul.u32 32, %s25
        %v218 = vld [vmem:[%s183] sm:$0xf]
        %v219 = vld [vmem:[%s183 + $0x4] sm:$0xf]
        %v220 = vld [vmem:[%s183 + $0x8] sm:$0xf]
        %v221 = vld [vmem:[%s183 + $0xc] sm:$0xf]
        %v222 = vld [vmem:[%s183 + $0x10] sm:$0xf]
        %v223 = vld [vmem:[%s183 + $0x14] sm:$0xf]
        %v224 = vld [vmem:[%s183 + $0x18] sm:$0xf]
        %v225 = vld [vmem:[%s183 + $0x1c] sm:$0xf]
        %v226 = vld [vmem:[%s183 + $0x20] sm:$0xf]
        %v227 = vld [vmem:[%s183 + $0x24] sm:$0xf]
        %v228 = vld [vmem:[%s183 + $0x28] sm:$0xf]
        %v229 = vld [vmem:[%s183 + $0x2c] sm:$0xf]
        %v230 = vld [vmem:[%s183 + $0x30] sm:$0xf]
        %v231 = vld [vmem:[%s183 + $0x34] sm:$0xf]
        %v232 = vld [vmem:[%s183 + $0x38] sm:$0xf]
        %v233 = vld [vmem:[%s183 + $0x3c] sm:$0xf]
        %v234 = vld [vmem:[%s183 + $0x40] sm:$0xf]
        %v235 = vld [vmem:[%s183 + $0x44] sm:$0xf]
        %v236 = vld [vmem:[%s183 + $0x48] sm:$0xf]
        %v237 = vld [vmem:[%s183 + $0x4c] sm:$0xf]
        %v238 = vld [vmem:[%s183 + $0x50] sm:$0xf]
        %v239 = vld [vmem:[%s183 + $0x54] sm:$0xf]
        %v240 = vld [vmem:[%s183 + $0x58] sm:$0xf]
        %v241 = vld [vmem:[%s183 + $0x5c] sm:$0xf]
        %v242 = vld [vmem:[%s183 + $0x60] sm:$0xf]
        %v243 = vld [vmem:[%s183 + $0x64] sm:$0xf]
        %v244 = vld [vmem:[%s183 + $0x68] sm:$0xf]
        %v245 = vld [vmem:[%s183 + $0x6c] sm:$0xf]
        %v246 = vld [vmem:[%s183 + $0x70] sm:$0xf]
        %v247 = vld [vmem:[%s183 + $0x74] sm:$0xf]
        %v248 = vld [vmem:[%s183 + $0x78] sm:$0xf]
        %v249 = vld [vmem:[%s183 + $0x7c] sm:$0xf]
        %v250 = vld [vmem:[#allocation5] sm:$0xf]
        %v251 = vld [vmem:[#allocation5 + $0x4] sm:$0xf]
        %v252 = vld [vmem:[#allocation5 + $0x8] sm:$0xf]
        %v253 = vld [vmem:[#allocation5 + $0xc] sm:$0xf]
        %v254 = vld [vmem:[#allocation5 + $0x10] sm:$0xf]
        %v255 = vld [vmem:[#allocation5 + $0x14] sm:$0xf]
        %v256 = vld [vmem:[#allocation5 + $0x18] sm:$0xf]
        %v257 = vld [vmem:[#allocation5 + $0x1c] sm:$0xf]
        %v258 = vld [vmem:[#allocation5 + $0x20] sm:$0xf]
        %v259 = vld [vmem:[#allocation5 + $0x24] sm:$0xf]
        %v260 = vld [vmem:[#allocation5 + $0x28] sm:$0xf]
        %v261 = vld [vmem:[#allocation5 + $0x2c] sm:$0xf]
        %v262 = vld [vmem:[#allocation5 + $0x30] sm:$0xf]
        %v263 = vld [vmem:[#allocation5 + $0x34] sm:$0xf]
        %v264 = vld [vmem:[#allocation5 + $0x38] sm:$0xf]
        %v265 = vld [vmem:[#allocation5 + $0x3c] sm:$0xf]
        %v298 = vunpack.c.l.b16 %v218
        %v299 = vunpack.c.l.b16 %v219
        %v300 = vunpack.c.l.b16 %v220
        %v301 = vunpack.c.l.b16 %v221
        %v302 = vunpack.c.l.b16 %v222
        %v303 = vunpack.c.l.b16 %v223
        %v304 = vunpack.c.l.b16 %v224
        %v305 = vunpack.c.l.b16 %v225
        %v306 = vunpack.c.l.b16 %v226
        %v307 = vunpack.c.l.b16 %v227
        %v308 = vunpack.c.l.b16 %v228
        %v309 = vunpack.c.l.b16 %v229
        %v310 = vunpack.c.l.b16 %v230
        %v311 = vunpack.c.l.b16 %v231
        %v312 = vunpack.c.l.b16 %v232
        %v313 = vunpack.c.l.b16 %v233
        %v314 = vunpack.c.l.b16 %v234
        %v315 = vunpack.c.l.b16 %v235
        %v316 = vunpack.c.l.b16 %v236
        %v317 = vunpack.c.l.b16 %v237
        %v318 = vunpack.c.l.b16 %v238
        %v319 = vunpack.c.l.b16 %v239
        %v320 = vunpack.c.l.b16 %v240
        %v321 = vunpack.c.l.b16 %v241
        %v322 = vunpack.c.l.b16 %v242
        %v323 = vunpack.c.l.b16 %v243
        %v324 = vunpack.c.l.b16 %v244
        %v325 = vunpack.c.l.b16 %v245
        %v326 = vunpack.c.l.b16 %v246
        %v327 = vunpack.c.l.b16 %v247
        %v328 = vunpack.c.l.b16 %v248
        %v329 = vunpack.c.l.b16 %v249
        %v330 = vpack.c.b16 %v299, %v298
        %v331 = vpack.c.b16 %v301, %v300
        %v332 = vpack.c.b16 %v303, %v302
        %v333 = vpack.c.b16 %v305, %v304
        %v334 = vpack.c.b16 %v307, %v306
        %v335 = vpack.c.b16 %v309, %v308
        %v336 = vpack.c.b16 %v311, %v310
        %v337 = vpack.c.b16 %v313, %v312
        %v338 = vpack.c.b16 %v315, %v314
        %v339 = vpack.c.b16 %v317, %v316
        %v340 = vpack.c.b16 %v319, %v318
        %v341 = vpack.c.b16 %v321, %v320
        %v342 = vpack.c.b16 %v323, %v322
        %v343 = vpack.c.b16 %v325, %v324
        %v344 = vpack.c.b16 %v327, %v326
        %v345 = vpack.c.b16 %v329, %v328
        %v378 = vunpack.c.l.b16 %v250
        %v379 = vunpack.c.l.b16 %v251
        %v380 = vunpack.c.l.b16 %v252
        %v381 = vunpack.c.l.b16 %v253
        %v382 = vunpack.c.l.b16 %v254
        %v383 = vunpack.c.l.b16 %v255
        %v384 = vunpack.c.l.b16 %v256
        %v385 = vunpack.c.l.b16 %v257
        %v386 = vunpack.c.l.b16 %v258
        %v387 = vunpack.c.l.b16 %v259
        %v388 = vunpack.c.l.b16 %v260
        %v389 = vunpack.c.l.b16 %v261
        %v390 = vunpack.c.l.b16 %v262
        %v391 = vunpack.c.l.b16 %v263
        %v392 = vunpack.c.l.b16 %v264
        %v393 = vunpack.c.l.b16 %v265
        %v394 = vpack.c.b16 %v379, %v378
        %v395 = vpack.c.b16 %v381, %v380
        %v396 = vpack.c.b16 %v383, %v382
        %v397 = vpack.c.b16 %v385, %v384
        %v398 = vpack.c.b16 %v387, %v386
        %v399 = vpack.c.b16 %v389, %v388
        %v400 = vpack.c.b16 %v391, %v390
        %v401 = vpack.c.b16 %v393, %v392
        %410 = vmatprep.subr.bf16.mxu0 0
        %411 = vmatpush1.bf16.msra.mxu0 %v394
        %412 = vmatprep.subr.bf16.mxu0 0
        %413 = vmatpush1.bf16.msra.mxu0 %v395
        %414 = vmatprep.subr.bf16.mxu0 0
        %415 = vmatpush1.bf16.msra.mxu0 %v396
        %416 = vmatprep.subr.bf16.mxu0 0
        %417 = vmatpush1.bf16.msra.mxu0 %v397
        %418 = vmatprep.subr.bf16.mxu0 0
        %419 = vmatpush1.bf16.msra.mxu0 %v398
        %420 = vmatprep.subr.bf16.mxu0 0
        %421 = vmatpush1.bf16.msra.mxu0 %v399
        %422 = vmatprep.subr.bf16.mxu0 0
        %423 = vmatpush1.bf16.msra.mxu0 %v400
        %424 = vmatprep.subr.bf16.mxu0 0
        %425 = vmatpush1.bf16.msra.mxu0 %v401
        %426 = vmatprep.subr.bf16.mxu0 0
        %427 = vmatpush1.bf16.msra.mxu0 0
        %428 = vmatprep.subr.bf16.mxu0 0
        %429 = vmatpush1.bf16.msra.mxu0 0
        %430 = vmatprep.subr.bf16.mxu0 0
        %431 = vmatpush1.bf16.msra.mxu0 0
        %432 = vmatprep.subr.bf16.mxu0 0
        %433 = vmatpush1.bf16.msra.mxu0 0
        %434 = vmatprep.subr.bf16.mxu0 0
        %435 = vmatpush1.bf16.msra.mxu0 0
        %436 = vmatprep.subr.bf16.mxu0 0
        %437 = vmatpush1.bf16.msra.mxu0 0
        %438 = vmatprep.subr.bf16.mxu0 0
        %439 = vmatpush1.bf16.msra.mxu0 0
        %440 = vmatprep.subr.bf16.mxu0 0
        %441 = vmatpush1.bf16.msra.mxu0 0
        %442 = vmatprep.mubr.bf16.mxu0 0
        %443 = vmatmul.mubr.bf16.gmra.mrb[0].mxu0 %v330
        %v444 = vpop.f32.mrb[0].mxu0
        %v445 = vadd.f32 0.0, %v444
        %v446 = vpop.f32.mrb[0].mxu0
        %v447 = vpop.f32.mrb[0].mxu0
        %v448 = vadd.f32 0.0, %v447
        %v449 = vpop.f32.mrb[0].mxu0
        %450 = vmatprep.mubr.bf16.mxu0 0
        %451 = vmatmul.mubr.bf16.gmra.mrb[0].mxu0 %v331
        %v452 = vpop.f32.mrb[0].mxu0
        %v453 = vadd.f32 0.0, %v452
        %v454 = vpop.f32.mrb[0].mxu0
        %v455 = vpop.f32.mrb[0].mxu0
        %v456 = vadd.f32 0.0, %v455
        %v457 = vpop.f32.mrb[0].mxu0
        %458 = vmatprep.mubr.bf16.mxu0 0
        %459 = vmatmul.mubr.bf16.gmra.mrb[0].mxu0 %v332
        %v460 = vpop.f32.mrb[0].mxu0
        %v461 = vadd.f32 0.0, %v460
        %v462 = vpop.f32.mrb[0].mxu0
        %v463 = vpop.f32.mrb[0].mxu0
        %v464 = vadd.f32 0.0, %v463
        %v465 = vpop.f32.mrb[0].mxu0
        %466 = vmatprep.mubr.bf16.mxu0 0
        %467 = vmatmul.mubr.bf16.gmra.mrb[0].mxu0 %v333
        %v468 = vpop.f32.mrb[0].mxu0
        %v469 = vadd.f32 0.0, %v468
        %v470 = vpop.f32.mrb[0].mxu0
        %v471 = vpop.f32.mrb[0].mxu0
        %v472 = vadd.f32 0.0, %v471
        %v473 = vpop.f32.mrb[0].mxu0
        %474 = vmatprep.mubr.bf16.mxu0 0
        %475 = vmatmul.mubr.bf16.gmra.mrb[0].mxu0 %v334
        %v476 = vpop.f32.mrb[0].mxu0
        %v477 = vadd.f32 0.0, %v476
        %v478 = vpop.f32.mrb[0].mxu0
        %v479 = vpop.f32.mrb[0].mxu0
        %v480 = vadd.f32 0.0, %v479
        %v481 = vpop.f32.mrb[0].mxu0
        %482 = vmatprep.mubr.bf16.mxu0 0
        %483 = vmatmul.mubr.bf16.gmra.mrb[0].mxu0 %v335
        %v484 = vpop.f32.mrb[0].mxu0
        %v485 = vadd.f32 0.0, %v484
        %v486 = vpop.f32.mrb[0].mxu0
        %v487 = vpop.f32.mrb[0].mxu0
        %v488 = vadd.f32 0.0, %v487
        %v489 = vpop.f32.mrb[0].mxu0
        %490 = vmatprep.mubr.bf16.mxu0 0
        %491 = vmatmul.mubr.bf16.gmra.mrb[0].mxu0 %v336
        %v492 = vpop.f32.mrb[0].mxu0
        %v493 = vadd.f32 0.0, %v492
        %v494 = vpop.f32.mrb[0].mxu0
        %v495 = vpop.f32.mrb[0].mxu0
        %v496 = vadd.f32 0.0, %v495
        %v497 = vpop.f32.mrb[0].mxu0
        %498 = vmatprep.mubr.bf16.mxu0 0
        %499 = vmatmul.mubr.bf16.gmra.mrb[0].mxu0 %v337
        %v500 = vpop.f32.mrb[0].mxu0
        %v501 = vadd.f32 0.0, %v500
        %v502 = vpop.f32.mrb[0].mxu0
        %v503 = vpop.f32.mrb[0].mxu0
        %v504 = vadd.f32 0.0, %v503
        %v505 = vpop.f32.mrb[0].mxu0
        %506 = vmatprep.mubr.bf16.mxu0 0
        %507 = vmatmul.mubr.bf16.gmra.mrb[0].mxu0 %v338
        %v508 = vpop.f32.mrb[0].mxu0
        %v509 = vadd.f32 0.0, %v508
        %v510 = vpop.f32.mrb[0].mxu0
        %v511 = vpop.f32.mrb[0].mxu0
        %v512 = vadd.f32 0.0, %v511
        %v513 = vpop.f32.mrb[0].mxu0
        %514 = vmatprep.mubr.bf16.mxu0 0
        %515 = vmatmul.mubr.bf16.gmra.mrb[0].mxu0 %v339
        %v516 = vpop.f32.mrb[0].mxu0
        %v517 = vadd.f32 0.0, %v516
        %v518 = vpop.f32.mrb[0].mxu0
        %v519 = vpop.f32.mrb[0].mxu0
        %v520 = vadd.f32 0.0, %v519
        %v521 = vpop.f32.mrb[0].mxu0
        %522 = vmatprep.mubr.bf16.mxu0 0
        %523 = vmatmul.mubr.bf16.gmra.mrb[0].mxu0 %v340
        %v524 = vpop.f32.mrb[0].mxu0
        %v525 = vadd.f32 0.0, %v524
        %v526 = vpop.f32.mrb[0].mxu0
        %v527 = vpop.f32.mrb[0].mxu0
        %v528 = vadd.f32 0.0, %v527
        %v529 = vpop.f32.mrb[0].mxu0
        %530 = vmatprep.mubr.bf16.mxu0 0
        %531 = vmatmul.mubr.bf16.gmra.mrb[0].mxu0 %v341
        %v532 = vpop.f32.mrb[0].mxu0
        %v533 = vadd.f32 0.0, %v532
        %v534 = vpop.f32.mrb[0].mxu0
        %v535 = vpop.f32.mrb[0].mxu0
        %v536 = vadd.f32 0.0, %v535
        %v537 = vpop.f32.mrb[0].mxu0
        %538 = vmatprep.mubr.bf16.mxu0 0
        %539 = vmatmul.mubr.bf16.gmra.mrb[0].mxu0 %v342
        %v540 = vpop.f32.mrb[0].mxu0
        %v541 = vadd.f32 0.0, %v540
        %v542 = vpop.f32.mrb[0].mxu0
        %v543 = vpop.f32.mrb[0].mxu0
        %v544 = vadd.f32 0.0, %v543
        %v545 = vpop.f32.mrb[0].mxu0
        %546 = vmatprep.mubr.bf16.mxu0 0
        %547 = vmatmul.mubr.bf16.gmra.mrb[0].mxu0 %v343
        %v548 = vpop.f32.mrb[0].mxu0
        %v549 = vadd.f32 0.0, %v548
        %v550 = vpop.f32.mrb[0].mxu0
        %v551 = vpop.f32.mrb[0].mxu0
        %v552 = vadd.f32 0.0, %v551
        %v553 = vpop.f32.mrb[0].mxu0
        %554 = vmatprep.mubr.bf16.mxu0 0
        %555 = vmatmul.mubr.bf16.gmra.mrb[0].mxu0 %v344
        %v556 = vpop.f32.mrb[0].mxu0
        %v557 = vadd.f32 0.0, %v556
        %v558 = vpop.f32.mrb[0].mxu0
        %v559 = vpop.f32.mrb[0].mxu0
        %v560 = vadd.f32 0.0, %v559
        %v561 = vpop.f32.mrb[0].mxu0
        %562 = vmatprep.mubr.bf16.mxu0 0
        %563 = vmatmul.mubr.bf16.gmra.mrb[0].mxu0 %v345
        %v564 = vpop.f32.mrb[0].mxu0
        %v565 = vadd.f32 0.0, %v564
        %v566 = vpop.f32.mrb[0].mxu0
        %v567 = vpop.f32.mrb[0].mxu0
        %v568 = vadd.f32 0.0, %v567
        %v569 = vpop.f32.mrb[0].mxu0
        %570 = vdwg.mxu0
        %v571 = vpack.c.bf16 %v448, %v445
        %v572 = vpack.c.bf16 %v456, %v453
        %v573 = vpack.c.bf16 %v464, %v461
        %v574 = vpack.c.bf16 %v472, %v469
        %v575 = vpack.c.bf16 %v480, %v477
        %v576 = vpack.c.bf16 %v488, %v485
        %v577 = vpack.c.bf16 %v496, %v493
        %v578 = vpack.c.bf16 %v504, %v501
        %v579 = vpack.c.bf16 %v512, %v509
        %v580 = vpack.c.bf16 %v520, %v517
        %v581 = vpack.c.bf16 %v528, %v525
        %v582 = vpack.c.bf16 %v536, %v533
        %v583 = vpack.c.bf16 %v544, %v541
        %v584 = vpack.c.bf16 %v552, %v549
        %v585 = vpack.c.bf16 %v560, %v557
        %v586 = vpack.c.bf16 %v568, %v565
        %v603 = vunpack.c.l.b16 %v571
        %v604 = vunpack.c.h.b16 %v571
        %v605 = vunpack.c.l.b16 %v572
        %v606 = vunpack.c.h.b16 %v572
        %v607 = vunpack.c.l.b16 %v573
        %v608 = vunpack.c.h.b16 %v573
        %v609 = vunpack.c.l.b16 %v574
        %v610 = vunpack.c.h.b16 %v574
        %v611 = vunpack.c.l.b16 %v575
        %v612 = vunpack.c.h.b16 %v575
        %v613 = vunpack.c.l.b16 %v576
        %v614 = vunpack.c.h.b16 %v576
        %v615 = vunpack.c.l.b16 %v577
        %v616 = vunpack.c.h.b16 %v577
        %v617 = vunpack.c.l.b16 %v578
        %v618 = vunpack.c.h.b16 %v578
        %v619 = vunpack.c.l.b16 %v579
        %v620 = vunpack.c.h.b16 %v579
        %v621 = vunpack.c.l.b16 %v580
        %v622 = vunpack.c.h.b16 %v580
        %v623 = vunpack.c.l.b16 %v581
        %v624 = vunpack.c.h.b16 %v581
        %v625 = vunpack.c.l.b16 %v582
        %v626 = vunpack.c.h.b16 %v582
        %v627 = vunpack.c.l.b16 %v583
        %v628 = vunpack.c.h.b16 %v583
        %v629 = vunpack.c.l.b16 %v584
        %v630 = vunpack.c.h.b16 %v584
        %v631 = vunpack.c.l.b16 %v585
        %v632 = vunpack.c.h.b16 %v585
        %v633 = vunpack.c.l.b16 %v586
        %v634 = vunpack.c.h.b16 %v586
        %v635 = vpack.c.b16 %v603, %v603
        %v636 = vpack.c.b16 %v604, %v604
        %v637 = vpack.c.b16 %v605, %v605
        %v638 = vpack.c.b16 %v606, %v606
        %v639 = vpack.c.b16 %v607, %v607
        %v640 = vpack.c.b16 %v608, %v608
        %v641 = vpack.c.b16 %v609, %v609
        %v642 = vpack.c.b16 %v610, %v610
        %v643 = vpack.c.b16 %v611, %v611
        %v644 = vpack.c.b16 %v612, %v612
        %v645 = vpack.c.b16 %v613, %v613
        %v646 = vpack.c.b16 %v614, %v614
        %v647 = vpack.c.b16 %v615, %v615
        %v648 = vpack.c.b16 %v616, %v616
        %v649 = vpack.c.b16 %v617, %v617
        %v650 = vpack.c.b16 %v618, %v618
        %v651 = vpack.c.b16 %v619, %v619
        %v652 = vpack.c.b16 %v620, %v620
        %v653 = vpack.c.b16 %v621, %v621
        %v654 = vpack.c.b16 %v622, %v622
        %v655 = vpack.c.b16 %v623, %v623
        %v656 = vpack.c.b16 %v624, %v624
        %v657 = vpack.c.b16 %v625, %v625
        %v658 = vpack.c.b16 %v626, %v626
        %v659 = vpack.c.b16 %v627, %v627
        %v660 = vpack.c.b16 %v628, %v628
        %v661 = vpack.c.b16 %v629, %v629
        %v662 = vpack.c.b16 %v630, %v630
        %v663 = vpack.c.b16 %v631, %v631
        %v664 = vpack.c.b16 %v632, %v632
        %v665 = vpack.c.b16 %v633, %v633
        %v666 = vpack.c.b16 %v634, %v634
        %699 = vst [vmem:[%s207] sm:$0xf] %v635
        %700 = vst [vmem:[%s207 + $0x4] sm:$0xf] %v636
        %701 = vst [vmem:[%s207 + $0x8] sm:$0xf] %v637
        %702 = vst [vmem:[%s207 + $0xc] sm:$0xf] %v638
        %703 = vst [vmem:[%s207 + $0x10] sm:$0xf] %v639
        %704 = vst [vmem:[%s207 + $0x14] sm:$0xf] %v640
        %705 = vst [vmem:[%s207 + $0x18] sm:$0xf] %v641
        %706 = vst [vmem:[%s207 + $0x1c] sm:$0xf] %v642
        %707 = vst [vmem:[%s207 + $0x20] sm:$0xf] %v643
        %708 = vst [vmem:[%s207 + $0x24] sm:$0xf] %v644
        %709 = vst [vmem:[%s207 + $0x28] sm:$0xf] %v645
        %710 = vst [vmem:[%s207 + $0x2c] sm:$0xf] %v646
        %711 = vst [vmem:[%s207 + $0x30] sm:$0xf] %v647
        %712 = vst [vmem:[%s207 + $0x34] sm:$0xf] %v648
        %713 = vst [vmem:[%s207 + $0x38] sm:$0xf] %v649
        %714 = vst [vmem:[%s207 + $0x3c] sm:$0xf] %v650
        %715 = vst [vmem:[%s207 + $0x40] sm:$0xf] %v651
        %716 = vst [vmem:[%s207 + $0x44] sm:$0xf] %v652
        %717 = vst [vmem:[%s207 + $0x48] sm:$0xf] %v653
        %718 = vst [vmem:[%s207 + $0x4c] sm:$0xf] %v654
        %719 = vst [vmem:[%s207 + $0x50] sm:$0xf] %v655
        %720 = vst [vmem:[%s207 + $0x54] sm:$0xf] %v656
        %721 = vst [vmem:[%s207 + $0x58] sm:$0xf] %v657
        %722 = vst [vmem:[%s207 + $0x5c] sm:$0xf] %v658
        %723 = vst [vmem:[%s207 + $0x60] sm:$0xf] %v659
        %724 = vst [vmem:[%s207 + $0x64] sm:$0xf] %v660
        %725 = vst [vmem:[%s207 + $0x68] sm:$0xf] %v661
        %726 = vst [vmem:[%s207 + $0x6c] sm:$0xf] %v662
        %727 = vst [vmem:[%s207 + $0x70] sm:$0xf] %v663
        %728 = vst [vmem:[%s207 + $0x74] sm:$0xf] %v664
        %729 = vst [vmem:[%s207 + $0x78] sm:$0xf] %v665
        %730 = vst [vmem:[%s207 + $0x7c] sm:$0xf] %v666
        %v731 = vadd.f32 %v445, %v448
        %v732 = vadd.f32 %v731, %v453
        %v733 = vadd.f32 %v732, %v456
        %v734 = vadd.f32 %v733, %v461
        %v735 = vadd.f32 %v734, %v464
        %v736 = vadd.f32 %v735, %v469
        %v737 = vadd.f32 %v736, %v472
        %v738 = vadd.f32 %v737, %v477
        %v739 = vadd.f32 %v738, %v480
        %v740 = vadd.f32 %v739, %v485
        %v741 = vadd.f32 %v740, %v488
        %v742 = vadd.f32 %v741, %v493
        %v743 = vadd.f32 %v742, %v496
        %v744 = vadd.f32 %v743, %v501
        %v745 = vadd.f32 %v744, %v504
        %v746 = vadd.f32 %v745, %v509
        %v747 = vadd.f32 %v746, %v512
        %v748 = vadd.f32 %v747, %v517
        %v749 = vadd.f32 %v748, %v520
        %v750 = vadd.f32 %v749, %v525
        %v751 = vadd.f32 %v750, %v528
        %v752 = vadd.f32 %v751, %v533
        %v753 = vadd.f32 %v752, %v536
        %v754 = vadd.f32 %v753, %v541
        %v755 = vadd.f32 %v754, %v544
        %v756 = vadd.f32 %v755, %v549
        %v757 = vadd.f32 %v756, %v552
        %v758 = vadd.f32 %v757, %v557
        %v759 = vadd.f32 %v758, %v560
        %v760 = vadd.f32 %v759, %v565
        %v761 = vadd.f32 %v760, %v568
        %v762 = vrot.slane %v761, 4
        %v763 = vadd.f32 %v761, %v762
        %v764 = vrot.slane %v763, 2
        %v765 = vadd.f32 %v763, %v764
        %v766 = vrot.slane %v765, 1
        %v767 = vadd.f32 %v765, %v766
        %768 = vst [vmem:[%s214] sm:$0x1] %v767
        %v769 = vmul.f32 %v445, %v445
        %v770 = vmul.f32 %v448, %v448
        %v771 = vmul.f32 %v453, %v453
        %v772 = vmul.f32 %v456, %v456
        %v773 = vmul.f32 %v461, %v461
        %v774 = vmul.f32 %v464, %v464
        %v775 = vmul.f32 %v469, %v469
        %v776 = vmul.f32 %v472, %v472
        %v777 = vmul.f32 %v477, %v477
        %v778 = vmul.f32 %v480, %v480
        %v779 = vmul.f32 %v485, %v485
        %v780 = vmul.f32 %v488, %v488
        %v781 = vmul.f32 %v493, %v493
        %v782 = vmul.f32 %v496, %v496
        %v783 = vmul.f32 %v501, %v501
        %v784 = vmul.f32 %v504, %v504
        %v785 = vmul.f32 %v509, %v509
        %v786 = vmul.f32 %v512, %v512
        %v787 = vmul.f32 %v517, %v517
        %v788 = vmul.f32 %v520, %v520
        %v789 = vmul.f32 %v525, %v525
        %v790 = vmul.f32 %v528, %v528
        %v791 = vmul.f32 %v533, %v533
        %v792 = vmul.f32 %v536, %v536
        %v793 = vmul.f32 %v541, %v541
        %v794 = vmul.f32 %v544, %v544
        %v795 = vmul.f32 %v549, %v549
        %v796 = vmul.f32 %v552, %v552
        %v797 = vmul.f32 %v557, %v557
        %v798 = vmul.f32 %v560, %v560
        %v799 = vmul.f32 %v565, %v565
        %v800 = vmul.f32 %v568, %v568
        %v801 = vadd.f32 %v769, %v770
        %v802 = vadd.f32 %v801, %v771
        %v803 = vadd.f32 %v802, %v772
        %v804 = vadd.f32 %v803, %v773
        %v805 = vadd.f32 %v804, %v774
        %v806 = vadd.f32 %v805, %v775
        %v807 = vadd.f32 %v806, %v776
        %v808 = vadd.f32 %v807, %v777
        %v809 = vadd.f32 %v808, %v778
        %v810 = vadd.f32 %v809, %v779
        %v811 = vadd.f32 %v810, %v780
        %v812 = vadd.f32 %v811, %v781
        %v813 = vadd.f32 %v812, %v782
        %v814 = vadd.f32 %v813, %v783
        %v815 = vadd.f32 %v814, %v784
        %v816 = vadd.f32 %v815, %v785
        %v817 = vadd.f32 %v816, %v786
        %v818 = vadd.f32 %v817, %v787
        %v819 = vadd.f32 %v818, %v788
        %v820 = vadd.f32 %v819, %v789
        %v821 = vadd.f32 %v820, %v790
        %v822 = vadd.f32 %v821, %v791
        %v823 = vadd.f32 %v822, %v792
        %v824 = vadd.f32 %v823, %v793
        %v825 = vadd.f32 %v824, %v794
        %v826 = vadd.f32 %v825, %v795
        %v827 = vadd.f32 %v826, %v796
        %v828 = vadd.f32 %v827, %v797
        %v829 = vadd.f32 %v828, %v798
        %v830 = vadd.f32 %v829, %v799
        %v831 = vadd.f32 %v830, %v800
        %v832 = vrot.slane %v831, 4
        %v833 = vadd.f32 %v831, %v832
        %v834 = vrot.slane %v833, 2
        %v835 = vadd.f32 %v833, %v834
        %v836 = vrot.slane %v835, 1
        %v837 = vadd.f32 %v835, %v836
        %838 = vst [vmem:[%s214 + $0x1] sm:$0x1] %v837
        %s839 = sand.u32 %s80, 1
        %s840 = scalar_lea.sflag [#allocation4], %s839
        %s841 = sand.u32 %s80, 1
        %s842 = smul.addr %s841, 128
        %s843 = scalar_lea.vmem [#allocation7], %s842
        %s844 = sand.u32 %s106, 1
        %s845 = scalar_lea.sflag [#allocation9], %s844
        %s846 = sand.u32 %s106, 1
        %s847 = smul.addr %s846, 2
        %s848 = scalar_lea.vmem [#allocation8], %s847
        // Predicated region
        $region37: #{residual_block_forward.4} parent=27 // pred_check
          %p849 = pneg %p90
        $region38: #{residual_block_forward.4} parent=27 // pred_check_branch
          %851 = sbr.rel (%p849) target = $region40
        $region39: #{residual_block_forward.4} parent=27 // pred_region
          %s852 = smul.u32 32, %s25
          %s854 = ssub.s32 2048, 2048
          %855 = vsyncadd %s840, %s854
          %s856 = smul.addr %s852, 64
          %s857 = scalar_lea.hbm %s2, %s856
          %s858 = sshll.u32 %s843, 4
          %s859 = int_to_ptr.vmem [resolvable:$true] %s858
          %864 = dma.vmem_to_hbm [thread:$0]  %s859, 2048, %s857, %s840, 64, 64, 4
        $region40: #{residual_block_forward.4} parent=27 // pred_fallthru
          _
        // Predicated region
        $region41: #{residual_block_forward.4} parent=27 // pred_check
          %p865 = pneg %p116
        $region42: #{residual_block_forward.4} parent=27 // pred_check_branch
          %867 = sbr.rel (%p865) target = $region44
        $region43: #{residual_block_forward.4} parent=27 // pred_region
          %s869 = ssub.s32 32, 32
          %870 = vsyncadd %s845, %s869
          %s871 = smul.addr %s25, 32
          %s872 = scalar_lea.hbm %s3, %s871
          %s874 = sshll.u32 %s848, 4
          %s875 = int_to_ptr.vmem [resolvable:$true] %s874
          %877 = dma.vmem_to_hbm [thread:$0]  %s875, 32, %s872, %s845
        $region44: #{residual_block_forward.4} parent=27 // pred_fallthru
          _
      $region28: #{residual_block_forward.4} parent=5 // pred_fallthru
        _
      %p878 = scmp.le.s32.totalorder 2, %s20
      // Predicated region
      $region45: #{residual_block_forward.4} parent=5 // pred_check
        %p879 = pneg %p878
      $region46: #{residual_block_forward.4} parent=5 // pred_check_branch
        %881 = sbr.rel (%p879) target = $region48
      $region47: #{residual_block_forward.4} parent=5 // pred_region
        %s882 = ssub.s32 %s20, 2
        // Predicated region
        $region49: #{residual_block_forward.4} parent=47 // pred_check
          %p883 = pneg %p96
        $region50: #{residual_block_forward.4} parent=47 // pred_check_branch
          %885 = sbr.rel (%p883) target = $region52
        $region51: #{residual_block_forward.4} parent=47 // pred_region
          %s886 = sand.u32 %s81, 1
          %s887 = scalar_lea.sflag [#allocation4], %s886
          %s888 = sand.u32 %s81, 1
          %s889 = smul.addr %s888, 128
          %s890 = scalar_lea.vmem [#allocation7], %s889
          %891 = dma.done %s887, 2048
        $region52: #{residual_block_forward.4} parent=47 // pred_fallthru
          _
        // Predicated region
        $region53: #{residual_block_forward.4} parent=47 // pred_check
          %p892 = pneg %p122
        $region54: #{residual_block_forward.4} parent=47 // pred_check_branch
          %894 = sbr.rel (%p892) target = $region56
        $region55: #{residual_block_forward.4} parent=47 // pred_region
          %s895 = sand.u32 %s107, 1
          %s896 = scalar_lea.sflag [#allocation9], %s895
          %s897 = sand.u32 %s107, 1
          %s898 = smul.addr %s897, 2
          %s899 = scalar_lea.vmem [#allocation8], %s898
          %900 = dma.done %s896, 32
        $region56: #{residual_block_forward.4} parent=47 // pred_fallthru
          _
      $region48: #{residual_block_forward.4} parent=5 // pred_fallthru
        _
    $region6: #{residual_block_forward.4} parent=1 // loop_footer
      %s24 = sadd.s32 1, %s20
    $region7: #{residual_block_forward.4} parent=1 // loop_footer_branch
      %19 = sbr.rel target = $region3
    $region8: #{residual_block_forward.4} parent=1 // loop_exit
      _
    %901 = vsyncpa [#allocation3], 1
    %s902 = scalar_lea.sflag [#allocation3], 1
    %903 = vsyncpa %s902, 1
    %904 = vsyncpa [#allocation6], 1
    %905 = vsyncpa [#allocation4], 1
    %s906 = scalar_lea.sflag [#allocation4], 1
    %907 = vsyncpa %s906, 1
    %908 = vsyncpa [#allocation9], 1
    %s909 = scalar_lea.sflag [#allocation9], 1
    %910 = vsyncpa %s909, 1

// kernel: residual_block_forward.5
$region0: #{residual_block_forward.5}
  #allocation0 [shape = 'u32[]', space=smem, size = 0x4, offset = 0x4, fixed_abs, tag = 'smem constant byte address 0x4 - core index']
  #allocation1 [shape = 'u32[144,128]{1,0:T(1,128)}', space=vmem, size = 0x12000, scoped, tag = 'internal scratch']
  %s0 = inlined_call_operand.hbm [shape: bf16[512,128], index: 0, kind: input, shape index: {}]
  %s1 = inlined_call_operand.hbm [shape: f32[1,128], index: 1, kind: input, shape index: {}]
  %s2 = inlined_call_operand.hbm [shape: f32[1,128], index: 2, kind: input, shape index: {}]
  %s3 = inlined_call_operand.hbm [shape: bf16[512,128], index: 3, kind: output, shape index: {}]
  %s4 = sld [smem:[#allocation0]]
  $region57: #{residual_block_forward.5} parent=0
    _
  %s6 = ssub.s32 1, %s4
  %s7 = scalar_select 0, %s6, %s4
  $region1: #{residual_block_forward.5} parent=0
    #allocation2 [shape = 'u8[131072]{0}', space=vmem, size = 0x20000, scoped, tag = 'input window, operand 0']
    #allocation3 [shape = 's32[2]{0}', space=sflag, size = 0x8, scoped, tag = 'scoped memory for residual_block_forward.5']
    #allocation4 [shape = 's32[2]{0}', space=sflag, size = 0x8, scoped, tag = 'scoped memory for residual_block_forward.5']
    #allocation5 [shape = 'u8[512]{0}', space=vmem, size = 0x400, scoped, tag = 'input window, operand 1, single buffered']
    #allocation6 [shape = 's32[1]{0}', space=sflag, size = 0x4, scoped, tag = 'scoped memory for residual_block_forward.5']
    #allocation7 [shape = 'u8[512]{0}', space=vmem, size = 0x400, scoped, tag = 'input window, operand 2, single buffered']
    #allocation8 [shape = 'u8[131072]{0}', space=vmem, size = 0x20000, scoped, tag = 'output window, operand 0']
    %8 = vsyncpa [#allocation3], 0
    %s9 = scalar_lea.sflag [#allocation3], 1
    %10 = vsyncpa %s9, 0
    %11 = vsyncpa [#allocation6], 0
    %12 = vsyncpa [#allocation4], 0
    %s13 = scalar_lea.sflag [#allocation4], 1
    %14 = vsyncpa %s13, 0
    loop: start=0, step=1, limit=4
    $region2: #{residual_block_forward.5} parent=1 // loop_pre_header
      _
    $region3: #{residual_block_forward.5} parent=1 // loop_header
      %s16 = sphi 0, %s20
      %p17 = scmp.ge.s32.totalorder %s16, 4
      %s26 = sphi 0, %s28
      %s29 = sphi 0, %s26
      %s30 = sphi 0, %s29
      %s46 = sphi 0, %s30
      %s50 = sphi 0, %s50
      %s52 = sphi 0, %s50
      %s53 = sphi 0, %s52
      %s67 = sphi 0, %s53
      %s71 = sphi 0, %s71
      %s73 = sphi 0, %s71
      %s74 = sphi 0, %s73
      %s88 = sphi 0, %s74
      %s94 = sphi 0, %s96
      %s97 = sphi 0, %s94
      %s98 = sphi 0, %s97
      %s114 = sphi 0, %s98
    $region4: #{residual_block_forward.5} parent=1 // loop_header_branch
      %19 = sbr.rel (%p17) target = $region8
    $region5: #{residual_block_forward.5} parent=1 // loop_body
      %s21 = ssub.s32 %s16, 1
      %s22 = ssub.s32 %s16, 2
      %s23 = sadd.s32 %s16, 1
      %s24 = ssub.s32 %s16, %s23
      %p25 = scmp.eq.s32.totalorder %s24, 0
      %s27 = sadd.s32 %s26, 1
      %s28 = scalar_select %p25, %s26, %s27
      %p31 = pneg %p25
      %p32 = scmp.eq.s32.totalorder %s16, 1
      %p33 = por %p31, %p32
      %p34 = scmp.ne.s32.totalorder %s26, %s29
      %p35 = scmp.eq.s32.totalorder %s16, 0
      %p36 = por %p34, %p35
      %p37 = scmp.ne.s32.totalorder %s26, %s29
      %p38 = scmp.eq.s32.totalorder %s21, 1
      %p39 = por %p37, %p38
      %p40 = scmp.ne.s32.totalorder %s29, %s30
      %p41 = scmp.eq.s32.totalorder %s21, 0
      %p42 = por %p40, %p41
      %p43 = scmp.ne.s32.totalorder %s29, %s30
      %p44 = scmp.eq.s32.totalorder %s22, 1
      %p45 = por %p43, %p44
      %p47 = scmp.ne.s32.totalorder %s30, %s46
      %p48 = scmp.eq.s32.totalorder %s22, 0
      %p49 = por %p47, %p48
      %s51 = sadd.s32 %s50, 1
      %p54 = scmp.eq.s32.totalorder %s16, 1
      %p55 = scmp.ne.s32.totalorder %s50, %s52
      %p56 = scmp.eq.s32.totalorder %s16, 0
      %p57 = por %p55, %p56
      %p58 = scmp.ne.s32.totalorder %s50, %s52
      %p59 = scmp.eq.s32.totalorder %s21, 1
      %p60 = por %p58, %p59
      %p61 = scmp.ne.s32.totalorder %s52, %s53
      %p62 = scmp.eq.s32.totalorder %s21, 0
      %p63 = por %p61, %p62
      %p64 = scmp.ne.s32.totalorder %s52, %s53
      %p65 = scmp.eq.s32.totalorder %s22, 1
      %p66 = por %p64, %p65
      %p68 = scmp.ne.s32.totalorder %s53, %s67
      %p69 = scmp.eq.s32.totalorder %s22, 0
      %p70 = por %p68, %p69
      %s72 = sadd.s32 %s71, 1
      %p75 = scmp.eq.s32.totalorder %s16, 1
      %p76 = scmp.ne.s32.totalorder %s71, %s73
      %p77 = scmp.eq.s32.totalorder %s16, 0
      %p78 = por %p76, %p77
      %p79 = scmp.ne.s32.totalorder %s71, %s73
      %p80 = scmp.eq.s32.totalorder %s21, 1
      %p81 = por %p79, %p80
      %p82 = scmp.ne.s32.totalorder %s73, %s74
      %p83 = scmp.eq.s32.totalorder %s21, 0
      %p84 = por %p82, %p83
      %p85 = scmp.ne.s32.totalorder %s73, %s74
      %p86 = scmp.eq.s32.totalorder %s22, 1
      %p87 = por %p85, %p86
      %p89 = scmp.ne.s32.totalorder %s74, %s88
      %p90 = scmp.eq.s32.totalorder %s22, 0
      %p91 = por %p89, %p90
      %s92 = ssub.s32 %s16, %s23
      %p93 = scmp.eq.s32.totalorder %s92, 0
      %s95 = sadd.s32 %s94, 1
      %s96 = scalar_select %p93, %s94, %s95
      %p99 = pneg %p93
      %p100 = scmp.eq.s32.totalorder %s16, 1
      %p101 = por %p99, %p100
      %p102 = scmp.ne.s32.totalorder %s94, %s97
      %p103 = scmp.eq.s32.totalorder %s16, 0
      %p104 = por %p102, %p103
      %p105 = scmp.ne.s32.totalorder %s94, %s97
      %p106 = scmp.eq.s32.totalorder %s21, 1
      %p107 = por %p105, %p106
      %p108 = scmp.ne.s32.totalorder %s97, %s98
      %p109 = scmp.eq.s32.totalorder %s21, 0
      %p110 = por %p108, %p109
      %p111 = scmp.ne.s32.totalorder %s97, %s98
      %p112 = scmp.eq.s32.totalorder %s22, 1
      %p113 = por %p111, %p112
      %p115 = scmp.ne.s32.totalorder %s98, %s114
      %p116 = scmp.eq.s32.totalorder %s22, 0
      %p117 = por %p115, %p116
      %p118 = scmp.le.s32.totalorder 1, %s16
      %p119 = scmp.lt.s32.totalorder %s16, 3
      %p120 = pnand %p118, %p119
      %p121 = pneg %p120
      // Predicated region
      $region9: #{residual_block_forward.5} parent=5 // pred_check
        _
      $region10: #{residual_block_forward.5} parent=5 // pred_check_branch
        %123 = sbr.rel (%p120) target = $region12
      $region11: #{residual_block_forward.5} parent=5 // pred_region
        %s124 = ssub.s32 %s16, 1
        // Predicated region
        $region13: #{residual_block_forward.5} parent=11 // pred_check
          %p125 = pneg %p63
        $region14: #{residual_block_forward.5} parent=11 // pred_check_branch
          %127 = sbr.rel (%p125) target = $region16
        $region15: #{residual_block_forward.5} parent=11 // pred_region
          %s129 = ssub.s32 16, 16
          %130 = vsyncadd [#allocation6], %s129
          %s132 = sshll.u32 [#allocation5], 4
          %s133 = int_to_ptr.vmem [resolvable:$true] %s132
          %135 = dma.hbm_to_vmem [thread:$0]  %s1, 16, %s133, [#allocation6]
        $region16: #{residual_block_forward.5} parent=11 // pred_fallthru
          _
        // Predicated region
        $region17: #{residual_block_forward.5} parent=11 // pred_check
          %p136 = pneg %p84
        $region18: #{residual_block_forward.5} parent=11 // pred_check_branch
          %138 = sbr.rel (%p136) target = $region20
        $region19: #{residual_block_forward.5} parent=11 // pred_region
          %s140 = ssub.s32 16, 16
          %141 = vsyncadd [#allocation6], %s140
          %s143 = sshll.u32 [#allocation7], 4
          %s144 = int_to_ptr.vmem [resolvable:$true] %s143
          %146 = dma.hbm_to_vmem [thread:$0]  %s2, 16, %s144, [#allocation6]
        $region20: #{residual_block_forward.5} parent=11 // pred_fallthru
          _
      $region12: #{residual_block_forward.5} parent=5 // pred_fallthru
        _
      %p147 = scmp.lt.s32.totalorder %s16, 2
      // Predicated region
      $region21: #{residual_block_forward.5} parent=5 // pred_check
        %p148 = pneg %p147
      $region22: #{residual_block_forward.5} parent=5 // pred_check_branch
        %150 = sbr.rel (%p148) target = $region24
      $region23: #{residual_block_forward.5} parent=5 // pred_region
        // Predicated region
        $region25: #{residual_block_forward.5} parent=23 // pred_check
          %p151 = pneg %p36
        $region26: #{residual_block_forward.5} parent=23 // pred_check_branch
          %153 = sbr.rel (%p151) target = $region28
        $region27: #{residual_block_forward.5} parent=23 // pred_region
          %s154 = sand.u32 %s26, 1
          %s155 = scalar_lea.sflag [#allocation3], %s154
          %s156 = sand.u32 %s26, 1
          %s157 = smul.addr %s156, 128
          %s158 = scalar_lea.vmem [#allocation2], %s157
          %s159 = smul.u32 32, %s16
          %s161 = ssub.s32 2048, 2048
          %162 = vsyncadd %s155, %s161
          %s163 = smul.addr %s159, 64
          %s164 = scalar_lea.hbm %s0, %s163
          %s165 = sshll.u32 %s158, 4
          %s166 = int_to_ptr.vmem [resolvable:$true] %s165
          %171 = dma.hbm_to_vmem [thread:$0]  %s164, 2048, %s166, %s155, 64, 64, 4
        $region28: #{residual_block_forward.5} parent=23 // pred_fallthru
          _
      $region24: #{residual_block_forward.5} parent=5 // pred_fallthru
        _
      %p172 = scmp.le.s32.totalorder 1, %s16
      %p173 = scmp.lt.s32.totalorder %s16, 3
      %p174 = pnand %p172, %p173
      %p175 = pneg %p174
      // Predicated region
      $region29: #{residual_block_forward.5} parent=5 // pred_check
        _
      $region30: #{residual_block_forward.5} parent=5 // pred_check_branch
        %177 = sbr.rel (%p174) target = $region32
      $region31: #{residual_block_forward.5} parent=5 // pred_region
        %s178 = ssub.s32 %s16, 1
        %s179 = sand.u32 %s29, 1
        %s180 = scalar_lea.sflag [#allocation3], %s179
        %s181 = sand.u32 %s29, 1
        %s182 = smul.addr %s181, 128
        %s183 = scalar_lea.vmem [#allocation2], %s182
        // Predicated region
        $region33: #{residual_block_forward.5} parent=31 // pred_check
          %p184 = pneg %p42
        $region34: #{residual_block_forward.5} parent=31 // pred_check_branch
          %186 = sbr.rel (%p184) target = $region36
        $region35: #{residual_block_forward.5} parent=31 // pred_region
          %187 = dma.done %s180, 2048
        $region36: #{residual_block_forward.5} parent=31 // pred_fallthru
          _
        // Predicated region
        $region37: #{residual_block_forward.5} parent=31 // pred_check
          %p188 = pneg %p63
        $region38: #{residual_block_forward.5} parent=31 // pred_check_branch
          %190 = sbr.rel (%p188) target = $region40
        $region39: #{residual_block_forward.5} parent=31 // pred_region
          %191 = dma.done [#allocation6], 16
        $region40: #{residual_block_forward.5} parent=31 // pred_fallthru
          _
        // Predicated region
        $region41: #{residual_block_forward.5} parent=31 // pred_check
          %p192 = pneg %p84
        $region42: #{residual_block_forward.5} parent=31 // pred_check_branch
          %194 = sbr.rel (%p192) target = $region44
        $region43: #{residual_block_forward.5} parent=31 // pred_region
          %195 = dma.done [#allocation6], 16
        $region44: #{residual_block_forward.5} parent=31 // pred_fallthru
          _
        %s196 = sand.u32 %s29, 1
        %s197 = scalar_lea.sflag [#allocation3], %s196
        %s198 = sand.u32 %s29, 1
        %s199 = smul.addr %s198, 128
        %s200 = scalar_lea.vmem [#allocation2], %s199
        %p201 = pneg %p42
        %p202 = pneg %p39
        %p203 = pneg %p63
        %p204 = pneg %p60
        %p205 = pneg %p84
        %p206 = pneg %p81
        %p207 = pneg %p110
        %p208 = pneg %p107
        %s209 = sand.u32 %s97, 1
        %s210 = scalar_lea.sflag [#allocation4], %s209
        %s211 = sand.u32 %s97, 1
        %s212 = smul.addr %s211, 128
        %s213 = scalar_lea.vmem [#allocation8], %s212
        %s214 = smul.u32 32, %s21
        %s215 = smul.u32 32, %s21
        %v216 = vld [vmem:[%s183] sm:$0xf]
        %v217 = vld [vmem:[%s183 + $0x4] sm:$0xf]
        %v218 = vld [vmem:[%s183 + $0x8] sm:$0xf]
        %v219 = vld [vmem:[%s183 + $0xc] sm:$0xf]
        %v220 = vld [vmem:[%s183 + $0x10] sm:$0xf]
        %v221 = vld [vmem:[%s183 + $0x14] sm:$0xf]
        %v222 = vld [vmem:[%s183 + $0x18] sm:$0xf]
        %v223 = vld [vmem:[%s183 + $0x1c] sm:$0xf]
        %v224 = vld [vmem:[%s183 + $0x20] sm:$0xf]
        %v225 = vld [vmem:[%s183 + $0x24] sm:$0xf]
        %v226 = vld [vmem:[%s183 + $0x28] sm:$0xf]
        %v227 = vld [vmem:[%s183 + $0x2c] sm:$0xf]
        %v228 = vld [vmem:[%s183 + $0x30] sm:$0xf]
        %v229 = vld [vmem:[%s183 + $0x34] sm:$0xf]
        %v230 = vld [vmem:[%s183 + $0x38] sm:$0xf]
        %v231 = vld [vmem:[%s183 + $0x3c] sm:$0xf]
        %v232 = vld [vmem:[%s183 + $0x40] sm:$0xf]
        %v233 = vld [vmem:[%s183 + $0x44] sm:$0xf]
        %v234 = vld [vmem:[%s183 + $0x48] sm:$0xf]
        %v235 = vld [vmem:[%s183 + $0x4c] sm:$0xf]
        %v236 = vld [vmem:[%s183 + $0x50] sm:$0xf]
        %v237 = vld [vmem:[%s183 + $0x54] sm:$0xf]
        %v238 = vld [vmem:[%s183 + $0x58] sm:$0xf]
        %v239 = vld [vmem:[%s183 + $0x5c] sm:$0xf]
        %v240 = vld [vmem:[%s183 + $0x60] sm:$0xf]
        %v241 = vld [vmem:[%s183 + $0x64] sm:$0xf]
        %v242 = vld [vmem:[%s183 + $0x68] sm:$0xf]
        %v243 = vld [vmem:[%s183 + $0x6c] sm:$0xf]
        %v244 = vld [vmem:[%s183 + $0x70] sm:$0xf]
        %v245 = vld [vmem:[%s183 + $0x74] sm:$0xf]
        %v246 = vld [vmem:[%s183 + $0x78] sm:$0xf]
        %v247 = vld [vmem:[%s183 + $0x7c] sm:$0xf]
        %v248 = vunpack.c.l.bf16 %v216
        %v249 = vunpack.c.l.bf16 %v217
        %v250 = vunpack.c.l.bf16 %v218
        %v251 = vunpack.c.l.bf16 %v219
        %v252 = vunpack.c.l.bf16 %v220
        %v253 = vunpack.c.l.bf16 %v221
        %v254 = vunpack.c.l.bf16 %v222
        %v255 = vunpack.c.l.bf16 %v223
        %v256 = vunpack.c.l.bf16 %v224
        %v257 = vunpack.c.l.bf16 %v225
        %v258 = vunpack.c.l.bf16 %v226
        %v259 = vunpack.c.l.bf16 %v227
        %v260 = vunpack.c.l.bf16 %v228
        %v261 = vunpack.c.l.bf16 %v229
        %v262 = vunpack.c.l.bf16 %v230
        %v263 = vunpack.c.l.bf16 %v231
        %v264 = vunpack.c.l.bf16 %v232
        %v265 = vunpack.c.l.bf16 %v233
        %v266 = vunpack.c.l.bf16 %v234
        %v267 = vunpack.c.l.bf16 %v235
        %v268 = vunpack.c.l.bf16 %v236
        %v269 = vunpack.c.l.bf16 %v237
        %v270 = vunpack.c.l.bf16 %v238
        %v271 = vunpack.c.l.bf16 %v239
        %v272 = vunpack.c.l.bf16 %v240
        %v273 = vunpack.c.l.bf16 %v241
        %v274 = vunpack.c.l.bf16 %v242
        %v275 = vunpack.c.l.bf16 %v243
        %v276 = vunpack.c.l.bf16 %v244
        %v277 = vunpack.c.l.bf16 %v245
        %v278 = vunpack.c.l.bf16 %v246
        %v279 = vunpack.c.l.bf16 %v247
        %v280 = vld [vmem:[#allocation5] sm:$0x1]
        %v282 = vlaneseq
        %v283 = vshrl.u32 %v282, 7
        %v284 = vsub.s32 0, %v283
        %v285 = vrot.slane %v280, %v284
        %v287 = vmul.f32 %v248, %v285
        %v288 = vmul.f32 %v249, %v285
        %v289 = vmul.f32 %v250, %v285
        %v290 = vmul.f32 %v251, %v285
        %v291 = vmul.f32 %v252, %v285
        %v292 = vmul.f32 %v253, %v285
        %v293 = vmul.f32 %v254, %v285
        %v294 = vmul.f32 %v255, %v285
        %v295 = vmul.f32 %v256, %v285
        %v296 = vmul.f32 %v257, %v285
        %v297 = vmul.f32 %v258, %v285
        %v298 = vmul.f32 %v259, %v285
        %v299 = vmul.f32 %v260, %v285
        %v300 = vmul.f32 %v261, %v285
        %v301 = vmul.f32 %v262, %v285
        %v302 = vmul.f32 %v263, %v285
        %v303 = vmul.f32 %v264, %v285
        %v304 = vmul.f32 %v265, %v285
        %v305 = vmul.f32 %v266, %v285
        %v306 = vmul.f32 %v267, %v285
        %v307 = vmul.f32 %v268, %v285
        %v308 = vmul.f32 %v269, %v285
        %v309 = vmul.f32 %v270, %v285
        %v310 = vmul.f32 %v271, %v285
        %v311 = vmul.f32 %v272, %v285
        %v312 = vmul.f32 %v273, %v285
        %v313 = vmul.f32 %v274, %v285
        %v314 = vmul.f32 %v275, %v285
        %v315 = vmul.f32 %v276, %v285
        %v316 = vmul.f32 %v277, %v285
        %v317 = vmul.f32 %v278, %v285
        %v318 = vmul.f32 %v279, %v285
        %v319 = vld [vmem:[#allocation7] sm:$0x1]
        %v321 = vlaneseq
        %v322 = vshrl.u32 %v321, 7
        %v323 = vsub.s32 0, %v322
        %v324 = vrot.slane %v319, %v323
        %v326 = vadd.f32 %v287, %v324
        %v327 = vadd.f32 %v288, %v324
        %v328 = vadd.f32 %v289, %v324
        %v329 = vadd.f32 %v290, %v324
        %v330 = vadd.f32 %v291, %v324
        %v331 = vadd.f32 %v292, %v324
        %v332 = vadd.f32 %v293, %v324
        %v333 = vadd.f32 %v294, %v324
        %v334 = vadd.f32 %v295, %v324
        %v335 = vadd.f32 %v296, %v324
        %v336 = vadd.f32 %v297, %v324
        %v337 = vadd.f32 %v298, %v324
        %v338 = vadd.f32 %v299, %v324
        %v339 = vadd.f32 %v300, %v324
        %v340 = vadd.f32 %v301, %v324
        %v341 = vadd.f32 %v302, %v324
        %v342 = vadd.f32 %v303, %v324
        %v343 = vadd.f32 %v304, %v324
        %v344 = vadd.f32 %v305, %v324
        %v345 = vadd.f32 %v306, %v324
        %v346 = vadd.f32 %v307, %v324
        %v347 = vadd.f32 %v308, %v324
        %v348 = vadd.f32 %v309, %v324
        %v349 = vadd.f32 %v310, %v324
        %v350 = vadd.f32 %v311, %v324
        %v351 = vadd.f32 %v312, %v324
        %v352 = vadd.f32 %v313, %v324
        %v353 = vadd.f32 %v314, %v324
        %v354 = vadd.f32 %v315, %v324
        %v355 = vadd.f32 %v316, %v324
        %v356 = vadd.f32 %v317, %v324
        %v357 = vadd.f32 %v318, %v324
        %v358 = vmax.f32 %v326, 0.0
        %v359 = vmax.f32 %v327, 0.0
        %v360 = vmax.f32 %v328, 0.0
        %v361 = vmax.f32 %v329, 0.0
        %v362 = vmax.f32 %v330, 0.0
        %v363 = vmax.f32 %v331, 0.0
        %v364 = vmax.f32 %v332, 0.0
        %v365 = vmax.f32 %v333, 0.0
        %v366 = vmax.f32 %v334, 0.0
        %v367 = vmax.f32 %v335, 0.0
        %v368 = vmax.f32 %v336, 0.0
        %v369 = vmax.f32 %v337, 0.0
        %v370 = vmax.f32 %v338, 0.0
        %v371 = vmax.f32 %v339, 0.0
        %v372 = vmax.f32 %v340, 0.0
        %v373 = vmax.f32 %v341, 0.0
        %v374 = vmax.f32 %v342, 0.0
        %v375 = vmax.f32 %v343, 0.0
        %v376 = vmax.f32 %v344, 0.0
        %v377 = vmax.f32 %v345, 0.0
        %v378 = vmax.f32 %v346, 0.0
        %v379 = vmax.f32 %v347, 0.0
        %v380 = vmax.f32 %v348, 0.0
        %v381 = vmax.f32 %v349, 0.0
        %v382 = vmax.f32 %v350, 0.0
        %v383 = vmax.f32 %v351, 0.0
        %v384 = vmax.f32 %v352, 0.0
        %v385 = vmax.f32 %v353, 0.0
        %v386 = vmax.f32 %v354, 0.0
        %v387 = vmax.f32 %v355, 0.0
        %v388 = vmax.f32 %v356, 0.0
        %v389 = vmax.f32 %v357, 0.0
        %v390 = vpack.c.bf16 %v359, %v358
        %v391 = vpack.c.bf16 %v361, %v360
        %v392 = vpack.c.bf16 %v363, %v362
        %v393 = vpack.c.bf16 %v365, %v364
        %v394 = vpack.c.bf16 %v367, %v366
        %v395 = vpack.c.bf16 %v369, %v368
        %v396 = vpack.c.bf16 %v371, %v370
        %v397 = vpack.c.bf16 %v373, %v372
        %v398 = vpack.c.bf16 %v375, %v374
        %v399 = vpack.c.bf16 %v377, %v376
        %v400 = vpack.c.bf16 %v379, %v378
        %v401 = vpack.c.bf16 %v381, %v380
        %v402 = vpack.c.bf16 %v383, %v382
        %v403 = vpack.c.bf16 %v385, %v384
        %v404 = vpack.c.bf16 %v387, %v386
        %v405 = vpack.c.bf16 %v389, %v388
        %v422 = vunpack.c.l.b16 %v390
        %v423 = vunpack.c.h.b16 %v390
        %v424 = vunpack.c.l.b16 %v391
        %v425 = vunpack.c.h.b16 %v391
        %v426 = vunpack.c.l.b16 %v392
        %v427 = vunpack.c.h.b16 %v392
        %v428 = vunpack.c.l.b16 %v393
        %v429 = vunpack.c.h.b16 %v393
        %v430 = vunpack.c.l.b16 %v394
        %v431 = vunpack.c.h.b16 %v394
        %v432 = vunpack.c.l.b16 %v395
        %v433 = vunpack.c.h.b16 %v395
        %v434 = vunpack.c.l.b16 %v396
        %v435 = vunpack.c.h.b16 %v396
        %v436 = vunpack.c.l.b16 %v397
        %v437 = vunpack.c.h.b16 %v397
        %v438 = vunpack.c.l.b16 %v398
        %v439 = vunpack.c.h.b16 %v398
        %v440 = vunpack.c.l.b16 %v399
        %v441 = vunpack.c.h.b16 %v399
        %v442 = vunpack.c.l.b16 %v400
        %v443 = vunpack.c.h.b16 %v400
        %v444 = vunpack.c.l.b16 %v401
        %v445 = vunpack.c.h.b16 %v401
        %v446 = vunpack.c.l.b16 %v402
        %v447 = vunpack.c.h.b16 %v402
        %v448 = vunpack.c.l.b16 %v403
        %v449 = vunpack.c.h.b16 %v403
        %v450 = vunpack.c.l.b16 %v404
        %v451 = vunpack.c.h.b16 %v404
        %v452 = vunpack.c.l.b16 %v405
        %v453 = vunpack.c.h.b16 %v405
        %v454 = vpack.c.b16 %v422, %v422
        %v455 = vpack.c.b16 %v423, %v423
        %v456 = vpack.c.b16 %v424, %v424
        %v457 = vpack.c.b16 %v425, %v425
        %v458 = vpack.c.b16 %v426, %v426
        %v459 = vpack.c.b16 %v427, %v427
        %v460 = vpack.c.b16 %v428, %v428
        %v461 = vpack.c.b16 %v429, %v429
        %v462 = vpack.c.b16 %v430, %v430
        %v463 = vpack.c.b16 %v431, %v431
        %v464 = vpack.c.b16 %v432, %v432
        %v465 = vpack.c.b16 %v433, %v433
        %v466 = vpack.c.b16 %v434, %v434
        %v467 = vpack.c.b16 %v435, %v435
        %v468 = vpack.c.b16 %v436, %v436
        %v469 = vpack.c.b16 %v437, %v437
        %v470 = vpack.c.b16 %v438, %v438
        %v471 = vpack.c.b16 %v439, %v439
        %v472 = vpack.c.b16 %v440, %v440
        %v473 = vpack.c.b16 %v441, %v441
        %v474 = vpack.c.b16 %v442, %v442
        %v475 = vpack.c.b16 %v443, %v443
        %v476 = vpack.c.b16 %v444, %v444
        %v477 = vpack.c.b16 %v445, %v445
        %v478 = vpack.c.b16 %v446, %v446
        %v479 = vpack.c.b16 %v447, %v447
        %v480 = vpack.c.b16 %v448, %v448
        %v481 = vpack.c.b16 %v449, %v449
        %v482 = vpack.c.b16 %v450, %v450
        %v483 = vpack.c.b16 %v451, %v451
        %v484 = vpack.c.b16 %v452, %v452
        %v485 = vpack.c.b16 %v453, %v453
        %518 = vst [vmem:[%s213] sm:$0xf] %v454
        %519 = vst [vmem:[%s213 + $0x4] sm:$0xf] %v455
        %520 = vst [vmem:[%s213 + $0x8] sm:$0xf] %v456
        %521 = vst [vmem:[%s213 + $0xc] sm:$0xf] %v457
        %522 = vst [vmem:[%s213 + $0x10] sm:$0xf] %v458
        %523 = vst [vmem:[%s213 + $0x14] sm:$0xf] %v459
        %524 = vst [vmem:[%s213 + $0x18] sm:$0xf] %v460
        %525 = vst [vmem:[%s213 + $0x1c] sm:$0xf] %v461
        %526 = vst [vmem:[%s213 + $0x20] sm:$0xf] %v462
        %527 = vst [vmem:[%s213 + $0x24] sm:$0xf] %v463
        %528 = vst [vmem:[%s213 + $0x28] sm:$0xf] %v464
        %529 = vst [vmem:[%s213 + $0x2c] sm:$0xf] %v465
        %530 = vst [vmem:[%s213 + $0x30] sm:$0xf] %v466
        %531 = vst [vmem:[%s213 + $0x34] sm:$0xf] %v467
        %532 = vst [vmem:[%s213 + $0x38] sm:$0xf] %v468
        %533 = vst [vmem:[%s213 + $0x3c] sm:$0xf] %v469
        %534 = vst [vmem:[%s213 + $0x40] sm:$0xf] %v470
        %535 = vst [vmem:[%s213 + $0x44] sm:$0xf] %v471
        %536 = vst [vmem:[%s213 + $0x48] sm:$0xf] %v472
        %537 = vst [vmem:[%s213 + $0x4c] sm:$0xf] %v473
        %538 = vst [vmem:[%s213 + $0x50] sm:$0xf] %v474
        %539 = vst [vmem:[%s213 + $0x54] sm:$0xf] %v475
        %540 = vst [vmem:[%s213 + $0x58] sm:$0xf] %v476
        %541 = vst [vmem:[%s213 + $0x5c] sm:$0xf] %v477
        %542 = vst [vmem:[%s213 + $0x60] sm:$0xf] %v478
        %543 = vst [vmem:[%s213 + $0x64] sm:$0xf] %v479
        %544 = vst [vmem:[%s213 + $0x68] sm:$0xf] %v480
        %545 = vst [vmem:[%s213 + $0x6c] sm:$0xf] %v481
        %546 = vst [vmem:[%s213 + $0x70] sm:$0xf] %v482
        %547 = vst [vmem:[%s213 + $0x74] sm:$0xf] %v483
        %548 = vst [vmem:[%s213 + $0x78] sm:$0xf] %v484
        %549 = vst [vmem:[%s213 + $0x7c] sm:$0xf] %v485
        %s550 = sand.u32 %s97, 1
        %s551 = scalar_lea.sflag [#allocation4], %s550
        %s552 = sand.u32 %s97, 1
        %s553 = smul.addr %s552, 128
        %s554 = scalar_lea.vmem [#allocation8], %s553
        // Predicated region
        $region45: #{residual_block_forward.5} parent=31 // pred_check
          %p555 = pneg %p107
        $region46: #{residual_block_forward.5} parent=31 // pred_check_branch
          %557 = sbr.rel (%p555) target = $region48
        $region47: #{residual_block_forward.5} parent=31 // pred_region
          %s558 = smul.u32 32, %s21
          %s560 = ssub.s32 2048, 2048
          %561 = vsyncadd %s551, %s560
          %s562 = smul.addr %s558, 64
          %s563 = scalar_lea.hbm %s3, %s562
          %s564 = sshll.u32 %s554, 4
          %s565 = int_to_ptr.vmem [resolvable:$true] %s564
          %570 = dma.vmem_to_hbm [thread:$0]  %s565, 2048, %s563, %s551, 64, 64, 4
        $region48: #{residual_block_forward.5} parent=31 // pred_fallthru
          _
      $region32: #{residual_block_forward.5} parent=5 // pred_fallthru
        _
      %p571 = scmp.le.s32.totalorder 2, %s16
      // Predicated region
      $region49: #{residual_block_forward.5} parent=5 // pred_check
        %p572 = pneg %p571
      $region50: #{residual_block_forward.5} parent=5 // pred_check_branch
        %574 = sbr.rel (%p572) target = $region52
      $region51: #{residual_block_forward.5} parent=5 // pred_region
        %s575 = ssub.s32 %s16, 2
        // Predicated region
        $region53: #{residual_block_forward.5} parent=51 // pred_check
          %p576 = pneg %p113
        $region54: #{residual_block_forward.5} parent=51 // pred_check_branch
          %578 = sbr.rel (%p576) target = $region56
        $region55: #{residual_block_forward.5} parent=51 // pred_region
          %s579 = sand.u32 %s98, 1
          %s580 = scalar_lea.sflag [#allocation4], %s579
          %s581 = sand.u32 %s98, 1
          %s582 = smul.addr %s581, 128
          %s583 = scalar_lea.vmem [#allocation8], %s582
          %584 = dma.done %s580, 2048
        $region56: #{residual_block_forward.5} parent=51 // pred_fallthru
          _
      $region52: #{residual_block_forward.5} parent=5 // pred_fallthru
        _
    $region6: #{residual_block_forward.5} parent=1 // loop_footer
      %s20 = sadd.s32 1, %s16
    $region7: #{residual_block_forward.5} parent=1 // loop_footer_branch
      %15 = sbr.rel target = $region3
    $region8: #{residual_block_forward.5} parent=1 // loop_exit
      _
    %585 = vsyncpa [#allocation3], 1
    %s586 = scalar_lea.sflag [#allocation3], 1
    %587 = vsyncpa %s586, 1
    %588 = vsyncpa [#allocation6], 1
    %589 = vsyncpa [#allocation4], 1
    %s590 = scalar_lea.sflag [#allocation4], 1
    %591 = vsyncpa %s590, 1

// kernel: residual_block_forward.7
$region0: #{residual_block_forward.7}
  #allocation0 [shape = 'u32[]', space=smem, size = 0x4, offset = 0x4, fixed_abs, tag = 'smem constant byte address 0x4 - core index']
  #allocation1 [shape = 'u32[144,128]{1,0:T(1,128)}', space=vmem, size = 0x12000, scoped, tag = 'internal scratch']
  %s0 = inlined_call_operand.hbm [shape: bf16[512,128], index: 0, kind: input, shape index: {}]
  %s1 = inlined_call_operand.hbm [shape: bf16[512,128], index: 1, kind: input, shape index: {}]
  %s2 = inlined_call_operand.hbm [shape: bf16[128,128], index: 2, kind: input, shape index: {}]
  %s3 = inlined_call_operand.hbm [shape: f32[1,128], index: 3, kind: input, shape index: {}]
  %s4 = inlined_call_operand.hbm [shape: f32[1,128], index: 4, kind: input, shape index: {}]
  %s5 = inlined_call_operand.hbm [shape: f32[1,128], index: 5, kind: input, shape index: {}]
  %s6 = inlined_call_operand.hbm [shape: bf16[512,128], index: 6, kind: output, shape index: {}]
  %s7 = sld [smem:[#allocation0]]
  $region81: #{residual_block_forward.7} parent=0
    _
  %s9 = ssub.s32 1, %s7
  %s10 = scalar_select 0, %s9, %s7
  $region1: #{residual_block_forward.7} parent=0
    #allocation2 [shape = 'u8[131072]{0}', space=vmem, size = 0x20000, scoped, tag = 'input window, operand 0']
    #allocation3 [shape = 's32[2]{0}', space=sflag, size = 0x8, scoped, tag = 'scoped memory for residual_block_forward.7']
    #allocation4 [shape = 's32[2]{0}', space=sflag, size = 0x8, scoped, tag = 'scoped memory for residual_block_forward.7']
    #allocation5 [shape = 'u8[131072]{0}', space=vmem, size = 0x20000, scoped, tag = 'input window, operand 1']
    #allocation6 [shape = 's32[2]{0}', space=sflag, size = 0x8, scoped, tag = 'scoped memory for residual_block_forward.7']
    #allocation7 [shape = 'u8[32768]{0}', space=vmem, size = 0x8000, scoped, tag = 'input window, operand 2, single buffered']
    #allocation8 [shape = 'u8[512]{0}', space=vmem, size = 0x400, scoped, tag = 'input window, operand 3, single buffered']
    #allocation9 [shape = 's32[1]{0}', space=sflag, size = 0x4, scoped, tag = 'scoped memory for residual_block_forward.7']
    #allocation10 [shape = 'u8[512]{0}', space=vmem, size = 0x400, scoped, tag = 'input window, operand 4, single buffered']
    #allocation11 [shape = 'u8[512]{0}', space=vmem, size = 0x400, scoped, tag = 'input window, operand 5, single buffered']
    #allocation12 [shape = 's32[1]{0}', space=sflag, size = 0x4, scoped, tag = 'scoped memory for residual_block_forward.7']
    #allocation13 [shape = 'u8[131072]{0}', space=vmem, size = 0x20000, scoped, tag = 'output window, operand 0']
    %11 = vsyncpa [#allocation3], 0
    %s12 = scalar_lea.sflag [#allocation3], 1
    %13 = vsyncpa %s12, 0
    %14 = vsyncpa [#allocation6], 0
    %s15 = scalar_lea.sflag [#allocation6], 1
    %16 = vsyncpa %s15, 0
    %17 = vsyncpa [#allocation9], 0
    %18 = vsyncpa [#allocation12], 0
    %19 = vsyncpa [#allocation4], 0
    %s20 = scalar_lea.sflag [#allocation4], 1
    %21 = vsyncpa %s20, 0
    loop: start=0, step=1, limit=4
    $region2: #{residual_block_forward.7} parent=1 // loop_pre_header
      _
    $region3: #{residual_block_forward.7} parent=1 // loop_header
      %s23 = sphi 0, %s27
      %p24 = scmp.ge.s32.totalorder %s23, 4
      %s33 = sphi 0, %s35
      %s36 = sphi 0, %s33
      %s37 = sphi 0, %s36
      %s53 = sphi 0, %s37
      %s59 = sphi 0, %s61
      %s62 = sphi 0, %s59
      %s63 = sphi 0, %s62
      %s79 = sphi 0, %s63
      %s83 = sphi 0, %s83
      %s85 = sphi 0, %s83
      %s86 = sphi 0, %s85
      %s100 = sphi 0, %s86
      %s104 = sphi 0, %s104
      %s106 = sphi 0, %s104
      %s107 = sphi 0, %s106
      %s121 = sphi 0, %s107
      %s125 = sphi 0, %s125
      %s127 = sphi 0, %s125
      %s128 = sphi 0, %s127
      %s142 = sphi 0, %s128
      %s146 = sphi 0, %s146
      %s148 = sphi 0, %s146
      %s149 = sphi 0, %s148
      %s163 = sphi 0, %s149
      %s169 = sphi 0, %s171
      %s172 = sphi 0, %s169
      %s173 = sphi 0, %s172
      %s189 = sphi 0, %s173
    $region4: #{residual_block_forward.7} parent=1 // loop_header_branch
      %26 = sbr.rel (%p24) target = $region8
    $region5: #{residual_block_forward.7} parent=1 // loop_body
      %s28 = ssub.s32 %s23, 1
      %s29 = ssub.s32 %s23, 2
      %s30 = sadd.s32 %s23, 1
      %s31 = ssub.s32 %s23, %s30
      %p32 = scmp.eq.s32.totalorder %s31, 0
      %s34 = sadd.s32 %s33, 1
      %s35 = scalar_select %p32, %s33, %s34
      %p38 = pneg %p32
      %p39 = scmp.eq.s32.totalorder %s23, 1
      %p40 = por %p38, %p39
      %p41 = scmp.ne.s32.totalorder %s33, %s36
      %p42 = scmp.eq.s32.totalorder %s23, 0
      %p43 = por %p41, %p42
      %p44 = scmp.ne.s32.totalorder %s33, %s36
      %p45 = scmp.eq.s32.totalorder %s28, 1
      %p46 = por %p44, %p45
      %p47 = scmp.ne.s32.totalorder %s36, %s37
      %p48 = scmp.eq.s32.totalorder %s28, 0
      %p49 = por %p47, %p48
      %p50 = scmp.ne.s32.totalorder %s36, %s37
      %p51 = scmp.eq.s32.totalorder %s29, 1
      %p52 = por %p50, %p51
      %p54 = scmp.ne.s32.totalorder %s37, %s53
      %p55 = scmp.eq.s32.totalorder %s29, 0
      %p56 = por %p54, %p55
      %s57 = ssub.s32 %s23, %s30
      %p58 = scmp.eq.s32.totalorder %s57, 0
      %s60 = sadd.s32 %s59, 1
      %s61 = scalar_select %p58, %s59, %s60
      %p64 = pneg %p58
      %p65 = scmp.eq.s32.totalorder %s23, 1
      %p66 = por %p64, %p65
      %p67 = scmp.ne.s32.totalorder %s59, %s62
      %p68 = scmp.eq.s32.totalorder %s23, 0
      %p69 = por %p67, %p68
      %p70 = scmp.ne.s32.totalorder %s59, %s62
      %p71 = scmp.eq.s32.totalorder %s28, 1
      %p72 = por %p70, %p71
      %p73 = scmp.ne.s32.totalorder %s62, %s63
      %p74 = scmp.eq.s32.totalorder %s28, 0
      %p75 = por %p73, %p74
      %p76 = scmp.ne.s32.totalorder %s62, %s63
      %p77 = scmp.eq.s32.totalorder %s29, 1
      %p78 = por %p76, %p77
      %p80 = scmp.ne.s32.totalorder %s63, %s79
      %p81 = scmp.eq.s32.totalorder %s29, 0
      %p82 = por %p80, %p81
      %s84 = sadd.s32 %s83, 1
      %p87 = scmp.eq.s32.totalorder %s23, 1
      %p88 = scmp.ne.s32.totalorder %s83, %s85
      %p89 = scmp.eq.s32.totalorder %s23, 0
      %p90 = por %p88, %p89
      %p91 = scmp.ne.s32.totalorder %s83, %s85
      %p92 = scmp.eq.s32.totalorder %s28, 1
      %p93 = por %p91, %p92
      %p94 = scmp.ne.s32.totalorder %s85, %s86
      %p95 = scmp.eq.s32.totalorder %s28, 0
      %p96 = por %p94, %p95
      %p97 = scmp.ne.s32.totalorder %s85, %s86
      %p98 = scmp.eq.s32.totalorder %s29, 1
      %p99 = por %p97, %p98
      %p101 = scmp.ne.s32.totalorder %s86, %s100
      %p102 = scmp.eq.s32.totalorder %s29, 0
      %p103 = por %p101, %p102
      %s105 = sadd.s32 %s104, 1
      %p108 = scmp.eq.s32.totalorder %s23, 1
      %p109 = scmp.ne.s32.totalorder %s104, %s106
      %p110 = scmp.eq.s32.totalorder %s23, 0
      %p111 = por %p109, %p110
      %p112 = scmp.ne.s32.totalorder %s104, %s106
      %p113 = scmp.eq.s32.totalorder %s28, 1
      %p114 = por %p112, %p113
      %p115 = scmp.ne.s32.totalorder %s106, %s107
      %p116 = scmp.eq.s32.totalorder %s28, 0
      %p117 = por %p115, %p116
      %p118 = scmp.ne.s32.totalorder %s106, %s107
      %p119 = scmp.eq.s32.totalorder %s29, 1
      %p120 = por %p118, %p119
      %p122 = scmp.ne.s32.totalorder %s107, %s121
      %p123 = scmp.eq.s32.totalorder %s29, 0
      %p124 = por %p122, %p123
      %s126 = sadd.s32 %s125, 1
      %p129 = scmp.eq.s32.totalorder %s23, 1
      %p130 = scmp.ne.s32.totalorder %s125, %s127
      %p131 = scmp.eq.s32.totalorder %s23, 0
      %p132 = por %p130, %p131
      %p133 = scmp.ne.s32.totalorder %s125, %s127
      %p134 = scmp.eq.s32.totalorder %s28, 1
      %p135 = por %p133, %p134
      %p136 = scmp.ne.s32.totalorder %s127, %s128
      %p137 = scmp.eq.s32.totalorder %s28, 0
      %p138 = por %p136, %p137
      %p139 = scmp.ne.s32.totalorder %s127, %s128
      %p140 = scmp.eq.s32.totalorder %s29, 1
      %p141 = por %p139, %p140
      %p143 = scmp.ne.s32.totalorder %s128, %s142
      %p144 = scmp.eq.s32.totalorder %s29, 0
      %p145 = por %p143, %p144
      %s147 = sadd.s32 %s146, 1
      %p150 = scmp.eq.s32.totalorder %s23, 1
      %p151 = scmp.ne.s32.totalorder %s146, %s148
      %p152 = scmp.eq.s32.totalorder %s23, 0
      %p153 = por %p151, %p152
      %p154 = scmp.ne.s32.totalorder %s146, %s148
      %p155 = scmp.eq.s32.totalorder %s28, 1
      %p156 = por %p154, %p155
      %p157 = scmp.ne.s32.totalorder %s148, %s149
      %p158 = scmp.eq.s32.totalorder %s28, 0
      %p159 = por %p157, %p158
      %p160 = scmp.ne.s32.totalorder %s148, %s149
      %p161 = scmp.eq.s32.totalorder %s29, 1
      %p162 = por %p160, %p161
      %p164 = scmp.ne.s32.totalorder %s149, %s163
      %p165 = scmp.eq.s32.totalorder %s29, 0
      %p166 = por %p164, %p165
      %s167 = ssub.s32 %s23, %s30
      %p168 = scmp.eq.s32.totalorder %s167, 0
      %s170 = sadd.s32 %s169, 1
      %s171 = scalar_select %p168, %s169, %s170
      %p174 = pneg %p168
      %p175 = scmp.eq.s32.totalorder %s23, 1
      %p176 = por %p174, %p175
      %p177 = scmp.ne.s32.totalorder %s169, %s172
      %p178 = scmp.eq.s32.totalorder %s23, 0
      %p179 = por %p177, %p178
      %p180 = scmp.ne.s32.totalorder %s169, %s172
      %p181 = scmp.eq.s32.totalorder %s28, 1
      %p182 = por %p180, %p181
      %p183 = scmp.ne.s32.totalorder %s172, %s173
      %p184 = scmp.eq.s32.totalorder %s28, 0
      %p185 = por %p183, %p184
      %p186 = scmp.ne.s32.totalorder %s172, %s173
      %p187 = scmp.eq.s32.totalorder %s29, 1
      %p188 = por %p186, %p187
      %p190 = scmp.ne.s32.totalorder %s173, %s189
      %p191 = scmp.eq.s32.totalorder %s29, 0
      %p192 = por %p190, %p191
      %p193 = scmp.le.s32.totalorder 1, %s23
      %p194 = scmp.lt.s32.totalorder %s23, 3
      %p195 = pnand %p193, %p194
      %p196 = pneg %p195
      // Predicated region
      $region9: #{residual_block_forward.7} parent=5 // pred_check
        _
      $region10: #{residual_block_forward.7} parent=5 // pred_check_branch
        %198 = sbr.rel (%p195) target = $region12
      $region11: #{residual_block_forward.7} parent=5 // pred_region
        %s199 = ssub.s32 %s23, 1
        // Predicated region
        $region13: #{residual_block_forward.7} parent=11 // pred_check
          %p200 = pneg %p96
        $region14: #{residual_block_forward.7} parent=11 // pred_check_branch
          %202 = sbr.rel (%p200) target = $region16
        $region15: #{residual_block_forward.7} parent=11 // pred_region
          %s204 = ssub.s32 1024, 1024
          %205 = vsyncadd [#allocation6], %s204
          %s206 = sshll.u32 [#allocation7], 4
          %s207 = int_to_ptr.vmem [resolvable:$true] %s206
          %212 = dma.hbm_to_vmem [thread:$0]  %s2, 1024, %s207, [#allocation6], 64, 64, 4
        $region16: #{residual_block_forward.7} parent=11 // pred_fallthru
          _
        // Predicated region
        $region17: #{residual_block_forward.7} parent=11 // pred_check
          %p213 = pneg %p117
        $region18: #{residual_block_forward.7} parent=11 // pred_check_branch
          %215 = sbr.rel (%p213) target = $region20
        $region19: #{residual_block_forward.7} parent=11 // pred_region
          %s217 = ssub.s32 16, 16
          %218 = vsyncadd [#allocation9], %s217
          %s220 = sshll.u32 [#allocation8], 4
          %s221 = int_to_ptr.vmem [resolvable:$true] %s220
          %223 = dma.hbm_to_vmem [thread:$0]  %s3, 16, %s221, [#allocation9]
        $region20: #{residual_block_forward.7} parent=11 // pred_fallthru
          _
        // Predicated region
        $region21: #{residual_block_forward.7} parent=11 // pred_check
          %p224 = pneg %p138
        $region22: #{residual_block_forward.7} parent=11 // pred_check_branch
          %226 = sbr.rel (%p224) target = $region24
        $region23: #{residual_block_forward.7} parent=11 // pred_region
          %s228 = ssub.s32 16, 16
          %229 = vsyncadd [#allocation9], %s228
          %s231 = sshll.u32 [#allocation10], 4
          %s232 = int_to_ptr.vmem [resolvable:$true] %s231
          %234 = dma.hbm_to_vmem [thread:$0]  %s4, 16, %s232, [#allocation9]
        $region24: #{residual_block_forward.7} parent=11 // pred_fallthru
          _
        // Predicated region
        $region25: #{residual_block_forward.7} parent=11 // pred_check
          %p235 = pneg %p159
        $region26: #{residual_block_forward.7} parent=11 // pred_check_branch
          %237 = sbr.rel (%p235) target = $region28
        $region27: #{residual_block_forward.7} parent=11 // pred_region
          %s239 = ssub.s32 16, 16
          %240 = vsyncadd [#allocation12], %s239
          %s242 = sshll.u32 [#allocation11], 4
          %s243 = int_to_ptr.vmem [resolvable:$true] %s242
          %245 = dma.hbm_to_vmem [thread:$0]  %s5, 16, %s243, [#allocation12]
        $region28: #{residual_block_forward.7} parent=11 // pred_fallthru
          _
      $region12: #{residual_block_forward.7} parent=5 // pred_fallthru
        _
      %p246 = scmp.lt.s32.totalorder %s23, 2
      // Predicated region
      $region29: #{residual_block_forward.7} parent=5 // pred_check
        %p247 = pneg %p246
      $region30: #{residual_block_forward.7} parent=5 // pred_check_branch
        %249 = sbr.rel (%p247) target = $region32
      $region31: #{residual_block_forward.7} parent=5 // pred_region
        // Predicated region
        $region33: #{residual_block_forward.7} parent=31 // pred_check
          %p250 = pneg %p43
        $region34: #{residual_block_forward.7} parent=31 // pred_check_branch
          %252 = sbr.rel (%p250) target = $region36
        $region35: #{residual_block_forward.7} parent=31 // pred_region
          %s253 = sand.u32 %s33, 1
          %s254 = scalar_lea.sflag [#allocation3], %s253
          %s255 = sand.u32 %s33, 1
          %s256 = smul.addr %s255, 128
          %s257 = scalar_lea.vmem [#allocation2], %s256
          %s258 = smul.u32 32, %s23
          %s260 = ssub.s32 2048, 2048
          %261 = vsyncadd %s254, %s260
          %s262 = smul.addr %s258, 64
          %s263 = scalar_lea.hbm %s0, %s262
          %s264 = sshll.u32 %s257, 4
          %s265 = int_to_ptr.vmem [resolvable:$true] %s264
          %270 = dma.hbm_to_vmem [thread:$0]  %s263, 2048, %s265, %s254, 64, 64, 4
        $region36: #{residual_block_forward.7} parent=31 // pred_fallthru
          _
        // Predicated region
        $region37: #{residual_block_forward.7} parent=31 // pred_check
          %p271 = pneg %p69
        $region38: #{residual_block_forward.7} parent=31 // pred_check_branch
          %273 = sbr.rel (%p271) target = $region40
        $region39: #{residual_block_forward.7} parent=31 // pred_region
          %s274 = sand.u32 %s23, 1
          %s275 = scalar_lea.sflag [#allocation6], %s274
          %s276 = sand.u32 %s59, 1
          %s277 = smul.addr %s276, 128
          %s278 = scalar_lea.vmem [#allocation5], %s277
          %s279 = smul.u32 32, %s23
          %s281 = ssub.s32 2048, 2048
          %282 = vsyncadd %s275, %s281
          %s283 = smul.addr %s279, 64
          %s284 = scalar_lea.hbm %s1, %s283
          %s285 = sshll.u32 %s278, 4
          %s286 = int_to_ptr.vmem [resolvable:$true] %s285
          %291 = dma.hbm_to_vmem [thread:$0]  %s284, 2048, %s286, %s275, 64, 64, 4
        $region40: #{residual_block_forward.7} parent=31 // pred_fallthru
          _
      $region32: #{residual_block_forward.7} parent=5 // pred_fallthru
        _
      %p292 = scmp.le.s32.totalorder 1, %s23
      %p293 = scmp.lt.s32.totalorder %s23, 3
      %p294 = pnand %p292, %p293
      %p295 = pneg %p294
      // Predicated region
      $region41: #{residual_block_forward.7} parent=5 // pred_check
        _
      $region42: #{residual_block_forward.7} parent=5 // pred_check_branch
        %297 = sbr.rel (%p294) target = $region44
      $region43: #{residual_block_forward.7} parent=5 // pred_region
        %s298 = ssub.s32 %s23, 1
        %s299 = sand.u32 %s36, 1
        %s300 = scalar_lea.sflag [#allocation3], %s299
        %s301 = sand.u32 %s36, 1
        %s302 = smul.addr %s301, 128
        %s303 = scalar_lea.vmem [#allocation2], %s302
        // Predicated region
        $region45: #{residual_block_forward.7} parent=43 // pred_check
          %p304 = pneg %p49
        $region46: #{residual_block_forward.7} parent=43 // pred_check_branch
          %306 = sbr.rel (%p304) target = $region48
        $region47: #{residual_block_forward.7} parent=43 // pred_region
          %307 = dma.done %s300, 2048
        $region48: #{residual_block_forward.7} parent=43 // pred_fallthru
          _
        %s308 = sand.u32 %s28, 1
        %s309 = scalar_lea.sflag [#allocation6], %s308
        %s310 = sand.u32 %s62, 1
        %s311 = smul.addr %s310, 128
        %s312 = scalar_lea.vmem [#allocation5], %s311
        // Predicated region
        $region49: #{residual_block_forward.7} parent=43 // pred_check
          %p313 = pneg %p75
        $region50: #{residual_block_forward.7} parent=43 // pred_check_branch
          %315 = sbr.rel (%p313) target = $region52
        $region51: #{residual_block_forward.7} parent=43 // pred_region
          %316 = dma.done %s309, 2048
        $region52: #{residual_block_forward.7} parent=43 // pred_fallthru
          _
        // Predicated region
        $region53: #{residual_block_forward.7} parent=43 // pred_check
          %p317 = pneg %p96
        $region54: #{residual_block_forward.7} parent=43 // pred_check_branch
          %319 = sbr.rel (%p317) target = $region56
        $region55: #{residual_block_forward.7} parent=43 // pred_region
          %320 = dma.done [#allocation6], 1024
        $region56: #{residual_block_forward.7} parent=43 // pred_fallthru
          _
        // Predicated region
        $region57: #{residual_block_forward.7} parent=43 // pred_check
          %p321 = pneg %p117
        $region58: #{residual_block_forward.7} parent=43 // pred_check_branch
          %323 = sbr.rel (%p321) target = $region60
        $region59: #{residual_block_forward.7} parent=43 // pred_region
          %324 = dma.done [#allocation9], 16
        $region60: #{residual_block_forward.7} parent=43 // pred_fallthru
          _
        // Predicated region
        $region61: #{residual_block_forward.7} parent=43 // pred_check
          %p325 = pneg %p138
        $region62: #{residual_block_forward.7} parent=43 // pred_check_branch
          %327 = sbr.rel (%p325) target = $region64
        $region63: #{residual_block_forward.7} parent=43 // pred_region
          %328 = dma.done [#allocation9], 16
        $region64: #{residual_block_forward.7} parent=43 // pred_fallthru
          _
        // Predicated region
        $region65: #{residual_block_forward.7} parent=43 // pred_check
          %p329 = pneg %p159
        $region66: #{residual_block_forward.7} parent=43 // pred_check_branch
          %331 = sbr.rel (%p329) target = $region68
        $region67: #{residual_block_forward.7} parent=43 // pred_region
          %332 = dma.done [#allocation12], 16
        $region68: #{residual_block_forward.7} parent=43 // pred_fallthru
          _
        %s333 = sand.u32 %s36, 1
        %s334 = scalar_lea.sflag [#allocation3], %s333
        %s335 = sand.u32 %s36, 1
        %s336 = smul.addr %s335, 128
        %s337 = scalar_lea.vmem [#allocation2], %s336
        %p338 = pneg %p49
        %p339 = pneg %p46
        %s340 = sand.u32 %s28, 1
        %s341 = scalar_lea.sflag [#allocation6], %s340
        %s342 = sand.u32 %s62, 1
        %s343 = smul.addr %s342, 128
        %s344 = scalar_lea.vmem [#allocation5], %s343
        %p345 = pneg %p75
        %p346 = pneg %p72
        %p347 = pneg %p96
        %p348 = pneg %p93
        %p349 = pneg %p117
        %p350 = pneg %p114
        %p351 = pneg %p138
        %p352 = pneg %p135
        %p353 = pneg %p159
        %p354 = pneg %p156
        %p355 = pneg %p185
        %p356 = pneg %p182
        %s357 = sand.u32 %s172, 1
        %s358 = scalar_lea.sflag [#allocation4], %s357
        %s359 = sand.u32 %s172, 1
        %s360 = smul.addr %s359, 128
        %s361 = scalar_lea.vmem [#allocation13], %s360
        %s362 = smul.u32 32, %s28
        %s363 = smul.u32 32, %s28
        %s364 = smul.u32 32, %s28
        %v366 = vld [vmem:[%s303] sm:$0xf]
        %v367 = vld [vmem:[%s303 + $0x4] sm:$0xf]
        %v368 = vld [vmem:[%s303 + $0x8] sm:$0xf]
        %v369 = vld [vmem:[%s303 + $0xc] sm:$0xf]
        %v370 = vld [vmem:[%s303 + $0x10] sm:$0xf]
        %v371 = vld [vmem:[%s303 + $0x14] sm:$0xf]
        %v372 = vld [vmem:[%s303 + $0x18] sm:$0xf]
        %v373 = vld [vmem:[%s303 + $0x1c] sm:$0xf]
        %v374 = vld [vmem:[%s303 + $0x20] sm:$0xf]
        %v375 = vld [vmem:[%s303 + $0x24] sm:$0xf]
        %v376 = vld [vmem:[%s303 + $0x28] sm:$0xf]
        %v377 = vld [vmem:[%s303 + $0x2c] sm:$0xf]
        %v378 = vld [vmem:[%s303 + $0x30] sm:$0xf]
        %v379 = vld [vmem:[%s303 + $0x34] sm:$0xf]
        %v380 = vld [vmem:[%s303 + $0x38] sm:$0xf]
        %v381 = vld [vmem:[%s303 + $0x3c] sm:$0xf]
        %v382 = vld [vmem:[%s303 + $0x40] sm:$0xf]
        %v383 = vld [vmem:[%s303 + $0x44] sm:$0xf]
        %v384 = vld [vmem:[%s303 + $0x48] sm:$0xf]
        %v385 = vld [vmem:[%s303 + $0x4c] sm:$0xf]
        %v386 = vld [vmem:[%s303 + $0x50] sm:$0xf]
        %v387 = vld [vmem:[%s303 + $0x54] sm:$0xf]
        %v388 = vld [vmem:[%s303 + $0x58] sm:$0xf]
        %v389 = vld [vmem:[%s303 + $0x5c] sm:$0xf]
        %v390 = vld [vmem:[%s303 + $0x60] sm:$0xf]
        %v391 = vld [vmem:[%s303 + $0x64] sm:$0xf]
        %v392 = vld [vmem:[%s303 + $0x68] sm:$0xf]
        %v393 = vld [vmem:[%s303 + $0x6c] sm:$0xf]
        %v394 = vld [vmem:[%s303 + $0x70] sm:$0xf]
        %v395 = vld [vmem:[%s303 + $0x74] sm:$0xf]
        %v396 = vld [vmem:[%s303 + $0x78] sm:$0xf]
        %v397 = vld [vmem:[%s303 + $0x7c] sm:$0xf]
        %v398 = vunpack.c.l.bf16 %v366
        %v399 = vunpack.c.l.bf16 %v367
        %v400 = vunpack.c.l.bf16 %v368
        %v401 = vunpack.c.l.bf16 %v369
        %v402 = vunpack.c.l.bf16 %v370
        %v403 = vunpack.c.l.bf16 %v371
        %v404 = vunpack.c.l.bf16 %v372
        %v405 = vunpack.c.l.bf16 %v373
        %v406 = vunpack.c.l.bf16 %v374
        %v407 = vunpack.c.l.bf16 %v375
        %v408 = vunpack.c.l.bf16 %v376
        %v409 = vunpack.c.l.bf16 %v377
        %v410 = vunpack.c.l.bf16 %v378
        %v411 = vunpack.c.l.bf16 %v379
        %v412 = vunpack.c.l.bf16 %v380
        %v413 = vunpack.c.l.bf16 %v381
        %v414 = vunpack.c.l.bf16 %v382
        %v415 = vunpack.c.l.bf16 %v383
        %v416 = vunpack.c.l.bf16 %v384
        %v417 = vunpack.c.l.bf16 %v385
        %v418 = vunpack.c.l.bf16 %v386
        %v419 = vunpack.c.l.bf16 %v387
        %v420 = vunpack.c.l.bf16 %v388
        %v421 = vunpack.c.l.bf16 %v389
        %v422 = vunpack.c.l.bf16 %v390
        %v423 = vunpack.c.l.bf16 %v391
        %v424 = vunpack.c.l.bf16 %v392
        %v425 = vunpack.c.l.bf16 %v393
        %v426 = vunpack.c.l.bf16 %v394
        %v427 = vunpack.c.l.bf16 %v395
        %v428 = vunpack.c.l.bf16 %v396
        %v429 = vunpack.c.l.bf16 %v397
        %v430 = vld [vmem:[#allocation10] sm:$0x1]
        %v432 = vlaneseq
        %v433 = vshrl.u32 %v432, 7
        %v434 = vsub.s32 0, %v433
        %v435 = vrot.slane %v430, %v434
        %v437 = vmul.f32 %v398, %v435
        %v438 = vmul.f32 %v399, %v435
        %v439 = vmul.f32 %v400, %v435
        %v440 = vmul.f32 %v401, %v435
        %v441 = vmul.f32 %v402, %v435
        %v442 = vmul.f32 %v403, %v435
        %v443 = vmul.f32 %v404, %v435
        %v444 = vmul.f32 %v405, %v435
        %v445 = vmul.f32 %v406, %v435
        %v446 = vmul.f32 %v407, %v435
        %v447 = vmul.f32 %v408, %v435
        %v448 = vmul.f32 %v409, %v435
        %v449 = vmul.f32 %v410, %v435
        %v450 = vmul.f32 %v411, %v435
        %v451 = vmul.f32 %v412, %v435
        %v452 = vmul.f32 %v413, %v435
        %v453 = vmul.f32 %v414, %v435
        %v454 = vmul.f32 %v415, %v435
        %v455 = vmul.f32 %v416, %v435
        %v456 = vmul.f32 %v417, %v435
        %v457 = vmul.f32 %v418, %v435
        %v458 = vmul.f32 %v419, %v435
        %v459 = vmul.f32 %v420, %v435
        %v460 = vmul.f32 %v421, %v435
        %v461 = vmul.f32 %v422, %v435
        %v462 = vmul.f32 %v423, %v435
        %v463 = vmul.f32 %v424, %v435
        %v464 = vmul.f32 %v425, %v435
        %v465 = vmul.f32 %v426, %v435
        %v466 = vmul.f32 %v427, %v435
        %v467 = vmul.f32 %v428, %v435
        %v468 = vmul.f32 %v429, %v435
        %v469 = vld [vmem:[#allocation11] sm:$0x1]
        %v471 = vlaneseq
        %v472 = vshrl.u32 %v471, 7
        %v473 = vsub.s32 0, %v472
        %v474 = vrot.slane %v469, %v473
        %v476 = vadd.f32 %v437, %v474
        %v477 = vadd.f32 %v438, %v474
        %v478 = vadd.f32 %v439, %v474
        %v479 = vadd.f32 %v440, %v474
        %v480 = vadd.f32 %v441, %v474
        %v481 = vadd.f32 %v442, %v474
        %v482 = vadd.f32 %v443, %v474
        %v483 = vadd.f32 %v444, %v474
        %v484 = vadd.f32 %v445, %v474
        %v485 = vadd.f32 %v446, %v474
        %v486 = vadd.f32 %v447, %v474
        %v487 = vadd.f32 %v448, %v474
        %v488 = vadd.f32 %v449, %v474
        %v489 = vadd.f32 %v450, %v474
        %v490 = vadd.f32 %v451, %v474
        %v491 = vadd.f32 %v452, %v474
        %v492 = vadd.f32 %v453, %v474
        %v493 = vadd.f32 %v454, %v474
        %v494 = vadd.f32 %v455, %v474
        %v495 = vadd.f32 %v456, %v474
        %v496 = vadd.f32 %v457, %v474
        %v497 = vadd.f32 %v458, %v474
        %v498 = vadd.f32 %v459, %v474
        %v499 = vadd.f32 %v460, %v474
        %v500 = vadd.f32 %v461, %v474
        %v501 = vadd.f32 %v462, %v474
        %v502 = vadd.f32 %v463, %v474
        %v503 = vadd.f32 %v464, %v474
        %v504 = vadd.f32 %v465, %v474
        %v505 = vadd.f32 %v466, %v474
        %v506 = vadd.f32 %v467, %v474
        %v507 = vadd.f32 %v468, %v474
        %v508 = vmax.f32 %v476, 0.0
        %v509 = vmax.f32 %v477, 0.0
        %v510 = vmax.f32 %v478, 0.0
        %v511 = vmax.f32 %v479, 0.0
        %v512 = vmax.f32 %v480, 0.0
        %v513 = vmax.f32 %v481, 0.0
        %v514 = vmax.f32 %v482, 0.0
        %v515 = vmax.f32 %v483, 0.0
        %v516 = vmax.f32 %v484, 0.0
        %v517 = vmax.f32 %v485, 0.0
        %v518 = vmax.f32 %v486, 0.0
        %v519 = vmax.f32 %v487, 0.0
        %v520 = vmax.f32 %v488, 0.0
        %v521 = vmax.f32 %v489, 0.0
        %v522 = vmax.f32 %v490, 0.0
        %v523 = vmax.f32 %v491, 0.0
        %v524 = vmax.f32 %v492, 0.0
        %v525 = vmax.f32 %v493, 0.0
        %v526 = vmax.f32 %v494, 0.0
        %v527 = vmax.f32 %v495, 0.0
        %v528 = vmax.f32 %v496, 0.0
        %v529 = vmax.f32 %v497, 0.0
        %v530 = vmax.f32 %v498, 0.0
        %v531 = vmax.f32 %v499, 0.0
        %v532 = vmax.f32 %v500, 0.0
        %v533 = vmax.f32 %v501, 0.0
        %v534 = vmax.f32 %v502, 0.0
        %v535 = vmax.f32 %v503, 0.0
        %v536 = vmax.f32 %v504, 0.0
        %v537 = vmax.f32 %v505, 0.0
        %v538 = vmax.f32 %v506, 0.0
        %v539 = vmax.f32 %v507, 0.0
        %v540 = vld [vmem:[%s312] sm:$0xf]
        %v541 = vld [vmem:[%s312 + $0x4] sm:$0xf]
        %v542 = vld [vmem:[%s312 + $0x8] sm:$0xf]
        %v543 = vld [vmem:[%s312 + $0xc] sm:$0xf]
        %v544 = vld [vmem:[%s312 + $0x10] sm:$0xf]
        %v545 = vld [vmem:[%s312 + $0x14] sm:$0xf]
        %v546 = vld [vmem:[%s312 + $0x18] sm:$0xf]
        %v547 = vld [vmem:[%s312 + $0x1c] sm:$0xf]
        %v548 = vld [vmem:[%s312 + $0x20] sm:$0xf]
        %v549 = vld [vmem:[%s312 + $0x24] sm:$0xf]
        %v550 = vld [vmem:[%s312 + $0x28] sm:$0xf]
        %v551 = vld [vmem:[%s312 + $0x2c] sm:$0xf]
        %v552 = vld [vmem:[%s312 + $0x30] sm:$0xf]
        %v553 = vld [vmem:[%s312 + $0x34] sm:$0xf]
        %v554 = vld [vmem:[%s312 + $0x38] sm:$0xf]
        %v555 = vld [vmem:[%s312 + $0x3c] sm:$0xf]
        %v556 = vld [vmem:[%s312 + $0x40] sm:$0xf]
        %v557 = vld [vmem:[%s312 + $0x44] sm:$0xf]
        %v558 = vld [vmem:[%s312 + $0x48] sm:$0xf]
        %v559 = vld [vmem:[%s312 + $0x4c] sm:$0xf]
        %v560 = vld [vmem:[%s312 + $0x50] sm:$0xf]
        %v561 = vld [vmem:[%s312 + $0x54] sm:$0xf]
        %v562 = vld [vmem:[%s312 + $0x58] sm:$0xf]
        %v563 = vld [vmem:[%s312 + $0x5c] sm:$0xf]
        %v564 = vld [vmem:[%s312 + $0x60] sm:$0xf]
        %v565 = vld [vmem:[%s312 + $0x64] sm:$0xf]
        %v566 = vld [vmem:[%s312 + $0x68] sm:$0xf]
        %v567 = vld [vmem:[%s312 + $0x6c] sm:$0xf]
        %v568 = vld [vmem:[%s312 + $0x70] sm:$0xf]
        %v569 = vld [vmem:[%s312 + $0x74] sm:$0xf]
        %v570 = vld [vmem:[%s312 + $0x78] sm:$0xf]
        %v571 = vld [vmem:[%s312 + $0x7c] sm:$0xf]
        %v572 = vld [vmem:[#allocation7] sm:$0xf]
        %v573 = vld [vmem:[#allocation7 + $0x4] sm:$0xf]
        %v574 = vld [vmem:[#allocation7 + $0x8] sm:$0xf]
        %v575 = vld [vmem:[#allocation7 + $0xc] sm:$0xf]
        %v576 = vld [vmem:[#allocation7 + $0x10] sm:$0xf]
        %v577 = vld [vmem:[#allocation7 + $0x14] sm:$0xf]
        %v578 = vld [vmem:[#allocation7 + $0x18] sm:$0xf]
        %v579 = vld [vmem:[#allocation7 + $0x1c] sm:$0xf]
        %v580 = vld [vmem:[#allocation7 + $0x20] sm:$0xf]
        %v581 = vld [vmem:[#allocation7 + $0x24] sm:$0xf]
        %v582 = vld [vmem:[#allocation7 + $0x28] sm:$0xf]
        %v583 = vld [vmem:[#allocation7 + $0x2c] sm:$0xf]
        %v584 = vld [vmem:[#allocation7 + $0x30] sm:$0xf]
        %v585 = vld [vmem:[#allocation7 + $0x34] sm:$0xf]
        %v586 = vld [vmem:[#allocation7 + $0x38] sm:$0xf]
        %v587 = vld [vmem:[#allocation7 + $0x3c] sm:$0xf]
        %v588 = vld [vmem:[#allocation8] sm:$0x1]
        %v590 = vlaneseq
        %v591 = vshrl.u32 %v590, 7
        %v592 = vsub.s32 0, %v591
        %v593 = vrot.slane %v588, %v592
        %v627 = vunpack.c.l.b16 %v540
        %v628 = vunpack.c.l.b16 %v541
        %v629 = vunpack.c.l.b16 %v542
        %v630 = vunpack.c.l.b16 %v543
        %v631 = vunpack.c.l.b16 %v544
        %v632 = vunpack.c.l.b16 %v545
        %v633 = vunpack.c.l.b16 %v546
        %v634 = vunpack.c.l.b16 %v547
        %v635 = vunpack.c.l.b16 %v548
        %v636 = vunpack.c.l.b16 %v549
        %v637 = vunpack.c.l.b16 %v550
        %v638 = vunpack.c.l.b16 %v551
        %v639 = vunpack.c.l.b16 %v552
        %v640 = vunpack.c.l.b16 %v553
        %v641 = vunpack.c.l.b16 %v554
        %v642 = vunpack.c.l.b16 %v555
        %v643 = vunpack.c.l.b16 %v556
        %v644 = vunpack.c.l.b16 %v557
        %v645 = vunpack.c.l.b16 %v558
        %v646 = vunpack.c.l.b16 %v559
        %v647 = vunpack.c.l.b16 %v560
        %v648 = vunpack.c.l.b16 %v561
        %v649 = vunpack.c.l.b16 %v562
        %v650 = vunpack.c.l.b16 %v563
        %v651 = vunpack.c.l.b16 %v564
        %v652 = vunpack.c.l.b16 %v565
        %v653 = vunpack.c.l.b16 %v566
        %v654 = vunpack.c.l.b16 %v567
        %v655 = vunpack.c.l.b16 %v568
        %v656 = vunpack.c.l.b16 %v569
        %v657 = vunpack.c.l.b16 %v570
        %v658 = vunpack.c.l.b16 %v571
        %v659 = vpack.c.b16 %v628, %v627
        %v660 = vpack.c.b16 %v630, %v629
        %v661 = vpack.c.b16 %v632, %v631
        %v662 = vpack.c.b16 %v634, %v633
        %v663 = vpack.c.b16 %v636, %v635
        %v664 = vpack.c.b16 %v638, %v637
        %v665 = vpack.c.b16 %v640, %v639
        %v666 = vpack.c.b16 %v642, %v641
        %v667 = vpack.c.b16 %v644, %v643
        %v668 = vpack.c.b16 %v646, %v645
        %v669 = vpack.c.b16 %v648, %v647
        %v670 = vpack.c.b16 %v650, %v649
        %v671 = vpack.c.b16 %v652, %v651
        %v672 = vpack.c.b16 %v654, %v653
        %v673 = vpack.c.b16 %v656, %v655
        %v674 = vpack.c.b16 %v658, %v657
        %v707 = vunpack.c.l.b16 %v572
        %v708 = vunpack.c.l.b16 %v573
        %v709 = vunpack.c.l.b16 %v574
        %v710 = vunpack.c.l.b16 %v575
        %v711 = vunpack.c.l.b16 %v576
        %v712 = vunpack.c.l.b16 %v577
        %v713 = vunpack.c.l.b16 %v578
        %v714 = vunpack.c.l.b16 %v579
        %v715 = vunpack.c.l.b16 %v580
        %v716 = vunpack.c.l.b16 %v581
        %v717 = vunpack.c.l.b16 %v582
        %v718 = vunpack.c.l.b16 %v583
        %v719 = vunpack.c.l.b16 %v584
        %v720 = vunpack.c.l.b16 %v585
        %v721 = vunpack.c.l.b16 %v586
        %v722 = vunpack.c.l.b16 %v587
        %v723 = vpack.c.b16 %v708, %v707
        %v724 = vpack.c.b16 %v710, %v709
        %v725 = vpack.c.b16 %v712, %v711
        %v726 = vpack.c.b16 %v714, %v713
        %v727 = vpack.c.b16 %v716, %v715
        %v728 = vpack.c.b16 %v718, %v717
        %v729 = vpack.c.b16 %v720, %v719
        %v730 = vpack.c.b16 %v722, %v721
        %739 = vmatprep.subr.bf16.mxu0 0
        %740 = vmatpush1.bf16.msra.mxu0 %v723
        %741 = vmatprep.subr.bf16.mxu0 0
        %742 = vmatpush1.bf16.msra.mxu0 %v724
        %743 = vmatprep.subr.bf16.mxu0 0
        %744 = vmatpush1.bf16.msra.mxu0 %v725
        %745 = vmatprep.subr.bf16.mxu0 0
        %746 = vmatpush1.bf16.msra.mxu0 %v726
        %747 = vmatprep.subr.bf16.mxu0 0
        %748 = vmatpush1.bf16.msra.mxu0 %v727
        %749 = vmatprep.subr.bf16.mxu0 0
        %750 = vmatpush1.bf16.msra.mxu0 %v728
        %751 = vmatprep.subr.bf16.mxu0 0
        %752 = vmatpush1.bf16.msra.mxu0 %v729
        %753 = vmatprep.subr.bf16.mxu0 0
        %754 = vmatpush1.bf16.msra.mxu0 %v730
        %755 = vmatprep.subr.bf16.mxu0 0
        %756 = vmatpush1.bf16.msra.mxu0 0
        %757 = vmatprep.subr.bf16.mxu0 0
        %758 = vmatpush1.bf16.msra.mxu0 0
        %759 = vmatprep.subr.bf16.mxu0 0
        %760 = vmatpush1.bf16.msra.mxu0 0
        %761 = vmatprep.subr.bf16.mxu0 0
        %762 = vmatpush1.bf16.msra.mxu0 0
        %763 = vmatprep.subr.bf16.mxu0 0
        %764 = vmatpush1.bf16.msra.mxu0 0
        %765 = vmatprep.subr.bf16.mxu0 0
        %766 = vmatpush1.bf16.msra.mxu0 0
        %767 = vmatprep.subr.bf16.mxu0 0
        %768 = vmatpush1.bf16.msra.mxu0 0
        %769 = vmatprep.subr.bf16.mxu0 0
        %770 = vmatpush1.bf16.msra.mxu0 0
        %771 = vmatprep.mubr.bf16.mxu0 0
        %772 = vmatmul.mubr.bf16.gmra.mrb[0].mxu0 %v659
        %v773 = vpop.f32.mrb[0].mxu0
        %v774 = vadd.f32 %v593, %v773
        %v775 = vpop.f32.mrb[0].mxu0
        %v776 = vpop.f32.mrb[0].mxu0
        %v777 = vadd.f32 %v593, %v776
        %v778 = vpop.f32.mrb[0].mxu0
        %779 = vmatprep.mubr.bf16.mxu0 0
        %780 = vmatmul.mubr.bf16.gmra.mrb[0].mxu0 %v660
        %v781 = vpop.f32.mrb[0].mxu0
        %v782 = vadd.f32 %v593, %v781
        %v783 = vpop.f32.mrb[0].mxu0
        %v784 = vpop.f32.mrb[0].mxu0
        %v785 = vadd.f32 %v593, %v784
        %v786 = vpop.f32.mrb[0].mxu0
        %787 = vmatprep.mubr.bf16.mxu0 0
        %788 = vmatmul.mubr.bf16.gmra.mrb[0].mxu0 %v661
        %v789 = vpop.f32.mrb[0].mxu0
        %v790 = vadd.f32 %v593, %v789
        %v791 = vpop.f32.mrb[0].mxu0
        %v792 = vpop.f32.mrb[0].mxu0
        %v793 = vadd.f32 %v593, %v792
        %v794 = vpop.f32.mrb[0].mxu0
        %795 = vmatprep.mubr.bf16.mxu0 0
        %796 = vmatmul.mubr.bf16.gmra.mrb[0].mxu0 %v662
        %v797 = vpop.f32.mrb[0].mxu0
        %v798 = vadd.f32 %v593, %v797
        %v799 = vpop.f32.mrb[0].mxu0
        %v800 = vpop.f32.mrb[0].mxu0
        %v801 = vadd.f32 %v593, %v800
        %v802 = vpop.f32.mrb[0].mxu0
        %803 = vmatprep.mubr.bf16.mxu0 0
        %804 = vmatmul.mubr.bf16.gmra.mrb[0].mxu0 %v663
        %v805 = vpop.f32.mrb[0].mxu0
        %v806 = vadd.f32 %v593, %v805
        %v807 = vpop.f32.mrb[0].mxu0
        %v808 = vpop.f32.mrb[0].mxu0
        %v809 = vadd.f32 %v593, %v808
        %v810 = vpop.f32.mrb[0].mxu0
        %811 = vmatprep.mubr.bf16.mxu0 0
        %812 = vmatmul.mubr.bf16.gmra.mrb[0].mxu0 %v664
        %v813 = vpop.f32.mrb[0].mxu0
        %v814 = vadd.f32 %v593, %v813
        %v815 = vpop.f32.mrb[0].mxu0
        %v816 = vpop.f32.mrb[0].mxu0
        %v817 = vadd.f32 %v593, %v816
        %v818 = vpop.f32.mrb[0].mxu0
        %819 = vmatprep.mubr.bf16.mxu0 0
        %820 = vmatmul.mubr.bf16.gmra.mrb[0].mxu0 %v665
        %v821 = vpop.f32.mrb[0].mxu0
        %v822 = vadd.f32 %v593, %v821
        %v823 = vpop.f32.mrb[0].mxu0
        %v824 = vpop.f32.mrb[0].mxu0
        %v825 = vadd.f32 %v593, %v824
        %v826 = vpop.f32.mrb[0].mxu0
        %827 = vmatprep.mubr.bf16.mxu0 0
        %828 = vmatmul.mubr.bf16.gmra.mrb[0].mxu0 %v666
        %v829 = vpop.f32.mrb[0].mxu0
        %v830 = vadd.f32 %v593, %v829
        %v831 = vpop.f32.mrb[0].mxu0
        %v832 = vpop.f32.mrb[0].mxu0
        %v833 = vadd.f32 %v593, %v832
        %v834 = vpop.f32.mrb[0].mxu0
        %835 = vmatprep.mubr.bf16.mxu0 0
        %836 = vmatmul.mubr.bf16.gmra.mrb[0].mxu0 %v667
        %v837 = vpop.f32.mrb[0].mxu0
        %v838 = vadd.f32 %v593, %v837
        %v839 = vpop.f32.mrb[0].mxu0
        %v840 = vpop.f32.mrb[0].mxu0
        %v841 = vadd.f32 %v593, %v840
        %v842 = vpop.f32.mrb[0].mxu0
        %843 = vmatprep.mubr.bf16.mxu0 0
        %844 = vmatmul.mubr.bf16.gmra.mrb[0].mxu0 %v668
        %v845 = vpop.f32.mrb[0].mxu0
        %v846 = vadd.f32 %v593, %v845
        %v847 = vpop.f32.mrb[0].mxu0
        %v848 = vpop.f32.mrb[0].mxu0
        %v849 = vadd.f32 %v593, %v848
        %v850 = vpop.f32.mrb[0].mxu0
        %851 = vmatprep.mubr.bf16.mxu0 0
        %852 = vmatmul.mubr.bf16.gmra.mrb[0].mxu0 %v669
        %v853 = vpop.f32.mrb[0].mxu0
        %v854 = vadd.f32 %v593, %v853
        %v855 = vpop.f32.mrb[0].mxu0
        %v856 = vpop.f32.mrb[0].mxu0
        %v857 = vadd.f32 %v593, %v856
        %v858 = vpop.f32.mrb[0].mxu0
        %859 = vmatprep.mubr.bf16.mxu0 0
        %860 = vmatmul.mubr.bf16.gmra.mrb[0].mxu0 %v670
        %v861 = vpop.f32.mrb[0].mxu0
        %v862 = vadd.f32 %v593, %v861
        %v863 = vpop.f32.mrb[0].mxu0
        %v864 = vpop.f32.mrb[0].mxu0
        %v865 = vadd.f32 %v593, %v864
        %v866 = vpop.f32.mrb[0].mxu0
        %867 = vmatprep.mubr.bf16.mxu0 0
        %868 = vmatmul.mubr.bf16.gmra.mrb[0].mxu0 %v671
        %v869 = vpop.f32.mrb[0].mxu0
        %v870 = vadd.f32 %v593, %v869
        %v871 = vpop.f32.mrb[0].mxu0
        %v872 = vpop.f32.mrb[0].mxu0
        %v873 = vadd.f32 %v593, %v872
        %v874 = vpop.f32.mrb[0].mxu0
        %875 = vmatprep.mubr.bf16.mxu0 0
        %876 = vmatmul.mubr.bf16.gmra.mrb[0].mxu0 %v672
        %v877 = vpop.f32.mrb[0].mxu0
        %v878 = vadd.f32 %v593, %v877
        %v879 = vpop.f32.mrb[0].mxu0
        %v880 = vpop.f32.mrb[0].mxu0
        %v881 = vadd.f32 %v593, %v880
        %v882 = vpop.f32.mrb[0].mxu0
        %883 = vmatprep.mubr.bf16.mxu0 0
        %884 = vmatmul.mubr.bf16.gmra.mrb[0].mxu0 %v673
        %v885 = vpop.f32.mrb[0].mxu0
        %v886 = vadd.f32 %v593, %v885
        %v887 = vpop.f32.mrb[0].mxu0
        %v888 = vpop.f32.mrb[0].mxu0
        %v889 = vadd.f32 %v593, %v888
        %v890 = vpop.f32.mrb[0].mxu0
        %891 = vmatprep.mubr.bf16.mxu0 0
        %892 = vmatmul.mubr.bf16.gmra.mrb[0].mxu0 %v674
        %v893 = vpop.f32.mrb[0].mxu0
        %v894 = vadd.f32 %v593, %v893
        %v895 = vpop.f32.mrb[0].mxu0
        %v896 = vpop.f32.mrb[0].mxu0
        %v897 = vadd.f32 %v593, %v896
        %v898 = vpop.f32.mrb[0].mxu0
        %899 = vdwg.mxu0
        %v900 = vadd.f32 %v508, %v774
        %v901 = vadd.f32 %v509, %v777
        %v902 = vadd.f32 %v510, %v782
        %v903 = vadd.f32 %v511, %v785
        %v904 = vadd.f32 %v512, %v790
        %v905 = vadd.f32 %v513, %v793
        %v906 = vadd.f32 %v514, %v798
        %v907 = vadd.f32 %v515, %v801
        %v908 = vadd.f32 %v516, %v806
        %v909 = vadd.f32 %v517, %v809
        %v910 = vadd.f32 %v518, %v814
        %v911 = vadd.f32 %v519, %v817
        %v912 = vadd.f32 %v520, %v822
        %v913 = vadd.f32 %v521, %v825
        %v914 = vadd.f32 %v522, %v830
        %v915 = vadd.f32 %v523, %v833
        %v916 = vadd.f32 %v524, %v838
        %v917 = vadd.f32 %v525, %v841
        %v918 = vadd.f32 %v526, %v846
        %v919 = vadd.f32 %v527, %v849
        %v920 = vadd.f32 %v528, %v854
        %v921 = vadd.f32 %v529, %v857
        %v922 = vadd.f32 %v530, %v862
        %v923 = vadd.f32 %v531, %v865
        %v924 = vadd.f32 %v532, %v870
        %v925 = vadd.f32 %v533, %v873
        %v926 = vadd.f32 %v534, %v878
        %v927 = vadd.f32 %v535, %v881
        %v928 = vadd.f32 %v536, %v886
        %v929 = vadd.f32 %v537, %v889
        %v930 = vadd.f32 %v538, %v894
        %v931 = vadd.f32 %v539, %v897
        %v932 = vmax.f32 %v900, 0.0
        %v933 = vmax.f32 %v901, 0.0
        %v934 = vmax.f32 %v902, 0.0
        %v935 = vmax.f32 %v903, 0.0
        %v936 = vmax.f32 %v904, 0.0
        %v937 = vmax.f32 %v905, 0.0
        %v938 = vmax.f32 %v906, 0.0
        %v939 = vmax.f32 %v907, 0.0
        %v940 = vmax.f32 %v908, 0.0
        %v941 = vmax.f32 %v909, 0.0
        %v942 = vmax.f32 %v910, 0.0
        %v943 = vmax.f32 %v911, 0.0
        %v944 = vmax.f32 %v912, 0.0
        %v945 = vmax.f32 %v913, 0.0
        %v946 = vmax.f32 %v914, 0.0
        %v947 = vmax.f32 %v915, 0.0
        %v948 = vmax.f32 %v916, 0.0
        %v949 = vmax.f32 %v917, 0.0
        %v950 = vmax.f32 %v918, 0.0
        %v951 = vmax.f32 %v919, 0.0
        %v952 = vmax.f32 %v920, 0.0
        %v953 = vmax.f32 %v921, 0.0
        %v954 = vmax.f32 %v922, 0.0
        %v955 = vmax.f32 %v923, 0.0
        %v956 = vmax.f32 %v924, 0.0
        %v957 = vmax.f32 %v925, 0.0
        %v958 = vmax.f32 %v926, 0.0
        %v959 = vmax.f32 %v927, 0.0
        %v960 = vmax.f32 %v928, 0.0
        %v961 = vmax.f32 %v929, 0.0
        %v962 = vmax.f32 %v930, 0.0
        %v963 = vmax.f32 %v931, 0.0
        %v964 = vpack.c.bf16 %v933, %v932
        %v965 = vpack.c.bf16 %v935, %v934
        %v966 = vpack.c.bf16 %v937, %v936
        %v967 = vpack.c.bf16 %v939, %v938
        %v968 = vpack.c.bf16 %v941, %v940
        %v969 = vpack.c.bf16 %v943, %v942
        %v970 = vpack.c.bf16 %v945, %v944
        %v971 = vpack.c.bf16 %v947, %v946
        %v972 = vpack.c.bf16 %v949, %v948
        %v973 = vpack.c.bf16 %v951, %v950
        %v974 = vpack.c.bf16 %v953, %v952
        %v975 = vpack.c.bf16 %v955, %v954
        %v976 = vpack.c.bf16 %v957, %v956
        %v977 = vpack.c.bf16 %v959, %v958
        %v978 = vpack.c.bf16 %v961, %v960
        %v979 = vpack.c.bf16 %v963, %v962
        %v996 = vunpack.c.l.b16 %v964
        %v997 = vunpack.c.h.b16 %v964
        %v998 = vunpack.c.l.b16 %v965
        %v999 = vunpack.c.h.b16 %v965
        %v1000 = vunpack.c.l.b16 %v966
        %v1001 = vunpack.c.h.b16 %v966
        %v1002 = vunpack.c.l.b16 %v967
        %v1003 = vunpack.c.h.b16 %v967
        %v1004 = vunpack.c.l.b16 %v968
        %v1005 = vunpack.c.h.b16 %v968
        %v1006 = vunpack.c.l.b16 %v969
        %v1007 = vunpack.c.h.b16 %v969
        %v1008 = vunpack.c.l.b16 %v970
        %v1009 = vunpack.c.h.b16 %v970
        %v1010 = vunpack.c.l.b16 %v971
        %v1011 = vunpack.c.h.b16 %v971
        %v1012 = vunpack.c.l.b16 %v972
        %v1013 = vunpack.c.h.b16 %v972
        %v1014 = vunpack.c.l.b16 %v973
        %v1015 = vunpack.c.h.b16 %v973
        %v1016 = vunpack.c.l.b16 %v974
        %v1017 = vunpack.c.h.b16 %v974
        %v1018 = vunpack.c.l.b16 %v975
        %v1019 = vunpack.c.h.b16 %v975
        %v1020 = vunpack.c.l.b16 %v976
        %v1021 = vunpack.c.h.b16 %v976
        %v1022 = vunpack.c.l.b16 %v977
        %v1023 = vunpack.c.h.b16 %v977
        %v1024 = vunpack.c.l.b16 %v978
        %v1025 = vunpack.c.h.b16 %v978
        %v1026 = vunpack.c.l.b16 %v979
        %v1027 = vunpack.c.h.b16 %v979
        %v1028 = vpack.c.b16 %v996, %v996
        %v1029 = vpack.c.b16 %v997, %v997
        %v1030 = vpack.c.b16 %v998, %v998
        %v1031 = vpack.c.b16 %v999, %v999
        %v1032 = vpack.c.b16 %v1000, %v1000
        %v1033 = vpack.c.b16 %v1001, %v1001
        %v1034 = vpack.c.b16 %v1002, %v1002
        %v1035 = vpack.c.b16 %v1003, %v1003
        %v1036 = vpack.c.b16 %v1004, %v1004
        %v1037 = vpack.c.b16 %v1005, %v1005
        %v1038 = vpack.c.b16 %v1006, %v1006
        %v1039 = vpack.c.b16 %v1007, %v1007
        %v1040 = vpack.c.b16 %v1008, %v1008
        %v1041 = vpack.c.b16 %v1009, %v1009
        %v1042 = vpack.c.b16 %v1010, %v1010
        %v1043 = vpack.c.b16 %v1011, %v1011
        %v1044 = vpack.c.b16 %v1012, %v1012
        %v1045 = vpack.c.b16 %v1013, %v1013
        %v1046 = vpack.c.b16 %v1014, %v1014
        %v1047 = vpack.c.b16 %v1015, %v1015
        %v1048 = vpack.c.b16 %v1016, %v1016
        %v1049 = vpack.c.b16 %v1017, %v1017
        %v1050 = vpack.c.b16 %v1018, %v1018
        %v1051 = vpack.c.b16 %v1019, %v1019
        %v1052 = vpack.c.b16 %v1020, %v1020
        %v1053 = vpack.c.b16 %v1021, %v1021
        %v1054 = vpack.c.b16 %v1022, %v1022
        %v1055 = vpack.c.b16 %v1023, %v1023
        %v1056 = vpack.c.b16 %v1024, %v1024
        %v1057 = vpack.c.b16 %v1025, %v1025
        %v1058 = vpack.c.b16 %v1026, %v1026
        %v1059 = vpack.c.b16 %v1027, %v1027
        %1092 = vst [vmem:[%s361] sm:$0xf] %v1028
        %1093 = vst [vmem:[%s361 + $0x4] sm:$0xf] %v1029
        %1094 = vst [vmem:[%s361 + $0x8] sm:$0xf] %v1030
        %1095 = vst [vmem:[%s361 + $0xc] sm:$0xf] %v1031
        %1096 = vst [vmem:[%s361 + $0x10] sm:$0xf] %v1032
        %1097 = vst [vmem:[%s361 + $0x14] sm:$0xf] %v1033
        %1098 = vst [vmem:[%s361 + $0x18] sm:$0xf] %v1034
        %1099 = vst [vmem:[%s361 + $0x1c] sm:$0xf] %v1035
        %1100 = vst [vmem:[%s361 + $0x20] sm:$0xf] %v1036
        %1101 = vst [vmem:[%s361 + $0x24] sm:$0xf] %v1037
        %1102 = vst [vmem:[%s361 + $0x28] sm:$0xf] %v1038
        %1103 = vst [vmem:[%s361 + $0x2c] sm:$0xf] %v1039
        %1104 = vst [vmem:[%s361 + $0x30] sm:$0xf] %v1040
        %1105 = vst [vmem:[%s361 + $0x34] sm:$0xf] %v1041
        %1106 = vst [vmem:[%s361 + $0x38] sm:$0xf] %v1042
        %1107 = vst [vmem:[%s361 + $0x3c] sm:$0xf] %v1043
        %1108 = vst [vmem:[%s361 + $0x40] sm:$0xf] %v1044
        %1109 = vst [vmem:[%s361 + $0x44] sm:$0xf] %v1045
        %1110 = vst [vmem:[%s361 + $0x48] sm:$0xf] %v1046
        %1111 = vst [vmem:[%s361 + $0x4c] sm:$0xf] %v1047
        %1112 = vst [vmem:[%s361 + $0x50] sm:$0xf] %v1048
        %1113 = vst [vmem:[%s361 + $0x54] sm:$0xf] %v1049
        %1114 = vst [vmem:[%s361 + $0x58] sm:$0xf] %v1050
        %1115 = vst [vmem:[%s361 + $0x5c] sm:$0xf] %v1051
        %1116 = vst [vmem:[%s361 + $0x60] sm:$0xf] %v1052
        %1117 = vst [vmem:[%s361 + $0x64] sm:$0xf] %v1053
        %1118 = vst [vmem:[%s361 + $0x68] sm:$0xf] %v1054
        %1119 = vst [vmem:[%s361 + $0x6c] sm:$0xf] %v1055
        %1120 = vst [vmem:[%s361 + $0x70] sm:$0xf] %v1056
        %1121 = vst [vmem:[%s361 + $0x74] sm:$0xf] %v1057
        %1122 = vst [vmem:[%s361 + $0x78] sm:$0xf] %v1058
        %1123 = vst [vmem:[%s361 + $0x7c] sm:$0xf] %v1059
        %s1124 = sand.u32 %s172, 1
        %s1125 = scalar_lea.sflag [#allocation4], %s1124
        %s1126 = sand.u32 %s172, 1
        %s1127 = smul.addr %s1126, 128
        %s1128 = scalar_lea.vmem [#allocation13], %s1127
        // Predicated region
        $region69: #{residual_block_forward.7} parent=43 // pred_check
          %p1129 = pneg %p182
        $region70: #{residual_block_forward.7} parent=43 // pred_check_branch
          %1131 = sbr.rel (%p1129) target = $region72
        $region71: #{residual_block_forward.7} parent=43 // pred_region
          %s1132 = smul.u32 32, %s28
          %s1134 = ssub.s32 2048, 2048
          %1135 = vsyncadd %s1125, %s1134
          %s1136 = smul.addr %s1132, 64
          %s1137 = scalar_lea.hbm %s6, %s1136
          %s1138 = sshll.u32 %s1128, 4
          %s1139 = int_to_ptr.vmem [resolvable:$true] %s1138
          %1144 = dma.vmem_to_hbm [thread:$0]  %s1139, 2048, %s1137, %s1125, 64, 64, 4
        $region72: #{residual_block_forward.7} parent=43 // pred_fallthru
          _
      $region44: #{residual_block_forward.7} parent=5 // pred_fallthru
        _
      %p1145 = scmp.le.s32.totalorder 2, %s23
      // Predicated region
      $region73: #{residual_block_forward.7} parent=5 // pred_check
        %p1146 = pneg %p1145
      $region74: #{residual_block_forward.7} parent=5 // pred_check_branch
        %1148 = sbr.rel (%p1146) target = $region76
      $region75: #{residual_block_forward.7} parent=5 // pred_region
        %s1149 = ssub.s32 %s23, 2
        // Predicated region
        $region77: #{residual_block_forward.7} parent=75 // pred_check
          %p1150 = pneg %p188
        $region78: #{residual_block_forward.7} parent=75 // pred_check_branch
          %1152 = sbr.rel (%p1150) target = $region80
        $region79: #{residual_block_forward.7} parent=75 // pred_region
          %s1153 = sand.u32 %s173, 1
          %s1154 = scalar_lea.sflag [#allocation4], %s1153
          %s1155 = sand.u32 %s173, 1
          %s1156 = smul.addr %s1155, 128
          %s1157 = scalar_lea.vmem [#allocation13], %s1156
          %1158 = dma.done %s1154, 2048
        $region80: #{residual_block_forward.7} parent=75 // pred_fallthru
          _
      $region76: #{residual_block_forward.7} parent=5 // pred_fallthru
        _
    $region6: #{residual_block_forward.7} parent=1 // loop_footer
      %s27 = sadd.s32 1, %s23
    $region7: #{residual_block_forward.7} parent=1 // loop_footer_branch
      %22 = sbr.rel target = $region3
    $region8: #{residual_block_forward.7} parent=1 // loop_exit
      _
    %1159 = vsyncpa [#allocation3], 1
    %s1160 = scalar_lea.sflag [#allocation3], 1
    %1161 = vsyncpa %s1160, 1
    %1162 = vsyncpa [#allocation6], 1
    %s1163 = scalar_lea.sflag [#allocation6], 1
    %1164 = vsyncpa %s1163, 1
    %1165 = vsyncpa [#allocation9], 1
    %1166 = vsyncpa [#allocation12], 1
    %1167 = vsyncpa [#allocation4], 1
    %s1168 = scalar_lea.sflag [#allocation4], 1
    %1169 = vsyncpa %s1168, 1

// kernel: residual_block_forward.6
$region0: #{residual_block_forward.6}
  #allocation0 [shape = 'u32[]', space=smem, size = 0x4, offset = 0x4, fixed_abs, tag = 'smem constant byte address 0x4 - core index']
  #allocation1 [shape = 'u32[144,128]{1,0:T(1,128)}', space=vmem, size = 0x12000, scoped, tag = 'internal scratch']
  %s0 = inlined_call_operand.hbm [shape: bf16[2,18,18,128], index: 0, kind: input, shape index: {}]
  %s1 = inlined_call_operand.hbm [shape: bf16[1152,128], index: 1, kind: input, shape index: {}]
  %s2 = inlined_call_operand.hbm [shape: bf16[2,256,128], index: 2, kind: output, shape index: {0}]
  %s3 = inlined_call_operand.hbm [shape: f32[2,1,2,128], index: 3, kind: output, shape index: {1}]
  %4 = xla_tuple %s2, %s3
  %s5 = sld [smem:[#allocation0]]
  $region57: #{residual_block_forward.6} parent=0
    _
  %s7 = ssub.s32 1, %s5
  %s8 = scalar_select 0, %s7, %s5
  $region1: #{residual_block_forward.6} parent=0
    #allocation2 [shape = 'u8[221184]{0}', space=vmem, size = 0x36000, scoped, tag = 'input window, operand 0']
    #allocation3 [shape = 's32[2]{0}', space=sflag, size = 0x8, scoped, tag = 'scoped memory for residual_block_forward.6']
    #allocation4 [shape = 's32[2]{0}', space=sflag, size = 0x8, scoped, tag = 'scoped memory for residual_block_forward.6']
    #allocation5 [shape = 'u8[294912]{0}', space=vmem, size = 0x48000, scoped, tag = 'input window, operand 1, single buffered']
    #allocation6 [shape = 's32[1]{0}', space=sflag, size = 0x4, scoped, tag = 'scoped memory for residual_block_forward.6']
    #allocation7 [shape = 'u8[131072]{0}', space=vmem, size = 0x20000, scoped, tag = 'output window, operand 0']
    #allocation8 [shape = 'u8[2048]{0}', space=vmem, size = 0x800, scoped, tag = 'output window, operand 1']
    #allocation9 [shape = 's32[2]{0}', space=sflag, size = 0x8, scoped, tag = 'scoped memory for residual_block_forward.6']
    %9 = vsyncpa [#allocation3], 0
    %s10 = scalar_lea.sflag [#allocation3], 1
    %11 = vsyncpa %s10, 0
    %12 = vsyncpa [#allocation6], 0
    %13 = vsyncpa [#allocation4], 0
    %s14 = scalar_lea.sflag [#allocation4], 1
    %15 = vsyncpa %s14, 0
    %16 = vsyncpa [#allocation9], 0
    %s17 = scalar_lea.sflag [#allocation9], 1
    %18 = vsyncpa %s17, 0
    loop: start=0, step=1, limit=4
    $region2: #{residual_block_forward.6} parent=1 // loop_pre_header
      _
    $region3: #{residual_block_forward.6} parent=1 // loop_header
      %s20 = sphi 0, %s24
      %p21 = scmp.ge.s32.totalorder %s20, 4
      %s27 = sphi 0, %s39
      %s28 = sphi 0, %s35
      %s29 = sphi 0, %s27
      %s30 = sphi 0, %s28
      %s31 = sphi 0, %s29
      %s32 = sphi 0, %s30
      %s42 = sphi 0, %s44
      %s45 = sphi 0, %s42
      %s46 = sphi 0, %s45
      %s62 = sphi 0, %s46
      %s66 = sphi 0, %s66
      %s68 = sphi 0, %s66
      %s69 = sphi 0, %s68
      %s83 = sphi 0, %s69
      %s91 = sphi 0, %s93
      %s94 = sphi 0, %s91
      %s95 = sphi 0, %s94
      %s111 = sphi 0, %s95
      %s119 = sphi 0, %s121
      %s122 = sphi 0, %s119
      %s123 = sphi 0, %s122
      %s139 = sphi 0, %s123
    $region4: #{residual_block_forward.6} parent=1 // loop_header_branch
      %23 = sbr.rel (%p21) target = $region8
    $region5: #{residual_block_forward.6} parent=1 // loop_body
      %s25 = ssub.s32 %s20, 1
      %s26 = ssub.s32 %s20, 2
      %s33 = sadd.s32 1, %s28
      %p34 = scmp.ge.s32.totalorder %s33, 1
      %s35 = scalar_select %p34, 0, %s33
      %s36 = sadd.s32 1, %s27
      %s37 = scalar_select %p34, %s36, %s27
      %p38 = scmp.ge.s32.totalorder %s37, 2
      %s39 = scalar_select %p38, 0, %s37
      %s40 = ssub.s32 %s27, %s39
      %p41 = scmp.eq.s32.totalorder %s40, 0
      %s43 = sadd.s32 %s42, 1
      %s44 = scalar_select %p41, %s42, %s43
      %p47 = pneg %p41
      %p48 = scmp.eq.s32.totalorder %s20, 1
      %p49 = por %p47, %p48
      %p50 = scmp.ne.s32.totalorder %s42, %s45
      %p51 = scmp.eq.s32.totalorder %s20, 0
      %p52 = por %p50, %p51
      %p53 = scmp.ne.s32.totalorder %s42, %s45
      %p54 = scmp.eq.s32.totalorder %s25, 1
      %p55 = por %p53, %p54
      %p56 = scmp.ne.s32.totalorder %s45, %s46
      %p57 = scmp.eq.s32.totalorder %s25, 0
      %p58 = por %p56, %p57
      %p59 = scmp.ne.s32.totalorder %s45, %s46
      %p60 = scmp.eq.s32.totalorder %s26, 1
      %p61 = por %p59, %p60
      %p63 = scmp.ne.s32.totalorder %s46, %s62
      %p64 = scmp.eq.s32.totalorder %s26, 0
      %p65 = por %p63, %p64
      %s67 = sadd.s32 %s66, 1
      %p70 = scmp.eq.s32.totalorder %s20, 1
      %p71 = scmp.ne.s32.totalorder %s66, %s68
      %p72 = scmp.eq.s32.totalorder %s20, 0
      %p73 = por %p71, %p72
      %p74 = scmp.ne.s32.totalorder %s66, %s68
      %p75 = scmp.eq.s32.totalorder %s25, 1
      %p76 = por %p74, %p75
      %p77 = scmp.ne.s32.totalorder %s68, %s69
      %p78 = scmp.eq.s32.totalorder %s25, 0
      %p79 = por %p77, %p78
      %p80 = scmp.ne.s32.totalorder %s68, %s69
      %p81 = scmp.eq.s32.totalorder %s26, 1
      %p82 = por %p80, %p81
      %p84 = scmp.ne.s32.totalorder %s69, %s83
      %p85 = scmp.eq.s32.totalorder %s26, 0
      %p86 = por %p84, %p85
      %s87 = ssub.s32 %s27, %s39
      %s88 = ssub.s32 %s28, %s35
      %s89 = sor.u32 %s87, %s88
      %p90 = scmp.eq.s32.totalorder %s89, 0
      %s92 = sadd.s32 %s91, 1
      %s93 = scalar_select %p90, %s91, %s92
      %p96 = pneg %p90
      %p97 = scmp.eq.s32.totalorder %s20, 1
      %p98 = por %p96, %p97
      %p99 = scmp.ne.s32.totalorder %s91, %s94
      %p100 = scmp.eq.s32.totalorder %s20, 0
      %p101 = por %p99, %p100
      %p102 = scmp.ne.s32.totalorder %s91, %s94
      %p103 = scmp.eq.s32.totalorder %s25, 1
      %p104 = por %p102, %p103
      %p105 = scmp.ne.s32.totalorder %s94, %s95
      %p106 = scmp.eq.s32.totalorder %s25, 0
      %p107 = por %p105, %p106
      %p108 = scmp.ne.s32.totalorder %s94, %s95
      %p109 = scmp.eq.s32.totalorder %s26, 1
      %p110 = por %p108, %p109
      %p112 = scmp.ne.s32.totalorder %s95, %s111
      %p113 = scmp.eq.s32.totalorder %s26, 0
      %p114 = por %p112, %p113
      %s115 = ssub.s32 %s27, %s39
      %s116 = ssub.s32 %s28, %s35
      %s117 = sor.u32 %s115, %s116
      %p118 = scmp.eq.s32.totalorder %s117, 0
      %s120 = sadd.s32 %s119, 1
      %s121 = scalar_select %p118, %s119, %s120
      %p124 = pneg %p118
      %p125 = scmp.eq.s32.totalorder %s20, 1
      %p126 = por %p124, %p125
      %p127 = scmp.ne.s32.totalorder %s119, %s122
      %p128 = scmp.eq.s32.totalorder %s20, 0
      %p129 = por %p127, %p128
      %p130 = scmp.ne.s32.totalorder %s119, %s122
      %p131 = scmp.eq.s32.totalorder %s25, 1
      %p132 = por %p130, %p131
      %p133 = scmp.ne.s32.totalorder %s122, %s123
      %p134 = scmp.eq.s32.totalorder %s25, 0
      %p135 = por %p133, %p134
      %p136 = scmp.ne.s32.totalorder %s122, %s123
      %p137 = scmp.eq.s32.totalorder %s26, 1
      %p138 = por %p136, %p137
      %p140 = scmp.ne.s32.totalorder %s123, %s139
      %p141 = scmp.eq.s32.totalorder %s26, 0
      %p142 = por %p140, %p141
      %p143 = scmp.le.s32.totalorder 1, %s20
      %p144 = scmp.lt.s32.totalorder %s20, 3
      %p145 = pnand %p143, %p144
      %p146 = pneg %p145
      // Predicated region
      $region9: #{residual_block_forward.6} parent=5 // pred_check
        _
      $region10: #{residual_block_forward.6} parent=5 // pred_check_branch
        %148 = sbr.rel (%p145) target = $region12
      $region11: #{residual_block_forward.6} parent=5 // pred_region
        %s149 = ssub.s32 %s20, 1
        // Predicated region
        $region13: #{residual_block_forward.6} parent=11 // pred_check
          %p150 = pneg %p79
        $region14: #{residual_block_forward.6} parent=11 // pred_check_branch
          %152 = sbr.rel (%p150) target = $region16
        $region15: #{residual_block_forward.6} parent=11 // pred_region
          %s154 = ssub.s32 9216, 9216
          %155 = vsyncadd [#allocation6], %s154
          %s156 = sshll.u32 [#allocation5], 4
          %s157 = int_to_ptr.vmem [resolvable:$true] %s156
          %162 = dma.hbm_to_vmem [thread:$0]  %s1, 9216, %s157, [#allocation6], 64, 64, 4
        $region16: #{residual_block_forward.6} parent=11 // pred_fallthru
          _
      $region12: #{residual_block_forward.6} parent=5 // pred_fallthru
        _
      %p163 = scmp.lt.s32.totalorder %s20, 2
      // Predicated region
      $region17: #{residual_block_forward.6} parent=5 // pred_check
        %p164 = pneg %p163
      $region18: #{residual_block_forward.6} parent=5 // pred_check_branch
        %166 = sbr.rel (%p164) target = $region20
      $region19: #{residual_block_forward.6} parent=5 // pred_region
        // Predicated region
        $region21: #{residual_block_forward.6} parent=19 // pred_check
          %p167 = pneg %p52
        $region22: #{residual_block_forward.6} parent=19 // pred_check_branch
          %169 = sbr.rel (%p167) target = $region24
        $region23: #{residual_block_forward.6} parent=19 // pred_region
          %s170 = sand.u32 %s42, 1
          %s171 = scalar_lea.sflag [#allocation3], %s170
          %s172 = sand.u32 %s42, 1
          %s173 = smul.addr %s172, 216
          %s174 = scalar_lea.vmem [#allocation2], %s173
          %s176 = ssub.s32 3456, 3456
          %177 = vsyncadd %s171, %s176
          %s178 = smul.addr %s27, 54
          %s179 = smul.addr %s178, 64
          %s180 = scalar_lea.hbm %s0, %s179
          %s181 = sshll.u32 %s174, 4
          %s182 = int_to_ptr.vmem [resolvable:$true] %s181
          %187 = dma.hbm_to_vmem [thread:$0]  %s180, 3456, %s182, %s171, 64, 64, 4
        $region24: #{residual_block_forward.6} parent=19 // pred_fallthru
          _
      $region20: #{residual_block_forward.6} parent=5 // pred_fallthru
        _
      %p188 = scmp.le.s32.totalorder 1, %s20
      %p189 = scmp.lt.s32.totalorder %s20, 3
      %p190 = pnand %p188, %p189
      %p191 = pneg %p190
      // Predicated region
      $region25: #{residual_block_forward.6} parent=5 // pred_check
        _
      $region26: #{residual_block_forward.6} parent=5 // pred_check_branch
        %193 = sbr.rel (%p190) target = $region28
      $region27: #{residual_block_forward.6} parent=5 // pred_region
        %s194 = ssub.s32 %s20, 1
        %s195 = sand.u32 %s45, 1
        %s196 = scalar_lea.sflag [#allocation3], %s195
        %s197 = sand.u32 %s45, 1
        %s198 = smul.addr %s197, 216
        %s199 = scalar_lea.vmem [#allocation2], %s198
        // Predicated region
        $region29: #{residual_block_forward.6} parent=27 // pred_check
          %p200 = pneg %p58
        $region30: #{residual_block_forward.6} parent=27 // pred_check_branch
          %202 = sbr.rel (%p200) target = $region32
        $region31: #{residual_block_forward.6} parent=27 // pred_region
          %203 = dma.done %s196, 3456
        $region32: #{residual_block_forward.6} parent=27 // pred_fallthru
          _
        // Predicated region
        $region33: #{residual_block_forward.6} parent=27 // pred_check
          %p204 = pneg %p79
        $region34: #{residual_block_forward.6} parent=27 // pred_check_branch
          %206 = sbr.rel (%p204) target = $region36
        $region35: #{residual_block_forward.6} parent=27 // pred_region
          %207 = dma.done [#allocation6], 9216
        $region36: #{residual_block_forward.6} parent=27 // pred_fallthru
          _
        %s208 = sand.u32 %s45, 1
        %s209 = scalar_lea.sflag [#allocation3], %s208
        %s210 = sand.u32 %s45, 1
        %s211 = smul.addr %s210, 216
        %s212 = scalar_lea.vmem [#allocation2], %s211
        %p213 = pneg %p58
        %p214 = pneg %p55
        %p215 = pneg %p79
        %p216 = pneg %p76
        %p217 = pneg %p107
        %p218 = pneg %p104
        %s219 = sand.u32 %s94, 1
        %s220 = scalar_lea.sflag [#allocation4], %s219
        %s221 = sand.u32 %s94, 1
        %s222 = smul.addr %s221, 128
        %s223 = scalar_lea.vmem [#allocation7], %s222
        %p224 = pneg %p135
        %p225 = pneg %p132
        %s226 = sand.u32 %s122, 1
        %s227 = scalar_lea.sflag [#allocation9], %s226
        %s228 = sand.u32 %s122, 1
        %s229 = smul.addr %s228, 2
        %s230 = scalar_lea.vmem [#allocation8], %s229
        %s231 = smul.u32 32, %s30
        %s233 = smul.u32 %s30, 16
        %s234 = smul.u32 %s233, 3
        %s235 = smul.addr %s234, 4
        %s236 = scalar_lea.vmem %s199, %s235 [#allocation2]
        %v237 = vld [vmem:[%s236] sm:$0xf]
        %v238 = vld [vmem:[%s236 + $0x4] sm:$0xf]
        %v239 = vld [vmem:[%s236 + $0xc] sm:$0xf]
        %v240 = vld [vmem:[%s236 + $0x10] sm:$0xf]
        %v241 = vld [vmem:[%s236 + $0x18] sm:$0xf]
        %v242 = vld [vmem:[%s236 + $0x1c] sm:$0xf]
        %v243 = vld [vmem:[%s236 + $0x24] sm:$0xf]
        %v244 = vld [vmem:[%s236 + $0x28] sm:$0xf]
        %v245 = vld [vmem:[%s236 + $0x30] sm:$0xf]
        %v246 = vld [vmem:[%s236 + $0x34] sm:$0xf]
        %v247 = vld [vmem:[%s236 + $0x3c] sm:$0xf]
        %v248 = vld [vmem:[%s236 + $0x40] sm:$0xf]
        %v249 = vld [vmem:[%s236 + $0x48] sm:$0xf]
        %v250 = vld [vmem:[%s236 + $0x4c] sm:$0xf]
        %v251 = vld [vmem:[%s236 + $0x54] sm:$0xf]
        %v252 = vld [vmem:[%s236 + $0x58] sm:$0xf]
        %v253 = vld [vmem:[%s236 + $0x60] sm:$0xf]
        %v254 = vld [vmem:[%s236 + $0x64] sm:$0xf]
        %v255 = vld [vmem:[%s236 + $0x6c] sm:$0xf]
        %v256 = vld [vmem:[%s236 + $0x70] sm:$0xf]
        %v257 = vld [vmem:[%s236 + $0x78] sm:$0xf]
        %v258 = vld [vmem:[%s236 + $0x7c] sm:$0xf]
        %v259 = vld [vmem:[%s236 + $0x84] sm:$0xf]
        %v260 = vld [vmem:[%s236 + $0x88] sm:$0xf]
        %v261 = vld [vmem:[%s236 + $0x90] sm:$0xf]
        %v262 = vld [vmem:[%s236 + $0x94] sm:$0xf]
        %v263 = vld [vmem:[%s236 + $0x9c] sm:$0xf]
        %v264 = vld [vmem:[%s236 + $0xa0] sm:$0xf]
        %v265 = vld [vmem:[%s236 + $0xa8] sm:$0xf]
        %v266 = vld [vmem:[%s236 + $0xac] sm:$0xf]
        %v267 = vld [vmem:[%s236 + $0xb4] sm:$0xf]
        %v268 = vld [vmem:[%s236 + $0xb8] sm:$0xf]
        %v269 = vld [vmem:[%s236 + $0xc0] sm:$0xf]
        %v270 = vld [vmem:[%s236 + $0xc4] sm:$0xf]
        %v271 = vld [vmem:[%s236 + $0xcc] sm:$0xf]
        %v272 = vld [vmem:[%s236 + $0xd0] sm:$0xf]
        %v273 = vld [vmem:[%s236 + $0x8] sm:$0x1]
        %v274 = vld [vmem:[%s236 + $0x14] sm:$0x1]
        %v275 = vld [vmem:[%s236 + $0x20] sm:$0x1]
        %v276 = vld [vmem:[%s236 + $0x2c] sm:$0x1]
        %v277 = vld [vmem:[%s236 + $0x38] sm:$0x1]
        %v278 = vld [vmem:[%s236 + $0x44] sm:$0x1]
        %v279 = vld [vmem:[%s236 + $0x50] sm:$0x1]
        %v280 = vld [vmem:[%s236 + $0x5c] sm:$0x1]
        %v281 = vld [vmem:[%s236 + $0x68] sm:$0x1]
        %v282 = vld [vmem:[%s236 + $0x74] sm:$0x1]
        %v283 = vld [vmem:[%s236 + $0x80] sm:$0x1]
        %v284 = vld [vmem:[%s236 + $0x8c] sm:$0x1]
        %v285 = vld [vmem:[%s236 + $0x98] sm:$0x1]
        %v286 = vld [vmem:[%s236 + $0xa4] sm:$0x1]
        %v287 = vld [vmem:[%s236 + $0xb0] sm:$0x1]
        %v288 = vld [vmem:[%s236 + $0xbc] sm:$0x1]
        %v289 = vld [vmem:[%s236 + $0xc8] sm:$0x1]
        %v290 = vld [vmem:[%s236 + $0xd4] sm:$0x1]
        %v291 = vld [vmem:[%s236] sm:$0xe]
        %v292 = vld [vmem:[%s236 + $0xc] sm:$0xe]
        %v293 = vld [vmem:[%s236 + $0x18] sm:$0xe]
        %v294 = vld [vmem:[%s236 + $0x24] sm:$0xe]
        %v295 = vld [vmem:[%s236 + $0x30] sm:$0xe]
        %v296 = vld [vmem:[%s236 + $0x3c] sm:$0xe]
        %v297 = vld [vmem:[%s236 + $0x48] sm:$0xe]
        %v298 = vld [vmem:[%s236 + $0x54] sm:$0xe]
        %v299 = vld [vmem:[%s236 + $0x60] sm:$0xe]
        %v300 = vld [vmem:[%s236 + $0x6c] sm:$0xe]
        %v301 = vld [vmem:[%s236 + $0x78] sm:$0xe]
        %v302 = vld [vmem:[%s236 + $0x84] sm:$0xe]
        %v303 = vld [vmem:[%s236 + $0x90] sm:$0xe]
        %v304 = vld [vmem:[%s236 + $0x9c] sm:$0xe]
        %v305 = vld [vmem:[%s236 + $0xa8] sm:$0xe]
        %v306 = vld [vmem:[%s236 + $0xb4] sm:$0xe]
        %v307 = vld [vmem:[%s236 + $0xc0] sm:$0xe]
        %v308 = vld [vmem:[%s236 + $0xcc] sm:$0xe]
        %v345 = vunpack.c.l.b16 %v237
        %v346 = vunpack.c.l.b16 %v238
        %v347 = vunpack.c.l.b16 %v239
        %v348 = vunpack.c.l.b16 %v240
        %v349 = vunpack.c.l.b16 %v241
        %v350 = vunpack.c.l.b16 %v242
        %v351 = vunpack.c.l.b16 %v243
        %v352 = vunpack.c.l.b16 %v244
        %v353 = vunpack.c.l.b16 %v245
        %v354 = vunpack.c.l.b16 %v246
        %v355 = vunpack.c.l.b16 %v247
        %v356 = vunpack.c.l.b16 %v248
        %v357 = vunpack.c.l.b16 %v249
        %v358 = vunpack.c.l.b16 %v250
        %v359 = vunpack.c.l.b16 %v251
        %v360 = vunpack.c.l.b16 %v252
        %v361 = vunpack.c.l.b16 %v253
        %v362 = vunpack.c.l.b16 %v254
        %v363 = vunpack.c.l.b16 %v255
        %v364 = vunpack.c.l.b16 %v256
        %v365 = vunpack.c.l.b16 %v257
        %v366 = vunpack.c.l.b16 %v258
        %v367 = vunpack.c.l.b16 %v259
        %v368 = vunpack.c.l.b16 %v260
        %v369 = vunpack.c.l.b16 %v261
        %v370 = vunpack.c.l.b16 %v262
        %v371 = vunpack.c.l.b16 %v263
        %v372 = vunpack.c.l.b16 %v264
        %v373 = vunpack.c.l.b16 %v265
        %v374 = vunpack.c.l.b16 %v266
        %v375 = vunpack.c.l.b16 %v267
        %v376 = vunpack.c.l.b16 %v268
        %v377 = vunpack.c.l.b16 %v269
        %v378 = vunpack.c.l.b16 %v270
        %v379 = vunpack.c.l.b16 %v271
        %v380 = vunpack.c.l.b16 %v272
        %v381 = vpack.c.b16 %v346, %v345
        %v382 = vpack.c.b16 %v348, %v347
        %v383 = vpack.c.b16 %v350, %v349
        %v384 = vpack.c.b16 %v352, %v351
        %v385 = vpack.c.b16 %v354, %v353
        %v386 = vpack.c.b16 %v356, %v355
        %v387 = vpack.c.b16 %v358, %v357
        %v388 = vpack.c.b16 %v360, %v359
        %v389 = vpack.c.b16 %v362, %v361
        %v390 = vpack.c.b16 %v364, %v363
        %v391 = vpack.c.b16 %v366, %v365
        %v392 = vpack.c.b16 %v368, %v367
        %v393 = vpack.c.b16 %v370, %v369
        %v394 = vpack.c.b16 %v372, %v371
        %v395 = vpack.c.b16 %v374, %v373
        %v396 = vpack.c.b16 %v376, %v375
        %v397 = vpack.c.b16 %v378, %v377
        %v398 = vpack.c.b16 %v380, %v379
        %v435 = vunpack.c.l.b16 %v273
        %v436 = vunpack.c.l.b16 %v274
        %v437 = vunpack.c.l.b16 %v275
        %v438 = vunpack.c.l.b16 %v276
        %v439 = vunpack.c.l.b16 %v277
        %v440 = vunpack.c.l.b16 %v278
        %v441 = vunpack.c.l.b16 %v279
        %v442 = vunpack.c.l.b16 %v280
        %v443 = vunpack.c.l.b16 %v281
        %v444 = vunpack.c.l.b16 %v282
        %v445 = vunpack.c.l.b16 %v283
        %v446 = vunpack.c.l.b16 %v284
        %v447 = vunpack.c.l.b16 %v285
        %v448 = vunpack.c.l.b16 %v286
        %v449 = vunpack.c.l.b16 %v287
        %v450 = vunpack.c.l.b16 %v288
        %v451 = vunpack.c.l.b16 %v289
        %v452 = vunpack.c.l.b16 %v290
        %v453 = vpack.c.b16 %v435, %v435
        %v454 = vpack.c.b16 %v436, %v436
        %v455 = vpack.c.b16 %v437, %v437
        %v456 = vpack.c.b16 %v438, %v438
        %v457 = vpack.c.b16 %v439, %v439
        %v458 = vpack.c.b16 %v440, %v440
        %v459 = vpack.c.b16 %v441, %v441
        %v460 = vpack.c.b16 %v442, %v442
        %v461 = vpack.c.b16 %v443, %v443
        %v462 = vpack.c.b16 %v444, %v444
        %v463 = vpack.c.b16 %v445, %v445
        %v464 = vpack.c.b16 %v446, %v446
        %v465 = vpack.c.b16 %v447, %v447
        %v466 = vpack.c.b16 %v448, %v448
        %v467 = vpack.c.b16 %v449, %v449
        %v468 = vpack.c.b16 %v450, %v450
        %v469 = vpack.c.b16 %v451, %v451
        %v470 = vpack.c.b16 %v452, %v452
        %vm471 = vsmask.f32 7424
        %v473 = vshrl.u32 %v381, 16
        %v475 = vshll.u32 %v381, 16
        %v477 = vrot.slane %v475, 1
        %v478 = vor.u32 %v473, %v477
        %v480 = vshll.u32 %v453, 16
        %v482 = vrot.slane %v480, 1
        %v483 = vsel %vm471, %v478, %v482
        %v485 = vshrl.u32 %v382, 16
        %v487 = vshll.u32 %v382, 16
        %v489 = vrot.slane %v487, 1
        %v490 = vor.u32 %v485, %v489
        %v492 = vshll.u32 %v454, 16
        %v494 = vrot.slane %v492, 1
        %v495 = vsel %vm471, %v490, %v494
        %v497 = vshrl.u32 %v383, 16
        %v499 = vshll.u32 %v383, 16
        %v501 = vrot.slane %v499, 1
        %v502 = vor.u32 %v497, %v501
        %v504 = vshll.u32 %v455, 16
        %v506 = vrot.slane %v504, 1
        %v507 = vsel %vm471, %v502, %v506
        %v509 = vshrl.u32 %v384, 16
        %v511 = vshll.u32 %v384, 16
        %v513 = vrot.slane %v511, 1
        %v514 = vor.u32 %v509, %v513
        %v516 = vshll.u32 %v456, 16
        %v518 = vrot.slane %v516, 1
        %v519 = vsel %vm471, %v514, %v518
        %v521 = vshrl.u32 %v385, 16
        %v523 = vshll.u32 %v385, 16
        %v525 = vrot.slane %v523, 1
        %v526 = vor.u32 %v521, %v525
        %v528 = vshll.u32 %v457, 16
        %v530 = vrot.slane %v528, 1
        %v531 = vsel %vm471, %v526, %v530
        %v533 = vshrl.u32 %v386, 16
        %v535 = vshll.u32 %v386, 16
        %v537 = vrot.slane %v535, 1
        %v538 = vor.u32 %v533, %v537
        %v540 = vshll.u32 %v458, 16
        %v542 = vrot.slane %v540, 1
        %v543 = vsel %vm471, %v538, %v542
        %v545 = vshrl.u32 %v387, 16
        %v547 = vshll.u32 %v387, 16
        %v549 = vrot.slane %v547, 1
        %v550 = vor.u32 %v545, %v549
        %v552 = vshll.u32 %v459, 16
        %v554 = vrot.slane %v552, 1
        %v555 = vsel %vm471, %v550, %v554
        %v557 = vshrl.u32 %v388, 16
        %v559 = vshll.u32 %v388, 16
        %v561 = vrot.slane %v559, 1
        %v562 = vor.u32 %v557, %v561
        %v564 = vshll.u32 %v460, 16
        %v566 = vrot.slane %v564, 1
        %v567 = vsel %vm471, %v562, %v566
        %v569 = vshrl.u32 %v389, 16
        %v571 = vshll.u32 %v389, 16
        %v573 = vrot.slane %v571, 1
        %v574 = vor.u32 %v569, %v573
        %v576 = vshll.u32 %v461, 16
        %v578 = vrot.slane %v576, 1
        %v579 = vsel %vm471, %v574, %v578
        %v581 = vshrl.u32 %v390, 16
        %v583 = vshll.u32 %v390, 16
        %v585 = vrot.slane %v583, 1
        %v586 = vor.u32 %v581, %v585
        %v588 = vshll.u32 %v462, 16
        %v590 = vrot.slane %v588, 1
        %v591 = vsel %vm471, %v586, %v590
        %v593 = vshrl.u32 %v391, 16
        %v595 = vshll.u32 %v391, 16
        %v597 = vrot.slane %v595, 1
        %v598 = vor.u32 %v593, %v597
        %v600 = vshll.u32 %v463, 16
        %v602 = vrot.slane %v600, 1
        %v603 = vsel %vm471, %v598, %v602
        %v605 = vshrl.u32 %v392, 16
        %v607 = vshll.u32 %v392, 16
        %v609 = vrot.slane %v607, 1
        %v610 = vor.u32 %v605, %v609
        %v612 = vshll.u32 %v464, 16
        %v614 = vrot.slane %v612, 1
        %v615 = vsel %vm471, %v610, %v614
        %v617 = vshrl.u32 %v393, 16
        %v619 = vshll.u32 %v393, 16
        %v621 = vrot.slane %v619, 1
        %v622 = vor.u32 %v617, %v621
        %v624 = vshll.u32 %v465, 16
        %v626 = vrot.slane %v624, 1
        %v627 = vsel %vm471, %v622, %v626
        %v629 = vshrl.u32 %v394, 16
        %v631 = vshll.u32 %v394, 16
        %v633 = vrot.slane %v631, 1
        %v634 = vor.u32 %v629, %v633
        %v636 = vshll.u32 %v466, 16
        %v638 = vrot.slane %v636, 1
        %v639 = vsel %vm471, %v634, %v638
        %v641 = vshrl.u32 %v395, 16
        %v643 = vshll.u32 %v395, 16
        %v645 = vrot.slane %v643, 1
        %v646 = vor.u32 %v641, %v645
        %v648 = vshll.u32 %v467, 16
        %v650 = vrot.slane %v648, 1
        %v651 = vsel %vm471, %v646, %v650
        %v653 = vshrl.u32 %v396, 16
        %v655 = vshll.u32 %v396, 16
        %v657 = vrot.slane %v655, 1
        %v658 = vor.u32 %v653, %v657
        %v660 = vshll.u32 %v468, 16
        %v662 = vrot.slane %v660, 1
        %v663 = vsel %vm471, %v658, %v662
        %v665 = vshrl.u32 %v397, 16
        %v667 = vshll.u32 %v397, 16
        %v669 = vrot.slane %v667, 1
        %v670 = vor.u32 %v665, %v669
        %v672 = vshll.u32 %v469, 16
        %v674 = vrot.slane %v672, 1
        %v675 = vsel %vm471, %v670, %v674
        %v677 = vshrl.u32 %v398, 16
        %v679 = vshll.u32 %v398, 16
        %v681 = vrot.slane %v679, 1
        %v682 = vor.u32 %v677, %v681
        %v684 = vshll.u32 %v470, 16
        %v686 = vrot.slane %v684, 1
        %v687 = vsel %vm471, %v682, %v686
        %v724 = vunpack.c.l.b16 %v291
        %v725 = vunpack.c.l.b16 %v292
        %v726 = vunpack.c.l.b16 %v293
        %v727 = vunpack.c.l.b16 %v294
        %v728 = vunpack.c.l.b16 %v295
        %v729 = vunpack.c.l.b16 %v296
        %v730 = vunpack.c.l.b16 %v297
        %v731 = vunpack.c.l.b16 %v298
        %v732 = vunpack.c.l.b16 %v299
        %v733 = vunpack.c.l.b16 %v300
        %v734 = vunpack.c.l.b16 %v301
        %v735 = vunpack.c.l.b16 %v302
        %v736 = vunpack.c.l.b16 %v303
        %v737 = vunpack.c.l.b16 %v304
        %v738 = vunpack.c.l.b16 %v305
        %v739 = vunpack.c.l.b16 %v306
        %v740 = vunpack.c.l.b16 %v307
        %v741 = vunpack.c.l.b16 %v308
        %v742 = vpack.c.b16 %v346, %v724
        %v743 = vpack.c.b16 %v348, %v725
        %v744 = vpack.c.b16 %v350, %v726
        %v745 = vpack.c.b16 %v352, %v727
        %v746 = vpack.c.b16 %v354, %v728
        %v747 = vpack.c.b16 %v356, %v729
        %v748 = vpack.c.b16 %v358, %v730
        %v749 = vpack.c.b16 %v360, %v731
        %v750 = vpack.c.b16 %v362, %v732
        %v751 = vpack.c.b16 %v364, %v733
        %v752 = vpack.c.b16 %v366, %v734
        %v753 = vpack.c.b16 %v368, %v735
        %v754 = vpack.c.b16 %v370, %v736
        %v755 = vpack.c.b16 %v372, %v737
        %v756 = vpack.c.b16 %v374, %v738
        %v757 = vpack.c.b16 %v376, %v739
        %v758 = vpack.c.b16 %v378, %v740
        %v759 = vpack.c.b16 %v380, %v741
        %vm760 = vcmask 1046528
        %v761 = vrot.slane %v742, 1
        %v762 = vrot.slane %v453, 1
        %v763 = vsel %vm760, %v761, %v762
        %v764 = vrot.slane %v743, 1
        %v765 = vrot.slane %v454, 1
        %v766 = vsel %vm760, %v764, %v765
        %v767 = vrot.slane %v744, 1
        %v768 = vrot.slane %v455, 1
        %v769 = vsel %vm760, %v767, %v768
        %v770 = vrot.slane %v745, 1
        %v771 = vrot.slane %v456, 1
        %v772 = vsel %vm760, %v770, %v771
        %v773 = vrot.slane %v746, 1
        %v774 = vrot.slane %v457, 1
        %v775 = vsel %vm760, %v773, %v774
        %v776 = vrot.slane %v747, 1
        %v777 = vrot.slane %v458, 1
        %v778 = vsel %vm760, %v776, %v777
        %v779 = vrot.slane %v748, 1
        %v780 = vrot.slane %v459, 1
        %v781 = vsel %vm760, %v779, %v780
        %v782 = vrot.slane %v749, 1
        %v783 = vrot.slane %v460, 1
        %v784 = vsel %vm760, %v782, %v783
        %v785 = vrot.slane %v750, 1
        %v786 = vrot.slane %v461, 1
        %v787 = vsel %vm760, %v785, %v786
        %v788 = vrot.slane %v751, 1
        %v789 = vrot.slane %v462, 1
        %v790 = vsel %vm760, %v788, %v789
        %v791 = vrot.slane %v752, 1
        %v792 = vrot.slane %v463, 1
        %v793 = vsel %vm760, %v791, %v792
        %v794 = vrot.slane %v753, 1
        %v795 = vrot.slane %v464, 1
        %v796 = vsel %vm760, %v794, %v795
        %v797 = vrot.slane %v754, 1
        %v798 = vrot.slane %v465, 1
        %v799 = vsel %vm760, %v797, %v798
        %v800 = vrot.slane %v755, 1
        %v801 = vrot.slane %v466, 1
        %v802 = vsel %vm760, %v800, %v801
        %v803 = vrot.slane %v756, 1
        %v804 = vrot.slane %v467, 1
        %v805 = vsel %vm760, %v803, %v804
        %v806 = vrot.slane %v757, 1
        %v807 = vrot.slane %v468, 1
        %v808 = vsel %vm760, %v806, %v807
        %v809 = vrot.slane %v758, 1
        %v810 = vrot.slane %v469, 1
        %v811 = vsel %vm760, %v809, %v810
        %v812 = vrot.slane %v759, 1
        %v813 = vrot.slane %v470, 1
        %v814 = vsel %vm760, %v812, %v813
        %v833 = vld [vmem:[#allocation5] sm:$0xf]
        %v834 = vld [vmem:[#allocation5 + $0x4] sm:$0xf]
        %v835 = vld [vmem:[#allocation5 + $0x8] sm:$0xf]
        %v836 = vld [vmem:[#allocation5 + $0xc] sm:$0xf]
        %v837 = vld [vmem:[#allocation5 + $0x10] sm:$0xf]
        %v838 = vld [vmem:[#allocation5 + $0x14] sm:$0xf]
        %v839 = vld [vmem:[#allocation5 + $0x18] sm:$0xf]
        %v840 = vld [vmem:[#allocation5 + $0x1c] sm:$0xf]
        %v841 = vld [vmem:[#allocation5 + $0x20] sm:$0xf]
        %v842 = vld [vmem:[#allocation5 + $0x24] sm:$0xf]
        %v843 = vld [vmem:[#allocation5 + $0x28] sm:$0xf]
        %v844 = vld [vmem:[#allocation5 + $0x2c] sm:$0xf]
        %v845 = vld [vmem:[#allocation5 + $0x30] sm:$0xf]
        %v846 = vld [vmem:[#allocation5 + $0x34] sm:$0xf]
        %v847 = vld [vmem:[#allocation5 + $0x38] sm:$0xf]
        %v848 = vld [vmem:[#allocation5 + $0x3c] sm:$0xf]
        %v849 = vld [vmem:[#allocation5 + $0x40] sm:$0xf]
        %v850 = vld [vmem:[#allocation5 + $0x44] sm:$0xf]
        %v851 = vld [vmem:[#allocation5 + $0x48] sm:$0xf]
        %v852 = vld [vmem:[#allocation5 + $0x4c] sm:$0xf]
        %v853 = vld [vmem:[#allocation5 + $0x50] sm:$0xf]
        %v854 = vld [vmem:[#allocation5 + $0x54] sm:$0xf]
        %v855 = vld [vmem:[#allocation5 + $0x58] sm:$0xf]
        %v856 = vld [vmem:[#allocation5 + $0x5c] sm:$0xf]
        %v857 = vld [vmem:[#allocation5 + $0x60] sm:$0xf]
        %v858 = vld [vmem:[#allocation5 + $0x64] sm:$0xf]
        %v859 = vld [vmem:[#allocation5 + $0x68] sm:$0xf]
        %v860 = vld [vmem:[#allocation5 + $0x6c] sm:$0xf]
        %v861 = vld [vmem:[#allocation5 + $0x70] sm:$0xf]
        %v862 = vld [vmem:[#allocation5 + $0x74] sm:$0xf]
        %v863 = vld [vmem:[#allocation5 + $0x78] sm:$0xf]
        %v864 = vld [vmem:[#allocation5 + $0x7c] sm:$0xf]
        %v865 = vld [vmem:[#allocation5 + $0x80] sm:$0xf]
        %v866 = vld [vmem:[#allocation5 + $0x84] sm:$0xf]
        %v867 = vld [vmem:[#allocation5 + $0x88] sm:$0xf]
        %v868 = vld [vmem:[#allocation5 + $0x8c] sm:$0xf]
        %v869 = vld [vmem:[#allocation5 + $0x90] sm:$0xf]
        %v870 = vld [vmem:[#allocation5 + $0x94] sm:$0xf]
        %v871 = vld [vmem:[#allocation5 + $0x98] sm:$0xf]
        %v872 = vld [vmem:[#allocation5 + $0x9c] sm:$0xf]
        %v873 = vld [vmem:[#allocation5 + $0xa0] sm:$0xf]
        %v874 = vld [vmem:[#allocation5 + $0xa4] sm:$0xf]
        %v875 = vld [vmem:[#allocation5 + $0xa8] sm:$0xf]
        %v876 = vld [vmem:[#allocation5 + $0xac] sm:$0xf]
        %v877 = vld [vmem:[#allocation5 + $0xb0] sm:$0xf]
        %v878 = vld [vmem:[#allocation5 + $0xb4] sm:$0xf]
        %v879 = vld [vmem:[#allocation5 + $0xb8] sm:$0xf]
        %v880 = vld [vmem:[#allocation5 + $0xbc] sm:$0xf]
        %v881 = vld [vmem:[#allocation5 + $0xc0] sm:$0xf]
        %v882 = vld [vmem:[#allocation5 + $0xc4] sm:$0xf]
        %v883 = vld [vmem:[#allocation5 + $0xc8] sm:$0xf]
        %v884 = vld [vmem:[#allocation5 + $0xcc] sm:$0xf]
        %v885 = vld [vmem:[#allocation5 + $0xd0] sm:$0xf]
        %v886 = vld [vmem:[#allocation5 + $0xd4] sm:$0xf]
        %v887 = vld [vmem:[#allocation5 + $0xd8] sm:$0xf]
        %v888 = vld [vmem:[#allocation5 + $0xdc] sm:$0xf]
        %v889 = vld [vmem:[#allocation5 + $0xe0] sm:$0xf]
        %v890 = vld [vmem:[#allocation5 + $0xe4] sm:$0xf]
        %v891 = vld [vmem:[#allocation5 + $0xe8] sm:$0xf]
        %v892 = vld [vmem:[#allocation5 + $0xec] sm:$0xf]
        %v893 = vld [vmem:[#allocation5 + $0xf0] sm:$0xf]
        %v894 = vld [vmem:[#allocation5 + $0xf4] sm:$0xf]
        %v895 = vld [vmem:[#allocation5 + $0xf8] sm:$0xf]
        %v896 = vld [vmem:[#allocation5 + $0xfc] sm:$0xf]
        %v897 = vld [vmem:[#allocation5 + $0x100] sm:$0xf]
        %v898 = vld [vmem:[#allocation5 + $0x104] sm:$0xf]
        %v899 = vld [vmem:[#allocation5 + $0x108] sm:$0xf]
        %v900 = vld [vmem:[#allocation5 + $0x10c] sm:$0xf]
        %v901 = vld [vmem:[#allocation5 + $0x110] sm:$0xf]
        %v902 = vld [vmem:[#allocation5 + $0x114] sm:$0xf]
        %v903 = vld [vmem:[#allocation5 + $0x118] sm:$0xf]
        %v904 = vld [vmem:[#allocation5 + $0x11c] sm:$0xf]
        %v905 = vld [vmem:[#allocation5 + $0x120] sm:$0xf]
        %v906 = vld [vmem:[#allocation5 + $0x124] sm:$0xf]
        %v907 = vld [vmem:[#allocation5 + $0x128] sm:$0xf]
        %v908 = vld [vmem:[#allocation5 + $0x12c] sm:$0xf]
        %v909 = vld [vmem:[#allocation5 + $0x130] sm:$0xf]
        %v910 = vld [vmem:[#allocation5 + $0x134] sm:$0xf]
        %v911 = vld [vmem:[#allocation5 + $0x138] sm:$0xf]
        %v912 = vld [vmem:[#allocation5 + $0x13c] sm:$0xf]
        %v913 = vld [vmem:[#allocation5 + $0x140] sm:$0xf]
        %v914 = vld [vmem:[#allocation5 + $0x144] sm:$0xf]
        %v915 = vld [vmem:[#allocation5 + $0x148] sm:$0xf]
        %v916 = vld [vmem:[#allocation5 + $0x14c] sm:$0xf]
        %v917 = vld [vmem:[#allocation5 + $0x150] sm:$0xf]
        %v918 = vld [vmem:[#allocation5 + $0x154] sm:$0xf]
        %v919 = vld [vmem:[#allocation5 + $0x158] sm:$0xf]
        %v920 = vld [vmem:[#allocation5 + $0x15c] sm:$0xf]
        %v921 = vld [vmem:[#allocation5 + $0x160] sm:$0xf]
        %v922 = vld [vmem:[#allocation5 + $0x164] sm:$0xf]
        %v923 = vld [vmem:[#allocation5 + $0x168] sm:$0xf]
        %v924 = vld [vmem:[#allocation5 + $0x16c] sm:$0xf]
        %v925 = vld [vmem:[#allocation5 + $0x170] sm:$0xf]
        %v926 = vld [vmem:[#allocation5 + $0x174] sm:$0xf]
        %v927 = vld [vmem:[#allocation5 + $0x178] sm:$0xf]
        %v928 = vld [vmem:[#allocation5 + $0x17c] sm:$0xf]
        %v929 = vld [vmem:[#allocation5 + $0x180] sm:$0xf]
        %v930 = vld [vmem:[#allocation5 + $0x184] sm:$0xf]
        %v931 = vld [vmem:[#allocation5 + $0x188] sm:$0xf]
        %v932 = vld [vmem:[#allocation5 + $0x18c] sm:$0xf]
        %v933 = vld [vmem:[#allocation5 + $0x190] sm:$0xf]
        %v934 = vld [vmem:[#allocation5 + $0x194] sm:$0xf]
        %v935 = vld [vmem:[#allocation5 + $0x198] sm:$0xf]
        %v936 = vld [vmem:[#allocation5 + $0x19c] sm:$0xf]
        %v937 = vld [vmem:[#allocation5 + $0x1a0] sm:$0xf]
        %v938 = vld [vmem:[#allocation5 + $0x1a4] sm:$0xf]
        %v939 = vld [vmem:[#allocation5 + $0x1a8] sm:$0xf]
        %v940 = vld [vmem:[#allocation5 + $0x1ac] sm:$0xf]
        %v941 = vld [vmem:[#allocation5 + $0x1b0] sm:$0xf]
        %v942 = vld [vmem:[#allocation5 + $0x1b4] sm:$0xf]
        %v943 = vld [vmem:[#allocation5 + $0x1b8] sm:$0xf]
        %v944 = vld [vmem:[#allocation5 + $0x1bc] sm:$0xf]
        %v945 = vld [vmem:[#allocation5 + $0x1c0] sm:$0xf]
        %v946 = vld [vmem:[#allocation5 + $0x1c4] sm:$0xf]
        %v947 = vld [vmem:[#allocation5 + $0x1c8] sm:$0xf]
        %v948 = vld [vmem:[#allocation5 + $0x1cc] sm:$0xf]
        %v949 = vld [vmem:[#allocation5 + $0x1d0] sm:$0xf]
        %v950 = vld [vmem:[#allocation5 + $0x1d4] sm:$0xf]
        %v951 = vld [vmem:[#allocation5 + $0x1d8] sm:$0xf]
        %v952 = vld [vmem:[#allocation5 + $0x1dc] sm:$0xf]
        %v953 = vld [vmem:[#allocation5 + $0x1e0] sm:$0xf]
        %v954 = vld [vmem:[#allocation5 + $0x1e4] sm:$0xf]
        %v955 = vld [vmem:[#allocation5 + $0x1e8] sm:$0xf]
        %v956 = vld [vmem:[#allocation5 + $0x1ec] sm:$0xf]
        %v957 = vld [vmem:[#allocation5 + $0x1f0] sm:$0xf]
        %v958 = vld [vmem:[#allocation5 + $0x1f4] sm:$0xf]
        %v959 = vld [vmem:[#allocation5 + $0x1f8] sm:$0xf]
        %v960 = vld [vmem:[#allocation5 + $0x1fc] sm:$0xf]
        %v961 = vld [vmem:[#allocation5 + $0x200] sm:$0xf]
        %v962 = vld [vmem:[#allocation5 + $0x204] sm:$0xf]
        %v963 = vld [vmem:[#allocation5 + $0x208] sm:$0xf]
        %v964 = vld [vmem:[#allocation5 + $0x20c] sm:$0xf]
        %v965 = vld [vmem:[#allocation5 + $0x210] sm:$0xf]
        %v966 = vld [vmem:[#allocation5 + $0x214] sm:$0xf]
        %v967 = vld [vmem:[#allocation5 + $0x218] sm:$0xf]
        %v968 = vld [vmem:[#allocation5 + $0x21c] sm:$0xf]
        %v969 = vld [vmem:[#allocation5 + $0x220] sm:$0xf]
        %v970 = vld [vmem:[#allocation5 + $0x224] sm:$0xf]
        %v971 = vld [vmem:[#allocation5 + $0x228] sm:$0xf]
        %v972 = vld [vmem:[#allocation5 + $0x22c] sm:$0xf]
        %v973 = vld [vmem:[#allocation5 + $0x230] sm:$0xf]
        %v974 = vld [vmem:[#allocation5 + $0x234] sm:$0xf]
        %v975 = vld [vmem:[#allocation5 + $0x238] sm:$0xf]
        %v976 = vld [vmem:[#allocation5 + $0x23c] sm:$0xf]
        %v1121 = vunpack.c.l.b16 %v833
        %v1122 = vunpack.c.l.b16 %v834
        %v1123 = vunpack.c.l.b16 %v835
        %v1124 = vunpack.c.l.b16 %v836
        %v1125 = vunpack.c.l.b16 %v837
        %v1126 = vunpack.c.l.b16 %v838
        %v1127 = vunpack.c.l.b16 %v839
        %v1128 = vunpack.c.l.b16 %v840
        %v1129 = vunpack.c.l.b16 %v841
        %v1130 = vunpack.c.l.b16 %v842
        %v1131 = vunpack.c.l.b16 %v843
        %v1132 = vunpack.c.l.b16 %v844
        %v1133 = vunpack.c.l.b16 %v845
        %v1134 = vunpack.c.l.b16 %v846
        %v1135 = vunpack.c.l.b16 %v847
        %v1136 = vunpack.c.l.b16 %v848
        %v1137 = vunpack.c.l.b16 %v849
        %v1138 = vunpack.c.l.b16 %v850
        %v1139 = vunpack.c.l.b16 %v851
        %v1140 = vunpack.c.l.b16 %v852
        %v1141 = vunpack.c.l.b16 %v853
        %v1142 = vunpack.c.l.b16 %v854
        %v1143 = vunpack.c.l.b16 %v855
        %v1144 = vunpack.c.l.b16 %v856
        %v1145 = vunpack.c.l.b16 %v857
        %v1146 = vunpack.c.l.b16 %v858
        %v1147 = vunpack.c.l.b16 %v859
        %v1148 = vunpack.c.l.b16 %v860
        %v1149 = vunpack.c.l.b16 %v861
        %v1150 = vunpack.c.l.b16 %v862
        %v1151 = vunpack.c.l.b16 %v863
        %v1152 = vunpack.c.l.b16 %v864
        %v1153 = vunpack.c.l.b16 %v865
        %v1154 = vunpack.c.l.b16 %v866
        %v1155 = vunpack.c.l.b16 %v867
        %v1156 = vunpack.c.l.b16 %v868
        %v1157 = vunpack.c.l.b16 %v869
        %v1158 = vunpack.c.l.b16 %v870
        %v1159 = vunpack.c.l.b16 %v871
        %v1160 = vunpack.c.l.b16 %v872
        %v1161 = vunpack.c.l.b16 %v873
        %v1162 = vunpack.c.l.b16 %v874
        %v1163 = vunpack.c.l.b16 %v875
        %v1164 = vunpack.c.l.b16 %v876
        %v1165 = vunpack.c.l.b16 %v877
        %v1166 = vunpack.c.l.b16 %v878
        %v1167 = vunpack.c.l.b16 %v879
        %v1168 = vunpack.c.l.b16 %v880
        %v1169 = vunpack.c.l.b16 %v881
        %v1170 = vunpack.c.l.b16 %v882
        %v1171 = vunpack.c.l.b16 %v883
        %v1172 = vunpack.c.l.b16 %v884
        %v1173 = vunpack.c.l.b16 %v885
        %v1174 = vunpack.c.l.b16 %v886
        %v1175 = vunpack.c.l.b16 %v887
        %v1176 = vunpack.c.l.b16 %v888
        %v1177 = vunpack.c.l.b16 %v889
        %v1178 = vunpack.c.l.b16 %v890
        %v1179 = vunpack.c.l.b16 %v891
        %v1180 = vunpack.c.l.b16 %v892
        %v1181 = vunpack.c.l.b16 %v893
        %v1182 = vunpack.c.l.b16 %v894
        %v1183 = vunpack.c.l.b16 %v895
        %v1184 = vunpack.c.l.b16 %v896
        %v1185 = vunpack.c.l.b16 %v897
        %v1186 = vunpack.c.l.b16 %v898
        %v1187 = vunpack.c.l.b16 %v899
        %v1188 = vunpack.c.l.b16 %v900
        %v1189 = vunpack.c.l.b16 %v901
        %v1190 = vunpack.c.l.b16 %v902
        %v1191 = vunpack.c.l.b16 %v903
        %v1192 = vunpack.c.l.b16 %v904
        %v1193 = vunpack.c.l.b16 %v905
        %v1194 = vunpack.c.l.b16 %v906
        %v1195 = vunpack.c.l.b16 %v907
        %v1196 = vunpack.c.l.b16 %v908
        %v1197 = vunpack.c.l.b16 %v909
        %v1198 = vunpack.c.l.b16 %v910
        %v1199 = vunpack.c.l.b16 %v911
        %v1200 = vunpack.c.l.b16 %v912
        %v1201 = vunpack.c.l.b16 %v913
        %v1202 = vunpack.c.l.b16 %v914
        %v1203 = vunpack.c.l.b16 %v915
        %v1204 = vunpack.c.l.b16 %v916
        %v1205 = vunpack.c.l.b16 %v917
        %v1206 = vunpack.c.l.b16 %v918
        %v1207 = vunpack.c.l.b16 %v919
        %v1208 = vunpack.c.l.b16 %v920
        %v1209 = vunpack.c.l.b16 %v921
        %v1210 = vunpack.c.l.b16 %v922
        %v1211 = vunpack.c.l.b16 %v923
        %v1212 = vunpack.c.l.b16 %v924
        %v1213 = vunpack.c.l.b16 %v925
        %v1214 = vunpack.c.l.b16 %v926
        %v1215 = vunpack.c.l.b16 %v927
        %v1216 = vunpack.c.l.b16 %v928
        %v1217 = vunpack.c.l.b16 %v929
        %v1218 = vunpack.c.l.b16 %v930
        %v1219 = vunpack.c.l.b16 %v931
        %v1220 = vunpack.c.l.b16 %v932
        %v1221 = vunpack.c.l.b16 %v933
        %v1222 = vunpack.c.l.b16 %v934
        %v1223 = vunpack.c.l.b16 %v935
        %v1224 = vunpack.c.l.b16 %v936
        %v1225 = vunpack.c.l.b16 %v937
        %v1226 = vunpack.c.l.b16 %v938
        %v1227 = vunpack.c.l.b16 %v939
        %v1228 = vunpack.c.l.b16 %v940
        %v1229 = vunpack.c.l.b16 %v941
        %v1230 = vunpack.c.l.b16 %v942
        %v1231 = vunpack.c.l.b16 %v943
        %v1232 = vunpack.c.l.b16 %v944
        %v1233 = vunpack.c.l.b16 %v945
        %v1234 = vunpack.c.l.b16 %v946
        %v1235 = vunpack.c.l.b16 %v947
        %v1236 = vunpack.c.l.b16 %v948
        %v1237 = vunpack.c.l.b16 %v949
        %v1238 = vunpack.c.l.b16 %v950
        %v1239 = vunpack.c.l.b16 %v951
        %v1240 = vunpack.c.l.b16 %v952
        %v1241 = vunpack.c.l.b16 %v953
        %v1242 = vunpack.c.l.b16 %v954
        %v1243 = vunpack.c.l.b16 %v955
        %v1244 = vunpack.c.l.b16 %v956
        %v1245 = vunpack.c.l.b16 %v957
        %v1246 = vunpack.c.l.b16 %v958
        %v1247 = vunpack.c.l.b16 %v959
        %v1248 = vunpack.c.l.b16 %v960
        %v1249 = vunpack.c.l.b16 %v961
        %v1250 = vunpack.c.l.b16 %v962
        %v1251 = vunpack.c.l.b16 %v963
        %v1252 = vunpack.c.l.b16 %v964
        %v1253 = vunpack.c.l.b16 %v965
        %v1254 = vunpack.c.l.b16 %v966
        %v1255 = vunpack.c.l.b16 %v967
        %v1256 = vunpack.c.l.b16 %v968
        %v1257 = vunpack.c.l.b16 %v969
        %v1258 = vunpack.c.l.b16 %v970
        %v1259 = vunpack.c.l.b16 %v971
        %v1260 = vunpack.c.l.b16 %v972
        %v1261 = vunpack.c.l.b16 %v973
        %v1262 = vunpack.c.l.b16 %v974
        %v1263 = vunpack.c.l.b16 %v975
        %v1264 = vunpack.c.l.b16 %v976
        %v1265 = vpack.c.b16 %v1122, %v1121
        %v1266 = vpack.c.b16 %v1124, %v1123
        %v1267 = vpack.c.b16 %v1126, %v1125
        %v1268 = vpack.c.b16 %v1128, %v1127
        %v1269 = vpack.c.b16 %v1130, %v1129
        %v1270 = vpack.c.b16 %v1132, %v1131
        %v1271 = vpack.c.b16 %v1134, %v1133
        %v1272 = vpack.c.b16 %v1136, %v1135
        %v1273 = vpack.c.b16 %v1138, %v1137
        %v1274 = vpack.c.b16 %v1140, %v1139
        %v1275 = vpack.c.b16 %v1142, %v1141
        %v1276 = vpack.c.b16 %v1144, %v1143
        %v1277 = vpack.c.b16 %v1146, %v1145
        %v1278 = vpack.c.b16 %v1148, %v1147
        %v1279 = vpack.c.b16 %v1150, %v1149
        %v1280 = vpack.c.b16 %v1152, %v1151
        %v1281 = vpack.c.b16 %v1154, %v1153
        %v1282 = vpack.c.b16 %v1156, %v1155
        %v1283 = vpack.c.b16 %v1158, %v1157
        %v1284 = vpack.c.b16 %v1160, %v1159
        %v1285 = vpack.c.b16 %v1162, %v1161
        %v1286 = vpack.c.b16 %v1164, %v1163
        %v1287 = vpack.c.b16 %v1166, %v1165
        %v1288 = vpack.c.b16 %v1168, %v1167
        %v1289 = vpack.c.b16 %v1170, %v1169
        %v1290 = vpack.c.b16 %v1172, %v1171
        %v1291 = vpack.c.b16 %v1174, %v1173
        %v1292 = vpack.c.b16 %v1176, %v1175
        %v1293 = vpack.c.b16 %v1178, %v1177
        %v1294 = vpack.c.b16 %v1180, %v1179
        %v1295 = vpack.c.b16 %v1182, %v1181
        %v1296 = vpack.c.b16 %v1184, %v1183
        %v1297 = vpack.c.b16 %v1186, %v1185
        %v1298 = vpack.c.b16 %v1188, %v1187
        %v1299 = vpack.c.b16 %v1190, %v1189
        %v1300 = vpack.c.b16 %v1192, %v1191
        %v1301 = vpack.c.b16 %v1194, %v1193
        %v1302 = vpack.c.b16 %v1196, %v1195
        %v1303 = vpack.c.b16 %v1198, %v1197
        %v1304 = vpack.c.b16 %v1200, %v1199
        %v1305 = vpack.c.b16 %v1202, %v1201
        %v1306 = vpack.c.b16 %v1204, %v1203
        %v1307 = vpack.c.b16 %v1206, %v1205
        %v1308 = vpack.c.b16 %v1208, %v1207
        %v1309 = vpack.c.b16 %v1210, %v1209
        %v1310 = vpack.c.b16 %v1212, %v1211
        %v1311 = vpack.c.b16 %v1214, %v1213
        %v1312 = vpack.c.b16 %v1216, %v1215
        %v1313 = vpack.c.b16 %v1218, %v1217
        %v1314 = vpack.c.b16 %v1220, %v1219
        %v1315 = vpack.c.b16 %v1222, %v1221
        %v1316 = vpack.c.b16 %v1224, %v1223
        %v1317 = vpack.c.b16 %v1226, %v1225
        %v1318 = vpack.c.b16 %v1228, %v1227
        %v1319 = vpack.c.b16 %v1230, %v1229
        %v1320 = vpack.c.b16 %v1232, %v1231
        %v1321 = vpack.c.b16 %v1234, %v1233
        %v1322 = vpack.c.b16 %v1236, %v1235
        %v1323 = vpack.c.b16 %v1238, %v1237
        %v1324 = vpack.c.b16 %v1240, %v1239
        %v1325 = vpack.c.b16 %v1242, %v1241
        %v1326 = vpack.c.b16 %v1244, %v1243
        %v1327 = vpack.c.b16 %v1246, %v1245
        %v1328 = vpack.c.b16 %v1248, %v1247
        %v1329 = vpack.c.b16 %v1250, %v1249
        %v1330 = vpack.c.b16 %v1252, %v1251
        %v1331 = vpack.c.b16 %v1254, %v1253
        %v1332 = vpack.c.b16 %v1256, %v1255
        %v1333 = vpack.c.b16 %v1258, %v1257
        %v1334 = vpack.c.b16 %v1260, %v1259
        %v1335 = vpack.c.b16 %v1262, %v1261
        %v1336 = vpack.c.b16 %v1264, %v1263
        %1409 = vmatprep.subr.bf16.mxu0 0
        %1410 = vmatpush1.bf16.msra.mxu0 %v1265
        %1411 = vmatprep.subr.bf16.mxu0 0
        %1412 = vmatpush1.bf16.msra.mxu0 %v1266
        %1413 = vmatprep.subr.bf16.mxu0 0
        %1414 = vmatpush1.bf16.msra.mxu0 %v1267
        %1415 = vmatprep.subr.bf16.mxu0 0
        %1416 = vmatpush1.bf16.msra.mxu0 %v1268
        %1417 = vmatprep.subr.bf16.mxu0 0
        %1418 = vmatpush1.bf16.msra.mxu0 %v1269
        %1419 = vmatprep.subr.bf16.mxu0 0
        %1420 = vmatpush1.bf16.msra.mxu0 %v1270
        %1421 = vmatprep.subr.bf16.mxu0 0
        %1422 = vmatpush1.bf16.msra.mxu0 %v1271
        %1423 = vmatprep.subr.bf16.mxu0 0
        %1424 = vmatpush1.bf16.msra.mxu0 %v1272
        %1425 = vmatprep.subr.bf16.mxu0 0
        %1426 = vmatpush1.bf16.msra.mxu0 %v1273
        %1427 = vmatprep.subr.bf16.mxu0 0
        %1428 = vmatpush1.bf16.msra.mxu0 %v1274
        %1429 = vmatprep.subr.bf16.mxu0 0
        %1430 = vmatpush1.bf16.msra.mxu0 %v1275
        %1431 = vmatprep.subr.bf16.mxu0 0
        %1432 = vmatpush1.bf16.msra.mxu0 %v1276
        %1433 = vmatprep.subr.bf16.mxu0 0
        %1434 = vmatpush1.bf16.msra.mxu0 %v1277
        %1435 = vmatprep.subr.bf16.mxu0 0
        %1436 = vmatpush1.bf16.msra.mxu0 %v1278
        %1437 = vmatprep.subr.bf16.mxu0 0
        %1438 = vmatpush1.bf16.msra.mxu0 %v1279
        %1439 = vmatprep.subr.bf16.mxu0 0
        %1440 = vmatpush1.bf16.msra.mxu0 %v1280
        %1441 = vmatprep.mubr.bf16.mxu0 %v483
        %1442 = vmatmul.mubr.bf16.gmra.mrb[0].mxu0 %v381
        %v1443 = vpop.f32.mrb[0].mxu0
        %v1444 = vadd.f32 0.0, %v1443
        %v1445 = vpop.f32.mrb[0].mxu0
        %v1446 = vpop.f32.mrb[0].mxu0
        %v1447 = vadd.f32 0.0, %v1446
        %v1448 = vpop.f32.mrb[0].mxu0
        %1449 = vmatprep.mubr.bf16.mxu0 %v495
        %1450 = vmatmul.mubr.bf16.gmra.mrb[0].mxu0 %v382
        %v1451 = vpop.f32.mrb[0].mxu0
        %v1452 = vadd.f32 0.0, %v1451
        %v1453 = vpop.f32.mrb[0].mxu0
        %v1454 = vpop.f32.mrb[0].mxu0
        %v1455 = vadd.f32 0.0, %v1454
        %v1456 = vpop.f32.mrb[0].mxu0
        %1457 = vmatprep.mubr.bf16.mxu0 %v507
        %1458 = vmatmul.mubr.bf16.gmra.mrb[0].mxu0 %v383
        %v1459 = vpop.f32.mrb[0].mxu0
        %v1460 = vadd.f32 0.0, %v1459
        %v1461 = vpop.f32.mrb[0].mxu0
        %v1462 = vpop.f32.mrb[0].mxu0
        %v1463 = vadd.f32 0.0, %v1462
        %v1464 = vpop.f32.mrb[0].mxu0
        %1465 = vmatprep.mubr.bf16.mxu0 %v519
        %1466 = vmatmul.mubr.bf16.gmra.mrb[0].mxu0 %v384
        %v1467 = vpop.f32.mrb[0].mxu0
        %v1468 = vadd.f32 0.0, %v1467
        %v1469 = vpop.f32.mrb[0].mxu0
        %v1470 = vpop.f32.mrb[0].mxu0
        %v1471 = vadd.f32 0.0, %v1470
        %v1472 = vpop.f32.mrb[0].mxu0
        %1473 = vmatprep.mubr.bf16.mxu0 %v531
        %1474 = vmatmul.mubr.bf16.gmra.mrb[0].mxu0 %v385
        %v1475 = vpop.f32.mrb[0].mxu0
        %v1476 = vadd.f32 0.0, %v1475
        %v1477 = vpop.f32.mrb[0].mxu0
        %v1478 = vpop.f32.mrb[0].mxu0
        %v1479 = vadd.f32 0.0, %v1478
        %v1480 = vpop.f32.mrb[0].mxu0
        %1481 = vmatprep.mubr.bf16.mxu0 %v543
        %1482 = vmatmul.mubr.bf16.gmra.mrb[0].mxu0 %v386
        %v1483 = vpop.f32.mrb[0].mxu0
        %v1484 = vadd.f32 0.0, %v1483
        %v1485 = vpop.f32.mrb[0].mxu0
        %v1486 = vpop.f32.mrb[0].mxu0
        %v1487 = vadd.f32 0.0, %v1486
        %v1488 = vpop.f32.mrb[0].mxu0
        %1489 = vmatprep.mubr.bf16.mxu0 %v555
        %1490 = vmatmul.mubr.bf16.gmra.mrb[0].mxu0 %v387
        %v1491 = vpop.f32.mrb[0].mxu0
        %v1492 = vadd.f32 0.0, %v1491
        %v1493 = vpop.f32.mrb[0].mxu0
        %v1494 = vpop.f32.mrb[0].mxu0
        %v1495 = vadd.f32 0.0, %v1494
        %v1496 = vpop.f32.mrb[0].mxu0
        %1497 = vmatprep.mubr.bf16.mxu0 %v567
        %1498 = vmatmul.mubr.bf16.gmra.mrb[0].mxu0 %v388
        %v1499 = vpop.f32.mrb[0].mxu0
        %v1500 = vadd.f32 0.0, %v1499
        %v1501 = vpop.f32.mrb[0].mxu0
        %v1502 = vpop.f32.mrb[0].mxu0
        %v1503 = vadd.f32 0.0, %v1502
        %v1504 = vpop.f32.mrb[0].mxu0
        %1505 = vmatprep.mubr.bf16.mxu0 %v579
        %1506 = vmatmul.mubr.bf16.gmra.mrb[0].mxu0 %v389
        %v1507 = vpop.f32.mrb[0].mxu0
        %v1508 = vadd.f32 0.0, %v1507
        %v1509 = vpop.f32.mrb[0].mxu0
        %v1510 = vpop.f32.mrb[0].mxu0
        %v1511 = vadd.f32 0.0, %v1510
        %v1512 = vpop.f32.mrb[0].mxu0
        %1513 = vmatprep.mubr.bf16.mxu0 %v591
        %1514 = vmatmul.mubr.bf16.gmra.mrb[0].mxu0 %v390
        %v1515 = vpop.f32.mrb[0].mxu0
        %v1516 = vadd.f32 0.0, %v1515
        %v1517 = vpop.f32.mrb[0].mxu0
        %v1518 = vpop.f32.mrb[0].mxu0
        %v1519 = vadd.f32 0.0, %v1518
        %v1520 = vpop.f32.mrb[0].mxu0
        %1521 = vmatprep.mubr.bf16.mxu0 %v603
        %1522 = vmatmul.mubr.bf16.gmra.mrb[0].mxu0 %v391
        %v1523 = vpop.f32.mrb[0].mxu0
        %v1524 = vadd.f32 0.0, %v1523
        %v1525 = vpop.f32.mrb[0].mxu0
        %v1526 = vpop.f32.mrb[0].mxu0
        %v1527 = vadd.f32 0.0, %v1526
        %v1528 = vpop.f32.mrb[0].mxu0
        %1529 = vmatprep.mubr.bf16.mxu0 %v615
        %1530 = vmatmul.mubr.bf16.gmra.mrb[0].mxu0 %v392
        %v1531 = vpop.f32.mrb[0].mxu0
        %v1532 = vadd.f32 0.0, %v1531
        %v1533 = vpop.f32.mrb[0].mxu0
        %v1534 = vpop.f32.mrb[0].mxu0
        %v1535 = vadd.f32 0.0, %v1534
        %v1536 = vpop.f32.mrb[0].mxu0
        %1537 = vmatprep.mubr.bf16.mxu0 %v627
        %1538 = vmatmul.mubr.bf16.gmra.mrb[0].mxu0 %v393
        %v1539 = vpop.f32.mrb[0].mxu0
        %v1540 = vadd.f32 0.0, %v1539
        %v1541 = vpop.f32.mrb[0].mxu0
        %v1542 = vpop.f32.mrb[0].mxu0
        %v1543 = vadd.f32 0.0, %v1542
        %v1544 = vpop.f32.mrb[0].mxu0
        %1545 = vmatprep.mubr.bf16.mxu0 %v639
        %1546 = vmatmul.mubr.bf16.gmra.mrb[0].mxu0 %v394
        %v1547 = vpop.f32.mrb[0].mxu0
        %v1548 = vadd.f32 0.0, %v1547
        %v1549 = vpop.f32.mrb[0].mxu0
        %v1550 = vpop.f32.mrb[0].mxu0
        %v1551 = vadd.f32 0.0, %v1550
        %v1552 = vpop.f32.mrb[0].mxu0
        %1553 = vmatprep.mubr.bf16.mxu0 %v651
        %1554 = vmatmul.mubr.bf16.gmra.mrb[0].mxu0 %v395
        %v1555 = vpop.f32.mrb[0].mxu0
        %v1556 = vadd.f32 0.0, %v1555
        %v1557 = vpop.f32.mrb[0].mxu0
        %v1558 = vpop.f32.mrb[0].mxu0
        %v1559 = vadd.f32 0.0, %v1558
        %v1560 = vpop.f32.mrb[0].mxu0
        %1561 = vmatprep.mubr.bf16.mxu0 %v663
        %1562 = vmatmul.mubr.bf16.gmra.mrb[0].mxu0 %v396
        %v1563 = vpop.f32.mrb[0].mxu0
        %v1564 = vadd.f32 0.0, %v1563
        %v1565 = vpop.f32.mrb[0].mxu0
        %v1566 = vpop.f32.mrb[0].mxu0
        %v1567 = vadd.f32 0.0, %v1566
        %v1568 = vpop.f32.mrb[0].mxu0
        %1569 = vdwg.mxu0
        %1570 = vmatprep.subr.bf16.mxu0 0
        %1571 = vmatpush1.bf16.msra.mxu0 %v1281
        %1572 = vmatprep.subr.bf16.mxu0 0
        %1573 = vmatpush1.bf16.msra.mxu0 %v1282
        %1574 = vmatprep.subr.bf16.mxu0 0
        %1575 = vmatpush1.bf16.msra.mxu0 %v1283
        %1576 = vmatprep.subr.bf16.mxu0 0
        %1577 = vmatpush1.bf16.msra.mxu0 %v1284
        %1578 = vmatprep.subr.bf16.mxu0 0
        %1579 = vmatpush1.bf16.msra.mxu0 %v1285
        %1580 = vmatprep.subr.bf16.mxu0 0
        %1581 = vmatpush1.bf16.msra.mxu0 %v1286
        %1582 = vmatprep.subr.bf16.mxu0 0
        %1583 = vmatpush1.bf16.msra.mxu0 %v1287
        %1584 = vmatprep.subr.bf16.mxu0 0
        %1585 = vmatpush1.bf16.msra.mxu0 %v1288
        %1586 = vmatprep.subr.bf16.mxu0 0
        %1587 = vmatpush1.bf16.msra.mxu0 %v1289
        %1588 = vmatprep.subr.bf16.mxu0 0
        %1589 = vmatpush1.bf16.msra.mxu0 %v1290
        %1590 = vmatprep.subr.bf16.mxu0 0
        %1591 = vmatpush1.bf16.msra.mxu0 %v1291
        %1592 = vmatprep.subr.bf16.mxu0 0
        %1593 = vmatpush1.bf16.msra.mxu0 %v1292
        %1594 = vmatprep.subr.bf16.mxu0 0
        %1595 = vmatpush1.bf16.msra.mxu0 %v1293
        %1596 = vmatprep.subr.bf16.mxu0 0
        %1597 = vmatpush1.bf16.msra.mxu0 %v1294
        %1598 = vmatprep.subr.bf16.mxu0 0
        %1599 = vmatpush1.bf16.msra.mxu0 %v1295
        %1600 = vmatprep.subr.bf16.mxu0 0
        %1601 = vmatpush1.bf16.msra.mxu0 %v1296
        %1602 = vmatprep.mubr.bf16.mxu0 %v382
        %1603 = vmatmul.mubr.bf16.gmra.mrb[0].mxu0 %v763
        %v1604 = vpop.f32.mrb[0].mxu0
        %v1605 = vadd.f32 %v1444, %v1604
        %v1606 = vpop.f32.mrb[0].mxu0
        %v1607 = vpop.f32.mrb[0].mxu0
        %v1608 = vadd.f32 %v1447, %v1607
        %v1609 = vpop.f32.mrb[0].mxu0
        %1610 = vmatprep.mubr.bf16.mxu0 %v383
        %1611 = vmatmul.mubr.bf16.gmra.mrb[0].mxu0 %v766
        %v1612 = vpop.f32.mrb[0].mxu0
        %v1613 = vadd.f32 %v1452, %v1612
        %v1614 = vpop.f32.mrb[0].mxu0
        %v1615 = vpop.f32.mrb[0].mxu0
        %v1616 = vadd.f32 %v1455, %v1615
        %v1617 = vpop.f32.mrb[0].mxu0
        %1618 = vmatprep.mubr.bf16.mxu0 %v384
        %1619 = vmatmul.mubr.bf16.gmra.mrb[0].mxu0 %v769
        %v1620 = vpop.f32.mrb[0].mxu0
        %v1621 = vadd.f32 %v1460, %v1620
        %v1622 = vpop.f32.mrb[0].mxu0
        %v1623 = vpop.f32.mrb[0].mxu0
        %v1624 = vadd.f32 %v1463, %v1623
        %v1625 = vpop.f32.mrb[0].mxu0
        %1626 = vmatprep.mubr.bf16.mxu0 %v385
        %1627 = vmatmul.mubr.bf16.gmra.mrb[0].mxu0 %v772
        %v1628 = vpop.f32.mrb[0].mxu0
        %v1629 = vadd.f32 %v1468, %v1628
        %v1630 = vpop.f32.mrb[0].mxu0
        %v1631 = vpop.f32.mrb[0].mxu0
        %v1632 = vadd.f32 %v1471, %v1631
        %v1633 = vpop.f32.mrb[0].mxu0
        %1634 = vmatprep.mubr.bf16.mxu0 %v386
        %1635 = vmatmul.mubr.bf16.gmra.mrb[0].mxu0 %v775
        %v1636 = vpop.f32.mrb[0].mxu0
        %v1637 = vadd.f32 %v1476, %v1636
        %v1638 = vpop.f32.mrb[0].mxu0
        %v1639 = vpop.f32.mrb[0].mxu0
        %v1640 = vadd.f32 %v1479, %v1639
        %v1641 = vpop.f32.mrb[0].mxu0
        %1642 = vmatprep.mubr.bf16.mxu0 %v387
        %1643 = vmatmul.mubr.bf16.gmra.mrb[0].mxu0 %v778
        %v1644 = vpop.f32.mrb[0].mxu0
        %v1645 = vadd.f32 %v1484, %v1644
        %v1646 = vpop.f32.mrb[0].mxu0
        %v1647 = vpop.f32.mrb[0].mxu0
        %v1648 = vadd.f32 %v1487, %v1647
        %v1649 = vpop.f32.mrb[0].mxu0
        %1650 = vmatprep.mubr.bf16.mxu0 %v388
        %1651 = vmatmul.mubr.bf16.gmra.mrb[0].mxu0 %v781
        %v1652 = vpop.f32.mrb[0].mxu0
        %v1653 = vadd.f32 %v1492, %v1652
        %v1654 = vpop.f32.mrb[0].mxu0
        %v1655 = vpop.f32.mrb[0].mxu0
        %v1656 = vadd.f32 %v1495, %v1655
        %v1657 = vpop.f32.mrb[0].mxu0
        %1658 = vmatprep.mubr.bf16.mxu0 %v389
        %1659 = vmatmul.mubr.bf16.gmra.mrb[0].mxu0 %v784
        %v1660 = vpop.f32.mrb[0].mxu0
        %v1661 = vadd.f32 %v1500, %v1660
        %v1662 = vpop.f32.mrb[0].mxu0
        %v1663 = vpop.f32.mrb[0].mxu0
        %v1664 = vadd.f32 %v1503, %v1663
        %v1665 = vpop.f32.mrb[0].mxu0
        %1666 = vmatprep.mubr.bf16.mxu0 %v390
        %1667 = vmatmul.mubr.bf16.gmra.mrb[0].mxu0 %v787
        %v1668 = vpop.f32.mrb[0].mxu0
        %v1669 = vadd.f32 %v1508, %v1668
        %v1670 = vpop.f32.mrb[0].mxu0
        %v1671 = vpop.f32.mrb[0].mxu0
        %v1672 = vadd.f32 %v1511, %v1671
        %v1673 = vpop.f32.mrb[0].mxu0
        %1674 = vmatprep.mubr.bf16.mxu0 %v391
        %1675 = vmatmul.mubr.bf16.gmra.mrb[0].mxu0 %v790
        %v1676 = vpop.f32.mrb[0].mxu0
        %v1677 = vadd.f32 %v1516, %v1676
        %v1678 = vpop.f32.mrb[0].mxu0
        %v1679 = vpop.f32.mrb[0].mxu0
        %v1680 = vadd.f32 %v1519, %v1679
        %v1681 = vpop.f32.mrb[0].mxu0
        %1682 = vmatprep.mubr.bf16.mxu0 %v392
        %1683 = vmatmul.mubr.bf16.gmra.mrb[0].mxu0 %v793
        %v1684 = vpop.f32.mrb[0].mxu0
        %v1685 = vadd.f32 %v1524, %v1684
        %v1686 = vpop.f32.mrb[0].mxu0
        %v1687 = vpop.f32.mrb[0].mxu0
        %v1688 = vadd.f32 %v1527, %v1687
        %v1689 = vpop.f32.mrb[0].mxu0
        %1690 = vmatprep.mubr.bf16.mxu0 %v393
        %1691 = vmatmul.mubr.bf16.gmra.mrb[0].mxu0 %v796
        %v1692 = vpop.f32.mrb[0].mxu0
        %v1693 = vadd.f32 %v1532, %v1692
        %v1694 = vpop.f32.mrb[0].mxu0
        %v1695 = vpop.f32.mrb[0].mxu0
        %v1696 = vadd.f32 %v1535, %v1695
        %v1697 = vpop.f32.mrb[0].mxu0
        %1698 = vmatprep.mubr.bf16.mxu0 %v394
        %1699 = vmatmul.mubr.bf16.gmra.mrb[0].mxu0 %v799
        %v1700 = vpop.f32.mrb[0].mxu0
        %v1701 = vadd.f32 %v1540, %v1700
        %v1702 = vpop.f32.mrb[0].mxu0
        %v1703 = vpop.f32.mrb[0].mxu0
        %v1704 = vadd.f32 %v1543, %v1703
        %v1705 = vpop.f32.mrb[0].mxu0
        %1706 = vmatprep.mubr.bf16.mxu0 %v395
        %1707 = vmatmul.mubr.bf16.gmra.mrb[0].mxu0 %v802
        %v1708 = vpop.f32.mrb[0].mxu0
        %v1709 = vadd.f32 %v1548, %v1708
        %v1710 = vpop.f32.mrb[0].mxu0
        %v1711 = vpop.f32.mrb[0].mxu0
        %v1712 = vadd.f32 %v1551, %v1711
        %v1713 = vpop.f32.mrb[0].mxu0
        %1714 = vmatprep.mubr.bf16.mxu0 %v396
        %1715 = vmatmul.mubr.bf16.gmra.mrb[0].mxu0 %v805
        %v1716 = vpop.f32.mrb[0].mxu0
        %v1717 = vadd.f32 %v1556, %v1716
        %v1718 = vpop.f32.mrb[0].mxu0
        %v1719 = vpop.f32.mrb[0].mxu0
        %v1720 = vadd.f32 %v1559, %v1719
        %v1721 = vpop.f32.mrb[0].mxu0
        %1722 = vmatprep.mubr.bf16.mxu0 %v397
        %1723 = vmatmul.mubr.bf16.gmra.mrb[0].mxu0 %v808
        %v1724 = vpop.f32.mrb[0].mxu0
        %v1725 = vadd.f32 %v1564, %v1724
        %v1726 = vpop.f32.mrb[0].mxu0
        %v1727 = vpop.f32.mrb[0].mxu0
        %v1728 = vadd.f32 %v1567, %v1727
        %v1729 = vpop.f32.mrb[0].mxu0
        %1730 = vdwg.mxu0
        %1731 = vmatprep.subr.bf16.mxu0 0
        %1732 = vmatpush1.bf16.msra.mxu0 %v1297
        %1733 = vmatprep.subr.bf16.mxu0 0
        %1734 = vmatpush1.bf16.msra.mxu0 %v1298
        %1735 = vmatprep.subr.bf16.mxu0 0
        %1736 = vmatpush1.bf16.msra.mxu0 %v1299
        %1737 = vmatprep.subr.bf16.mxu0 0
        %1738 = vmatpush1.bf16.msra.mxu0 %v1300
        %1739 = vmatprep.subr.bf16.mxu0 0
        %1740 = vmatpush1.bf16.msra.mxu0 %v1301
        %1741 = vmatprep.subr.bf16.mxu0 0
        %1742 = vmatpush1.bf16.msra.mxu0 %v1302
        %1743 = vmatprep.subr.bf16.mxu0 0
        %1744 = vmatpush1.bf16.msra.mxu0 %v1303
        %1745 = vmatprep.subr.bf16.mxu0 0
        %1746 = vmatpush1.bf16.msra.mxu0 %v1304
        %1747 = vmatprep.subr.bf16.mxu0 0
        %1748 = vmatpush1.bf16.msra.mxu0 %v1305
        %1749 = vmatprep.subr.bf16.mxu0 0
        %1750 = vmatpush1.bf16.msra.mxu0 %v1306
        %1751 = vmatprep.subr.bf16.mxu0 0
        %1752 = vmatpush1.bf16.msra.mxu0 %v1307
        %1753 = vmatprep.subr.bf16.mxu0 0
        %1754 = vmatpush1.bf16.msra.mxu0 %v1308
        %1755 = vmatprep.subr.bf16.mxu0 0
        %1756 = vmatpush1.bf16.msra.mxu0 %v1309
        %1757 = vmatprep.subr.bf16.mxu0 0
        %1758 = vmatpush1.bf16.msra.mxu0 %v1310
        %1759 = vmatprep.subr.bf16.mxu0 0
        %1760 = vmatpush1.bf16.msra.mxu0 %v1311
        %1761 = vmatprep.subr.bf16.mxu0 0
        %1762 = vmatpush1.bf16.msra.mxu0 %v1312
        %1763 = vmatprep.mubr.bf16.mxu0 %v766
        %1764 = vmatmul.mubr.bf16.gmra.mrb[0].mxu0 %v495
        %v1765 = vpop.f32.mrb[0].mxu0
        %v1766 = vadd.f32 %v1605, %v1765
        %v1767 = vpop.f32.mrb[0].mxu0
        %v1768 = vpop.f32.mrb[0].mxu0
        %v1769 = vadd.f32 %v1608, %v1768
        %v1770 = vpop.f32.mrb[0].mxu0
        %1771 = vmatprep.mubr.bf16.mxu0 %v769
        %1772 = vmatmul.mubr.bf16.gmra.mrb[0].mxu0 %v507
        %v1773 = vpop.f32.mrb[0].mxu0
        %v1774 = vadd.f32 %v1613, %v1773
        %v1775 = vpop.f32.mrb[0].mxu0
        %v1776 = vpop.f32.mrb[0].mxu0
        %v1777 = vadd.f32 %v1616, %v1776
        %v1778 = vpop.f32.mrb[0].mxu0
        %1779 = vmatprep.mubr.bf16.mxu0 %v772
        %1780 = vmatmul.mubr.bf16.gmra.mrb[0].mxu0 %v519
        %v1781 = vpop.f32.mrb[0].mxu0
        %v1782 = vadd.f32 %v1621, %v1781
        %v1783 = vpop.f32.mrb[0].mxu0
        %v1784 = vpop.f32.mrb[0].mxu0
        %v1785 = vadd.f32 %v1624, %v1784
        %v1786 = vpop.f32.mrb[0].mxu0
        %1787 = vmatprep.mubr.bf16.mxu0 %v775
        %1788 = vmatmul.mubr.bf16.gmra.mrb[0].mxu0 %v531
        %v1789 = vpop.f32.mrb[0].mxu0
        %v1790 = vadd.f32 %v1629, %v1789
        %v1791 = vpop.f32.mrb[0].mxu0
        %v1792 = vpop.f32.mrb[0].mxu0
        %v1793 = vadd.f32 %v1632, %v1792
        %v1794 = vpop.f32.mrb[0].mxu0
        %1795 = vmatprep.mubr.bf16.mxu0 %v778
        %1796 = vmatmul.mubr.bf16.gmra.mrb[0].mxu0 %v543
        %v1797 = vpop.f32.mrb[0].mxu0
        %v1798 = vadd.f32 %v1637, %v1797
        %v1799 = vpop.f32.mrb[0].mxu0
        %v1800 = vpop.f32.mrb[0].mxu0
        %v1801 = vadd.f32 %v1640, %v1800
        %v1802 = vpop.f32.mrb[0].mxu0
        %1803 = vmatprep.mubr.bf16.mxu0 %v781
        %1804 = vmatmul.mubr.bf16.gmra.mrb[0].mxu0 %v555
        %v1805 = vpop.f32.mrb[0].mxu0
        %v1806 = vadd.f32 %v1645, %v1805
        %v1807 = vpop.f32.mrb[0].mxu0
        %v1808 = vpop.f32.mrb[0].mxu0
        %v1809 = vadd.f32 %v1648, %v1808
        %v1810 = vpop.f32.mrb[0].mxu0
        %1811 = vmatprep.mubr.bf16.mxu0 %v784
        %1812 = vmatmul.mubr.bf16.gmra.mrb[0].mxu0 %v567
        %v1813 = vpop.f32.mrb[0].mxu0
        %v1814 = vadd.f32 %v1653, %v1813
        %v1815 = vpop.f32.mrb[0].mxu0
        %v1816 = vpop.f32.mrb[0].mxu0
        %v1817 = vadd.f32 %v1656, %v1816
        %v1818 = vpop.f32.mrb[0].mxu0
        %1819 = vmatprep.mubr.bf16.mxu0 %v787
        %1820 = vmatmul.mubr.bf16.gmra.mrb[0].mxu0 %v579
        %v1821 = vpop.f32.mrb[0].mxu0
        %v1822 = vadd.f32 %v1661, %v1821
        %v1823 = vpop.f32.mrb[0].mxu0
        %v1824 = vpop.f32.mrb[0].mxu0
        %v1825 = vadd.f32 %v1664, %v1824
        %v1826 = vpop.f32.mrb[0].mxu0
        %1827 = vmatprep.mubr.bf16.mxu0 %v790
        %1828 = vmatmul.mubr.bf16.gmra.mrb[0].mxu0 %v591
        %v1829 = vpop.f32.mrb[0].mxu0
        %v1830 = vadd.f32 %v1669, %v1829
        %v1831 = vpop.f32.mrb[0].mxu0
        %v1832 = vpop.f32.mrb[0].mxu0
        %v1833 = vadd.f32 %v1672, %v1832
        %v1834 = vpop.f32.mrb[0].mxu0
        %1835 = vmatprep.mubr.bf16.mxu0 %v793
        %1836 = vmatmul.mubr.bf16.gmra.mrb[0].mxu0 %v603
        %v1837 = vpop.f32.mrb[0].mxu0
        %v1838 = vadd.f32 %v1677, %v1837
        %v1839 = vpop.f32.mrb[0].mxu0
        %v1840 = vpop.f32.mrb[0].mxu0
        %v1841 = vadd.f32 %v1680, %v1840
        %v1842 = vpop.f32.mrb[0].mxu0
        %1843 = vmatprep.mubr.bf16.mxu0 %v796
        %1844 = vmatmul.mubr.bf16.gmra.mrb[0].mxu0 %v615
        %v1845 = vpop.f32.mrb[0].mxu0
        %v1846 = vadd.f32 %v1685, %v1845
        %v1847 = vpop.f32.mrb[0].mxu0
        %v1848 = vpop.f32.mrb[0].mxu0
        %v1849 = vadd.f32 %v1688, %v1848
        %v1850 = vpop.f32.mrb[0].mxu0
        %1851 = vmatprep.mubr.bf16.mxu0 %v799
        %1852 = vmatmul.mubr.bf16.gmra.mrb[0].mxu0 %v627
        %v1853 = vpop.f32.mrb[0].mxu0
        %v1854 = vadd.f32 %v1693, %v1853
        %v1855 = vpop.f32.mrb[0].mxu0
        %v1856 = vpop.f32.mrb[0].mxu0
        %v1857 = vadd.f32 %v1696, %v1856
        %v1858 = vpop.f32.mrb[0].mxu0
        %1859 = vmatprep.mubr.bf16.mxu0 %v802
        %1860 = vmatmul.mubr.bf16.gmra.mrb[0].mxu0 %v639
        %v1861 = vpop.f32.mrb[0].mxu0
        %v1862 = vadd.f32 %v1701, %v1861
        %v1863 = vpop.f32.mrb[0].mxu0
        %v1864 = vpop.f32.mrb[0].mxu0
        %v1865 = vadd.f32 %v1704, %v1864
        %v1866 = vpop.f32.mrb[0].mxu0
        %1867 = vmatprep.mubr.bf16.mxu0 %v805
        %1868 = vmatmul.mubr.bf16.gmra.mrb[0].mxu0 %v651
        %v1869 = vpop.f32.mrb[0].mxu0
        %v1870 = vadd.f32 %v1709, %v1869
        %v1871 = vpop.f32.mrb[0].mxu0
        %v1872 = vpop.f32.mrb[0].mxu0
        %v1873 = vadd.f32 %v1712, %v1872
        %v1874 = vpop.f32.mrb[0].mxu0
        %1875 = vmatprep.mubr.bf16.mxu0 %v808
        %1876 = vmatmul.mubr.bf16.gmra.mrb[0].mxu0 %v663
        %v1877 = vpop.f32.mrb[0].mxu0
        %v1878 = vadd.f32 %v1717, %v1877
        %v1879 = vpop.f32.mrb[0].mxu0
        %v1880 = vpop.f32.mrb[0].mxu0
        %v1881 = vadd.f32 %v1720, %v1880
        %v1882 = vpop.f32.mrb[0].mxu0
        %1883 = vmatprep.mubr.bf16.mxu0 %v811
        %1884 = vmatmul.mubr.bf16.gmra.mrb[0].mxu0 %v675
        %v1885 = vpop.f32.mrb[0].mxu0
        %v1886 = vadd.f32 %v1725, %v1885
        %v1887 = vpop.f32.mrb[0].mxu0
        %v1888 = vpop.f32.mrb[0].mxu0
        %v1889 = vadd.f32 %v1728, %v1888
        %v1890 = vpop.f32.mrb[0].mxu0
        %1891 = vdwg.mxu0
        %1892 = vmatprep.subr.bf16.mxu0 0
        %1893 = vmatpush1.bf16.msra.mxu0 %v1313
        %1894 = vmatprep.subr.bf16.mxu0 0
        %1895 = vmatpush1.bf16.msra.mxu0 %v1314
        %1896 = vmatprep.subr.bf16.mxu0 0
        %1897 = vmatpush1.bf16.msra.mxu0 %v1315
        %1898 = vmatprep.subr.bf16.mxu0 0
        %1899 = vmatpush1.bf16.msra.mxu0 %v1316
        %1900 = vmatprep.subr.bf16.mxu0 0
        %1901 = vmatpush1.bf16.msra.mxu0 %v1317
        %1902 = vmatprep.subr.bf16.mxu0 0
        %1903 = vmatpush1.bf16.msra.mxu0 %v1318
        %1904 = vmatprep.subr.bf16.mxu0 0
        %1905 = vmatpush1.bf16.msra.mxu0 %v1319
        %1906 = vmatprep.subr.bf16.mxu0 0
        %1907 = vmatpush1.bf16.msra.mxu0 %v1320
        %1908 = vmatprep.subr.bf16.mxu0 0
        %1909 = vmatpush1.bf16.msra.mxu0 %v1321
        %1910 = vmatprep.subr.bf16.mxu0 0
        %1911 = vmatpush1.bf16.msra.mxu0 %v1322
        %1912 = vmatprep.subr.bf16.mxu0 0
        %1913 = vmatpush1.bf16.msra.mxu0 %v1323
        %1914 = vmatprep.subr.bf16.mxu0 0
        %1915 = vmatpush1.bf16.msra.mxu0 %v1324
        %1916 = vmatprep.subr.bf16.mxu0 0
        %1917 = vmatpush1.bf16.msra.mxu0 %v1325
        %1918 = vmatprep.subr.bf16.mxu0 0
        %1919 = vmatpush1.bf16.msra.mxu0 %v1326
        %1920 = vmatprep.subr.bf16.mxu0 0
        %1921 = vmatpush1.bf16.msra.mxu0 %v1327
        %1922 = vmatprep.subr.bf16.mxu0 0
        %1923 = vmatpush1.bf16.msra.mxu0 %v1328
        %1924 = vmatprep.mubr.bf16.mxu0 %v507
        %1925 = vmatmul.mubr.bf16.gmra.mrb[0].mxu0 %v383
        %v1926 = vpop.f32.mrb[0].mxu0
        %v1927 = vadd.f32 %v1766, %v1926
        %v1928 = vpop.f32.mrb[0].mxu0
        %v1929 = vpop.f32.mrb[0].mxu0
        %v1930 = vadd.f32 %v1769, %v1929
        %v1931 = vpop.f32.mrb[0].mxu0
        %1932 = vmatprep.mubr.bf16.mxu0 %v519
        %1933 = vmatmul.mubr.bf16.gmra.mrb[0].mxu0 %v384
        %v1934 = vpop.f32.mrb[0].mxu0
        %v1935 = vadd.f32 %v1774, %v1934
        %v1936 = vpop.f32.mrb[0].mxu0
        %v1937 = vpop.f32.mrb[0].mxu0
        %v1938 = vadd.f32 %v1777, %v1937
        %v1939 = vpop.f32.mrb[0].mxu0
        %1940 = vmatprep.mubr.bf16.mxu0 %v531
        %1941 = vmatmul.mubr.bf16.gmra.mrb[0].mxu0 %v385
        %v1942 = vpop.f32.mrb[0].mxu0
        %v1943 = vadd.f32 %v1782, %v1942
        %v1944 = vpop.f32.mrb[0].mxu0
        %v1945 = vpop.f32.mrb[0].mxu0
        %v1946 = vadd.f32 %v1785, %v1945
        %v1947 = vpop.f32.mrb[0].mxu0
        %1948 = vmatprep.mubr.bf16.mxu0 %v543
        %1949 = vmatmul.mubr.bf16.gmra.mrb[0].mxu0 %v386
        %v1950 = vpop.f32.mrb[0].mxu0
        %v1951 = vadd.f32 %v1790, %v1950
        %v1952 = vpop.f32.mrb[0].mxu0
        %v1953 = vpop.f32.mrb[0].mxu0
        %v1954 = vadd.f32 %v1793, %v1953
        %v1955 = vpop.f32.mrb[0].mxu0
        %1956 = vmatprep.mubr.bf16.mxu0 %v555
        %1957 = vmatmul.mubr.bf16.gmra.mrb[0].mxu0 %v387
        %v1958 = vpop.f32.mrb[0].mxu0
        %v1959 = vadd.f32 %v1798, %v1958
        %v1960 = vpop.f32.mrb[0].mxu0
        %v1961 = vpop.f32.mrb[0].mxu0
        %v1962 = vadd.f32 %v1801, %v1961
        %v1963 = vpop.f32.mrb[0].mxu0
        %1964 = vmatprep.mubr.bf16.mxu0 %v567
        %1965 = vmatmul.mubr.bf16.gmra.mrb[0].mxu0 %v388
        %v1966 = vpop.f32.mrb[0].mxu0
        %v1967 = vadd.f32 %v1806, %v1966
        %v1968 = vpop.f32.mrb[0].mxu0
        %v1969 = vpop.f32.mrb[0].mxu0
        %v1970 = vadd.f32 %v1809, %v1969
        %v1971 = vpop.f32.mrb[0].mxu0
        %1972 = vmatprep.mubr.bf16.mxu0 %v579
        %1973 = vmatmul.mubr.bf16.gmra.mrb[0].mxu0 %v389
        %v1974 = vpop.f32.mrb[0].mxu0
        %v1975 = vadd.f32 %v1814, %v1974
        %v1976 = vpop.f32.mrb[0].mxu0
        %v1977 = vpop.f32.mrb[0].mxu0
        %v1978 = vadd.f32 %v1817, %v1977
        %v1979 = vpop.f32.mrb[0].mxu0
        %1980 = vmatprep.mubr.bf16.mxu0 %v591
        %1981 = vmatmul.mubr.bf16.gmra.mrb[0].mxu0 %v390
        %v1982 = vpop.f32.mrb[0].mxu0
        %v1983 = vadd.f32 %v1822, %v1982
        %v1984 = vpop.f32.mrb[0].mxu0
        %v1985 = vpop.f32.mrb[0].mxu0
        %v1986 = vadd.f32 %v1825, %v1985
        %v1987 = vpop.f32.mrb[0].mxu0
        %1988 = vmatprep.mubr.bf16.mxu0 %v603
        %1989 = vmatmul.mubr.bf16.gmra.mrb[0].mxu0 %v391
        %v1990 = vpop.f32.mrb[0].mxu0
        %v1991 = vadd.f32 %v1830, %v1990
        %v1992 = vpop.f32.mrb[0].mxu0
        %v1993 = vpop.f32.mrb[0].mxu0
        %v1994 = vadd.f32 %v1833, %v1993
        %v1995 = vpop.f32.mrb[0].mxu0
        %1996 = vmatprep.mubr.bf16.mxu0 %v615
        %1997 = vmatmul.mubr.bf16.gmra.mrb[0].mxu0 %v392
        %v1998 = vpop.f32.mrb[0].mxu0
        %v1999 = vadd.f32 %v1838, %v1998
        %v2000 = vpop.f32.mrb[0].mxu0
        %v2001 = vpop.f32.mrb[0].mxu0
        %v2002 = vadd.f32 %v1841, %v2001
        %v2003 = vpop.f32.mrb[0].mxu0
        %2004 = vmatprep.mubr.bf16.mxu0 %v627
        %2005 = vmatmul.mubr.bf16.gmra.mrb[0].mxu0 %v393
        %v2006 = vpop.f32.mrb[0].mxu0
        %v2007 = vadd.f32 %v1846, %v2006
        %v2008 = vpop.f32.mrb[0].mxu0
        %v2009 = vpop.f32.mrb[0].mxu0
        %v2010 = vadd.f32 %v1849, %v2009
        %v2011 = vpop.f32.mrb[0].mxu0
        %2012 = vmatprep.mubr.bf16.mxu0 %v639
        %2013 = vmatmul.mubr.bf16.gmra.mrb[0].mxu0 %v394
        %v2014 = vpop.f32.mrb[0].mxu0
        %v2015 = vadd.f32 %v1854, %v2014
        %v2016 = vpop.f32.mrb[0].mxu0
        %v2017 = vpop.f32.mrb[0].mxu0
        %v2018 = vadd.f32 %v1857, %v2017
        %v2019 = vpop.f32.mrb[0].mxu0
        %2020 = vmatprep.mubr.bf16.mxu0 %v651
        %2021 = vmatmul.mubr.bf16.gmra.mrb[0].mxu0 %v395
        %v2022 = vpop.f32.mrb[0].mxu0
        %v2023 = vadd.f32 %v1862, %v2022
        %v2024 = vpop.f32.mrb[0].mxu0
        %v2025 = vpop.f32.mrb[0].mxu0
        %v2026 = vadd.f32 %v1865, %v2025
        %v2027 = vpop.f32.mrb[0].mxu0
        %2028 = vmatprep.mubr.bf16.mxu0 %v663
        %2029 = vmatmul.mubr.bf16.gmra.mrb[0].mxu0 %v396
        %v2030 = vpop.f32.mrb[0].mxu0
        %v2031 = vadd.f32 %v1870, %v2030
        %v2032 = vpop.f32.mrb[0].mxu0
        %v2033 = vpop.f32.mrb[0].mxu0
        %v2034 = vadd.f32 %v1873, %v2033
        %v2035 = vpop.f32.mrb[0].mxu0
        %2036 = vmatprep.mubr.bf16.mxu0 %v675
        %2037 = vmatmul.mubr.bf16.gmra.mrb[0].mxu0 %v397
        %v2038 = vpop.f32.mrb[0].mxu0
        %v2039 = vadd.f32 %v1878, %v2038
        %v2040 = vpop.f32.mrb[0].mxu0
        %v2041 = vpop.f32.mrb[0].mxu0
        %v2042 = vadd.f32 %v1881, %v2041
        %v2043 = vpop.f32.mrb[0].mxu0
        %2044 = vmatprep.mubr.bf16.mxu0 %v687
        %2045 = vmatmul.mubr.bf16.gmra.mrb[0].mxu0 %v398
        %v2046 = vpop.f32.mrb[0].mxu0
        %v2047 = vadd.f32 %v1886, %v2046
        %v2048 = vpop.f32.mrb[0].mxu0
        %v2049 = vpop.f32.mrb[0].mxu0
        %v2050 = vadd.f32 %v1889, %v2049
        %v2051 = vpop.f32.mrb[0].mxu0
        %2052 = vdwg.mxu0
        %2053 = vmatprep.subr.bf16.mxu0 0
        %2054 = vmatpush1.bf16.msra.mxu0 %v1329
        %2055 = vmatprep.subr.bf16.mxu0 0
        %2056 = vmatpush1.bf16.msra.mxu0 %v1330
        %2057 = vmatprep.subr.bf16.mxu0 0
        %2058 = vmatpush1.bf16.msra.mxu0 %v1331
        %2059 = vmatprep.subr.bf16.mxu0 0
        %2060 = vmatpush1.bf16.msra.mxu0 %v1332
        %2061 = vmatprep.subr.bf16.mxu0 0
        %2062 = vmatpush1.bf16.msra.mxu0 %v1333
        %2063 = vmatprep.subr.bf16.mxu0 0
        %2064 = vmatpush1.bf16.msra.mxu0 %v1334
        %2065 = vmatprep.subr.bf16.mxu0 0
        %2066 = vmatpush1.bf16.msra.mxu0 %v1335
        %2067 = vmatprep.subr.bf16.mxu0 0
        %2068 = vmatpush1.bf16.msra.mxu0 %v1336
        %2069 = vmatprep.subr.bf16.mxu0 0
        %2070 = vmatpush1.bf16.msra.mxu0 0
        %2071 = vmatprep.subr.bf16.mxu0 0
        %2072 = vmatpush1.bf16.msra.mxu0 0
        %2073 = vmatprep.subr.bf16.mxu0 0
        %2074 = vmatpush1.bf16.msra.mxu0 0
        %2075 = vmatprep.subr.bf16.mxu0 0
        %2076 = vmatpush1.bf16.msra.mxu0 0
        %2077 = vmatprep.subr.bf16.mxu0 0
        %2078 = vmatpush1.bf16.msra.mxu0 0
        %2079 = vmatprep.subr.bf16.mxu0 0
        %2080 = vmatpush1.bf16.msra.mxu0 0
        %2081 = vmatprep.subr.bf16.mxu0 0
        %2082 = vmatpush1.bf16.msra.mxu0 0
        %2083 = vmatprep.subr.bf16.mxu0 0
        %2084 = vmatpush1.bf16.msra.mxu0 0
        %2085 = vmatprep.mubr.bf16.mxu0 0
        %2086 = vmatmul.mubr.bf16.gmra.mrb[0].mxu0 %v769
        %v2087 = vpop.f32.mrb[0].mxu0
        %v2088 = vadd.f32 %v1927, %v2087
        %v2089 = vpop.f32.mrb[0].mxu0
        %v2090 = vpop.f32.mrb[0].mxu0
        %v2091 = vadd.f32 %v1930, %v2090
        %v2092 = vpop.f32.mrb[0].mxu0
        %2093 = vmatprep.mubr.bf16.mxu0 0
        %2094 = vmatmul.mubr.bf16.gmra.mrb[0].mxu0 %v772
        %v2095 = vpop.f32.mrb[0].mxu0
        %v2096 = vadd.f32 %v1935, %v2095
        %v2097 = vpop.f32.mrb[0].mxu0
        %v2098 = vpop.f32.mrb[0].mxu0
        %v2099 = vadd.f32 %v1938, %v2098
        %v2100 = vpop.f32.mrb[0].mxu0
        %2101 = vmatprep.mubr.bf16.mxu0 0
        %2102 = vmatmul.mubr.bf16.gmra.mrb[0].mxu0 %v775
        %v2103 = vpop.f32.mrb[0].mxu0
        %v2104 = vadd.f32 %v1943, %v2103
        %v2105 = vpop.f32.mrb[0].mxu0
        %v2106 = vpop.f32.mrb[0].mxu0
        %v2107 = vadd.f32 %v1946, %v2106
        %v2108 = vpop.f32.mrb[0].mxu0
        %2109 = vmatprep.mubr.bf16.mxu0 0
        %2110 = vmatmul.mubr.bf16.gmra.mrb[0].mxu0 %v778
        %v2111 = vpop.f32.mrb[0].mxu0
        %v2112 = vadd.f32 %v1951, %v2111
        %v2113 = vpop.f32.mrb[0].mxu0
        %v2114 = vpop.f32.mrb[0].mxu0
        %v2115 = vadd.f32 %v1954, %v2114
        %v2116 = vpop.f32.mrb[0].mxu0
        %2117 = vmatprep.mubr.bf16.mxu0 0
        %2118 = vmatmul.mubr.bf16.gmra.mrb[0].mxu0 %v781
        %v2119 = vpop.f32.mrb[0].mxu0
        %v2120 = vadd.f32 %v1959, %v2119
        %v2121 = vpop.f32.mrb[0].mxu0
        %v2122 = vpop.f32.mrb[0].mxu0
        %v2123 = vadd.f32 %v1962, %v2122
        %v2124 = vpop.f32.mrb[0].mxu0
        %2125 = vmatprep.mubr.bf16.mxu0 0
        %2126 = vmatmul.mubr.bf16.gmra.mrb[0].mxu0 %v784
        %v2127 = vpop.f32.mrb[0].mxu0
        %v2128 = vadd.f32 %v1967, %v2127
        %v2129 = vpop.f32.mrb[0].mxu0
        %v2130 = vpop.f32.mrb[0].mxu0
        %v2131 = vadd.f32 %v1970, %v2130
        %v2132 = vpop.f32.mrb[0].mxu0
        %2133 = vmatprep.mubr.bf16.mxu0 0
        %2134 = vmatmul.mubr.bf16.gmra.mrb[0].mxu0 %v787
        %v2135 = vpop.f32.mrb[0].mxu0
        %v2136 = vadd.f32 %v1975, %v2135
        %v2137 = vpop.f32.mrb[0].mxu0
        %v2138 = vpop.f32.mrb[0].mxu0
        %v2139 = vadd.f32 %v1978, %v2138
        %v2140 = vpop.f32.mrb[0].mxu0
        %2141 = vmatprep.mubr.bf16.mxu0 0
        %2142 = vmatmul.mubr.bf16.gmra.mrb[0].mxu0 %v790
        %v2143 = vpop.f32.mrb[0].mxu0
        %v2144 = vadd.f32 %v1983, %v2143
        %v2145 = vpop.f32.mrb[0].mxu0
        %v2146 = vpop.f32.mrb[0].mxu0
        %v2147 = vadd.f32 %v1986, %v2146
        %v2148 = vpop.f32.mrb[0].mxu0
        %2149 = vmatprep.mubr.bf16.mxu0 0
        %2150 = vmatmul.mubr.bf16.gmra.mrb[0].mxu0 %v793
        %v2151 = vpop.f32.mrb[0].mxu0
        %v2152 = vadd.f32 %v1991, %v2151
        %v2153 = vpop.f32.mrb[0].mxu0
        %v2154 = vpop.f32.mrb[0].mxu0
        %v2155 = vadd.f32 %v1994, %v2154
        %v2156 = vpop.f32.mrb[0].mxu0
        %2157 = vmatprep.mubr.bf16.mxu0 0
        %2158 = vmatmul.mubr.bf16.gmra.mrb[0].mxu0 %v796
        %v2159 = vpop.f32.mrb[0].mxu0
        %v2160 = vadd.f32 %v1999, %v2159
        %v2161 = vpop.f32.mrb[0].mxu0
        %v2162 = vpop.f32.mrb[0].mxu0
        %v2163 = vadd.f32 %v2002, %v2162
        %v2164 = vpop.f32.mrb[0].mxu0
        %2165 = vmatprep.mubr.bf16.mxu0 0
        %2166 = vmatmul.mubr.bf16.gmra.mrb[0].mxu0 %v799
        %v2167 = vpop.f32.mrb[0].mxu0
        %v2168 = vadd.f32 %v2007, %v2167
        %v2169 = vpop.f32.mrb[0].mxu0
        %v2170 = vpop.f32.mrb[0].mxu0
        %v2171 = vadd.f32 %v2010, %v2170
        %v2172 = vpop.f32.mrb[0].mxu0
        %2173 = vmatprep.mubr.bf16.mxu0 0
        %2174 = vmatmul.mubr.bf16.gmra.mrb[0].mxu0 %v802
        %v2175 = vpop.f32.mrb[0].mxu0
        %v2176 = vadd.f32 %v2015, %v2175
        %v2177 = vpop.f32.mrb[0].mxu0
        %v2178 = vpop.f32.mrb[0].mxu0
        %v2179 = vadd.f32 %v2018, %v2178
        %v2180 = vpop.f32.mrb[0].mxu0
        %2181 = vmatprep.mubr.bf16.mxu0 0
        %2182 = vmatmul.mubr.bf16.gmra.mrb[0].mxu0 %v805
        %v2183 = vpop.f32.mrb[0].mxu0
        %v2184 = vadd.f32 %v2023, %v2183
        %v2185 = vpop.f32.mrb[0].mxu0
        %v2186 = vpop.f32.mrb[0].mxu0
        %v2187 = vadd.f32 %v2026, %v2186
        %v2188 = vpop.f32.mrb[0].mxu0
        %2189 = vmatprep.mubr.bf16.mxu0 0
        %2190 = vmatmul.mubr.bf16.gmra.mrb[0].mxu0 %v808
        %v2191 = vpop.f32.mrb[0].mxu0
        %v2192 = vadd.f32 %v2031, %v2191
        %v2193 = vpop.f32.mrb[0].mxu0
        %v2194 = vpop.f32.mrb[0].mxu0
        %v2195 = vadd.f32 %v2034, %v2194
        %v2196 = vpop.f32.mrb[0].mxu0
        %2197 = vmatprep.mubr.bf16.mxu0 0
        %2198 = vmatmul.mubr.bf16.gmra.mrb[0].mxu0 %v811
        %v2199 = vpop.f32.mrb[0].mxu0
        %v2200 = vadd.f32 %v2039, %v2199
        %v2201 = vpop.f32.mrb[0].mxu0
        %v2202 = vpop.f32.mrb[0].mxu0
        %v2203 = vadd.f32 %v2042, %v2202
        %v2204 = vpop.f32.mrb[0].mxu0
        %2205 = vmatprep.mubr.bf16.mxu0 0
        %2206 = vmatmul.mubr.bf16.gmra.mrb[0].mxu0 %v814
        %v2207 = vpop.f32.mrb[0].mxu0
        %v2208 = vadd.f32 %v2047, %v2207
        %v2209 = vpop.f32.mrb[0].mxu0
        %v2210 = vpop.f32.mrb[0].mxu0
        %v2211 = vadd.f32 %v2050, %v2210
        %v2212 = vpop.f32.mrb[0].mxu0
        %2213 = vdwg.mxu0
        %v2214 = vpack.c.bf16 %v2091, %v2088
        %v2215 = vpack.c.bf16 %v2099, %v2096
        %v2216 = vpack.c.bf16 %v2107, %v2104
        %v2217 = vpack.c.bf16 %v2115, %v2112
        %v2218 = vpack.c.bf16 %v2123, %v2120
        %v2219 = vpack.c.bf16 %v2131, %v2128
        %v2220 = vpack.c.bf16 %v2139, %v2136
        %v2221 = vpack.c.bf16 %v2147, %v2144
        %v2222 = vpack.c.bf16 %v2155, %v2152
        %v2223 = vpack.c.bf16 %v2163, %v2160
        %v2224 = vpack.c.bf16 %v2171, %v2168
        %v2225 = vpack.c.bf16 %v2179, %v2176
        %v2226 = vpack.c.bf16 %v2187, %v2184
        %v2227 = vpack.c.bf16 %v2195, %v2192
        %v2228 = vpack.c.bf16 %v2203, %v2200
        %v2229 = vpack.c.bf16 %v2211, %v2208
        %v2246 = vunpack.c.l.b16 %v2214
        %v2247 = vunpack.c.h.b16 %v2214
        %v2248 = vunpack.c.l.b16 %v2215
        %v2249 = vunpack.c.h.b16 %v2215
        %v2250 = vunpack.c.l.b16 %v2216
        %v2251 = vunpack.c.h.b16 %v2216
        %v2252 = vunpack.c.l.b16 %v2217
        %v2253 = vunpack.c.h.b16 %v2217
        %v2254 = vunpack.c.l.b16 %v2218
        %v2255 = vunpack.c.h.b16 %v2218
        %v2256 = vunpack.c.l.b16 %v2219
        %v2257 = vunpack.c.h.b16 %v2219
        %v2258 = vunpack.c.l.b16 %v2220
        %v2259 = vunpack.c.h.b16 %v2220
        %v2260 = vunpack.c.l.b16 %v2221
        %v2261 = vunpack.c.h.b16 %v2221
        %v2262 = vunpack.c.l.b16 %v2222
        %v2263 = vunpack.c.h.b16 %v2222
        %v2264 = vunpack.c.l.b16 %v2223
        %v2265 = vunpack.c.h.b16 %v2223
        %v2266 = vunpack.c.l.b16 %v2224
        %v2267 = vunpack.c.h.b16 %v2224
        %v2268 = vunpack.c.l.b16 %v2225
        %v2269 = vunpack.c.h.b16 %v2225
        %v2270 = vunpack.c.l.b16 %v2226
        %v2271 = vunpack.c.h.b16 %v2226
        %v2272 = vunpack.c.l.b16 %v2227
        %v2273 = vunpack.c.h.b16 %v2227
        %v2274 = vunpack.c.l.b16 %v2228
        %v2275 = vunpack.c.h.b16 %v2228
        %v2276 = vunpack.c.l.b16 %v2229
        %v2277 = vunpack.c.h.b16 %v2229
        %v2278 = vpack.c.b16 %v2246, %v2246
        %v2279 = vpack.c.b16 %v2247, %v2247
        %v2280 = vpack.c.b16 %v2248, %v2248
        %v2281 = vpack.c.b16 %v2249, %v2249
        %v2282 = vpack.c.b16 %v2250, %v2250
        %v2283 = vpack.c.b16 %v2251, %v2251
        %v2284 = vpack.c.b16 %v2252, %v2252
        %v2285 = vpack.c.b16 %v2253, %v2253
        %v2286 = vpack.c.b16 %v2254, %v2254
        %v2287 = vpack.c.b16 %v2255, %v2255
        %v2288 = vpack.c.b16 %v2256, %v2256
        %v2289 = vpack.c.b16 %v2257, %v2257
        %v2290 = vpack.c.b16 %v2258, %v2258
        %v2291 = vpack.c.b16 %v2259, %v2259
        %v2292 = vpack.c.b16 %v2260, %v2260
        %v2293 = vpack.c.b16 %v2261, %v2261
        %v2294 = vpack.c.b16 %v2262, %v2262
        %v2295 = vpack.c.b16 %v2263, %v2263
        %v2296 = vpack.c.b16 %v2264, %v2264
        %v2297 = vpack.c.b16 %v2265, %v2265
        %v2298 = vpack.c.b16 %v2266, %v2266
        %v2299 = vpack.c.b16 %v2267, %v2267
        %v2300 = vpack.c.b16 %v2268, %v2268
        %v2301 = vpack.c.b16 %v2269, %v2269
        %v2302 = vpack.c.b16 %v2270, %v2270
        %v2303 = vpack.c.b16 %v2271, %v2271
        %v2304 = vpack.c.b16 %v2272, %v2272
        %v2305 = vpack.c.b16 %v2273, %v2273
        %v2306 = vpack.c.b16 %v2274, %v2274
        %v2307 = vpack.c.b16 %v2275, %v2275
        %v2308 = vpack.c.b16 %v2276, %v2276
        %v2309 = vpack.c.b16 %v2277, %v2277
        %2342 = vst [vmem:[%s223] sm:$0xf] %v2278
        %2343 = vst [vmem:[%s223 + $0x4] sm:$0xf] %v2279
        %2344 = vst [vmem:[%s223 + $0x8] sm:$0xf] %v2280
        %2345 = vst [vmem:[%s223 + $0xc] sm:$0xf] %v2281
        %2346 = vst [vmem:[%s223 + $0x10] sm:$0xf] %v2282
        %2347 = vst [vmem:[%s223 + $0x14] sm:$0xf] %v2283
        %2348 = vst [vmem:[%s223 + $0x18] sm:$0xf] %v2284
        %2349 = vst [vmem:[%s223 + $0x1c] sm:$0xf] %v2285
        %2350 = vst [vmem:[%s223 + $0x20] sm:$0xf] %v2286
        %2351 = vst [vmem:[%s223 + $0x24] sm:$0xf] %v2287
        %2352 = vst [vmem:[%s223 + $0x28] sm:$0xf] %v2288
        %2353 = vst [vmem:[%s223 + $0x2c] sm:$0xf] %v2289
        %2354 = vst [vmem:[%s223 + $0x30] sm:$0xf] %v2290
        %2355 = vst [vmem:[%s223 + $0x34] sm:$0xf] %v2291
        %2356 = vst [vmem:[%s223 + $0x38] sm:$0xf] %v2292
        %2357 = vst [vmem:[%s223 + $0x3c] sm:$0xf] %v2293
        %2358 = vst [vmem:[%s223 + $0x40] sm:$0xf] %v2294
        %2359 = vst [vmem:[%s223 + $0x44] sm:$0xf] %v2295
        %2360 = vst [vmem:[%s223 + $0x48] sm:$0xf] %v2296
        %2361 = vst [vmem:[%s223 + $0x4c] sm:$0xf] %v2297
        %2362 = vst [vmem:[%s223 + $0x50] sm:$0xf] %v2298
        %2363 = vst [vmem:[%s223 + $0x54] sm:$0xf] %v2299
        %2364 = vst [vmem:[%s223 + $0x58] sm:$0xf] %v2300
        %2365 = vst [vmem:[%s223 + $0x5c] sm:$0xf] %v2301
        %2366 = vst [vmem:[%s223 + $0x60] sm:$0xf] %v2302
        %2367 = vst [vmem:[%s223 + $0x64] sm:$0xf] %v2303
        %2368 = vst [vmem:[%s223 + $0x68] sm:$0xf] %v2304
        %2369 = vst [vmem:[%s223 + $0x6c] sm:$0xf] %v2305
        %2370 = vst [vmem:[%s223 + $0x70] sm:$0xf] %v2306
        %2371 = vst [vmem:[%s223 + $0x74] sm:$0xf] %v2307
        %2372 = vst [vmem:[%s223 + $0x78] sm:$0xf] %v2308
        %2373 = vst [vmem:[%s223 + $0x7c] sm:$0xf] %v2309
        %v2374 = vadd.f32 %v2088, %v2091
        %v2375 = vadd.f32 %v2374, %v2096
        %v2376 = vadd.f32 %v2375, %v2099
        %v2377 = vadd.f32 %v2376, %v2104
        %v2378 = vadd.f32 %v2377, %v2107
        %v2379 = vadd.f32 %v2378, %v2112
        %v2380 = vadd.f32 %v2379, %v2115
        %v2381 = vadd.f32 %v2380, %v2120
        %v2382 = vadd.f32 %v2381, %v2123
        %v2383 = vadd.f32 %v2382, %v2128
        %v2384 = vadd.f32 %v2383, %v2131
        %v2385 = vadd.f32 %v2384, %v2136
        %v2386 = vadd.f32 %v2385, %v2139
        %v2387 = vadd.f32 %v2386, %v2144
        %v2388 = vadd.f32 %v2387, %v2147
        %v2389 = vadd.f32 %v2388, %v2152
        %v2390 = vadd.f32 %v2389, %v2155
        %v2391 = vadd.f32 %v2390, %v2160
        %v2392 = vadd.f32 %v2391, %v2163
        %v2393 = vadd.f32 %v2392, %v2168
        %v2394 = vadd.f32 %v2393, %v2171
        %v2395 = vadd.f32 %v2394, %v2176
        %v2396 = vadd.f32 %v2395, %v2179
        %v2397 = vadd.f32 %v2396, %v2184
        %v2398 = vadd.f32 %v2397, %v2187
        %v2399 = vadd.f32 %v2398, %v2192
        %v2400 = vadd.f32 %v2399, %v2195
        %v2401 = vadd.f32 %v2400, %v2200
        %v2402 = vadd.f32 %v2401, %v2203
        %v2403 = vadd.f32 %v2402, %v2208
        %v2404 = vadd.f32 %v2403, %v2211
        %v2405 = vrot.slane %v2404, 4
        %v2406 = vadd.f32 %v2404, %v2405
        %v2407 = vrot.slane %v2406, 2
        %v2408 = vadd.f32 %v2406, %v2407
        %v2409 = vrot.slane %v2408, 1
        %v2410 = vadd.f32 %v2408, %v2409
        %2411 = vst [vmem:[%s230] sm:$0x1] %v2410
        %v2412 = vmul.f32 %v2088, %v2088
        %v2413 = vmul.f32 %v2091, %v2091
        %v2414 = vmul.f32 %v2096, %v2096
        %v2415 = vmul.f32 %v2099, %v2099
        %v2416 = vmul.f32 %v2104, %v2104
        %v2417 = vmul.f32 %v2107, %v2107
        %v2418 = vmul.f32 %v2112, %v2112
        %v2419 = vmul.f32 %v2115, %v2115
        %v2420 = vmul.f32 %v2120, %v2120
        %v2421 = vmul.f32 %v2123, %v2123
        %v2422 = vmul.f32 %v2128, %v2128
        %v2423 = vmul.f32 %v2131, %v2131
        %v2424 = vmul.f32 %v2136, %v2136
        %v2425 = vmul.f32 %v2139, %v2139
        %v2426 = vmul.f32 %v2144, %v2144
        %v2427 = vmul.f32 %v2147, %v2147
        %v2428 = vmul.f32 %v2152, %v2152
        %v2429 = vmul.f32 %v2155, %v2155
        %v2430 = vmul.f32 %v2160, %v2160
        %v2431 = vmul.f32 %v2163, %v2163
        %v2432 = vmul.f32 %v2168, %v2168
        %v2433 = vmul.f32 %v2171, %v2171
        %v2434 = vmul.f32 %v2176, %v2176
        %v2435 = vmul.f32 %v2179, %v2179
        %v2436 = vmul.f32 %v2184, %v2184
        %v2437 = vmul.f32 %v2187, %v2187
        %v2438 = vmul.f32 %v2192, %v2192
        %v2439 = vmul.f32 %v2195, %v2195
        %v2440 = vmul.f32 %v2200, %v2200
        %v2441 = vmul.f32 %v2203, %v2203
        %v2442 = vmul.f32 %v2208, %v2208
        %v2443 = vmul.f32 %v2211, %v2211
        %v2444 = vadd.f32 %v2412, %v2413
        %v2445 = vadd.f32 %v2444, %v2414
        %v2446 = vadd.f32 %v2445, %v2415
        %v2447 = vadd.f32 %v2446, %v2416
        %v2448 = vadd.f32 %v2447, %v2417
        %v2449 = vadd.f32 %v2448, %v2418
        %v2450 = vadd.f32 %v2449, %v2419
        %v2451 = vadd.f32 %v2450, %v2420
        %v2452 = vadd.f32 %v2451, %v2421
        %v2453 = vadd.f32 %v2452, %v2422
        %v2454 = vadd.f32 %v2453, %v2423
        %v2455 = vadd.f32 %v2454, %v2424
        %v2456 = vadd.f32 %v2455, %v2425
        %v2457 = vadd.f32 %v2456, %v2426
        %v2458 = vadd.f32 %v2457, %v2427
        %v2459 = vadd.f32 %v2458, %v2428
        %v2460 = vadd.f32 %v2459, %v2429
        %v2461 = vadd.f32 %v2460, %v2430
        %v2462 = vadd.f32 %v2461, %v2431
        %v2463 = vadd.f32 %v2462, %v2432
        %v2464 = vadd.f32 %v2463, %v2433
        %v2465 = vadd.f32 %v2464, %v2434
        %v2466 = vadd.f32 %v2465, %v2435
        %v2467 = vadd.f32 %v2466, %v2436
        %v2468 = vadd.f32 %v2467, %v2437
        %v2469 = vadd.f32 %v2468, %v2438
        %v2470 = vadd.f32 %v2469, %v2439
        %v2471 = vadd.f32 %v2470, %v2440
        %v2472 = vadd.f32 %v2471, %v2441
        %v2473 = vadd.f32 %v2472, %v2442
        %v2474 = vadd.f32 %v2473, %v2443
        %v2475 = vrot.slane %v2474, 4
        %v2476 = vadd.f32 %v2474, %v2475
        %v2477 = vrot.slane %v2476, 2
        %v2478 = vadd.f32 %v2476, %v2477
        %v2479 = vrot.slane %v2478, 1
        %v2480 = vadd.f32 %v2478, %v2479
        %2481 = vst [vmem:[%s230 + $0x1] sm:$0x1] %v2480
        %s2482 = sand.u32 %s94, 1
        %s2483 = scalar_lea.sflag [#allocation4], %s2482
        %s2484 = sand.u32 %s94, 1
        %s2485 = smul.addr %s2484, 128
        %s2486 = scalar_lea.vmem [#allocation7], %s2485
        %s2487 = sand.u32 %s122, 1
        %s2488 = scalar_lea.sflag [#allocation9], %s2487
        %s2489 = sand.u32 %s122, 1
        %s2490 = smul.addr %s2489, 2
        %s2491 = scalar_lea.vmem [#allocation8], %s2490
        // Predicated region
        $region37: #{residual_block_forward.6} parent=27 // pred_check
          %p2492 = pneg %p104
        $region38: #{residual_block_forward.6} parent=27 // pred_check_branch
          %2494 = sbr.rel (%p2492) target = $region40
        $region39: #{residual_block_forward.6} parent=27 // pred_region
          %s2495 = smul.u32 32, %s30
          %s2497 = ssub.s32 2048, 2048
          %2498 = vsyncadd %s2483, %s2497
          %s2499 = smul.addr %s29, 32
          %s2500 = sadd.s32 %s2495, %s2499
          %s2501 = smul.addr %s2500, 64
          %s2502 = scalar_lea.hbm %s2, %s2501
          %s2503 = sshll.u32 %s2486, 4
          %s2504 = int_to_ptr.vmem [resolvable:$true] %s2503
          %2509 = dma.vmem_to_hbm [thread:$0]  %s2504, 2048, %s2502, %s2483, 64, 64, 4
        $region40: #{residual_block_forward.6} parent=27 // pred_fallthru
          _
        // Predicated region
        $region41: #{residual_block_forward.6} parent=27 // pred_check
          %p2510 = pneg %p132
        $region42: #{residual_block_forward.6} parent=27 // pred_check_branch
          %2512 = sbr.rel (%p2510) target = $region44
        $region43: #{residual_block_forward.6} parent=27 // pred_region
          %s2514 = ssub.s32 32, 32
          %2515 = vsyncadd %s2488, %s2514
          %s2516 = sadd.s32 %s30, %s29
          %s2517 = smul.addr %s2516, 32
          %s2518 = scalar_lea.hbm %s3, %s2517
          %s2520 = sshll.u32 %s2491, 4
          %s2521 = int_to_ptr.vmem [resolvable:$true] %s2520
          %2523 = dma.vmem_to_hbm [thread:$0]  %s2521, 32, %s2518, %s2488
        $region44: #{residual_block_forward.6} parent=27 // pred_fallthru
          _
      $region28: #{residual_block_forward.6} parent=5 // pred_fallthru
        _
      %p2524 = scmp.le.s32.totalorder 2, %s20
      // Predicated region
      $region45: #{residual_block_forward.6} parent=5 // pred_check
        %p2525 = pneg %p2524
      $region46: #{residual_block_forward.6} parent=5 // pred_check_branch
        %2527 = sbr.rel (%p2525) target = $region48
      $region47: #{residual_block_forward.6} parent=5 // pred_region
        %s2528 = ssub.s32 %s20, 2
        // Predicated region
        $region49: #{residual_block_forward.6} parent=47 // pred_check
          %p2529 = pneg %p110
        $region50: #{residual_block_forward.6} parent=47 // pred_check_branch
          %2531 = sbr.rel (%p2529) target = $region52
        $region51: #{residual_block_forward.6} parent=47 // pred_region
          %s2532 = sand.u32 %s95, 1
          %s2533 = scalar_lea.sflag [#allocation4], %s2532
          %s2534 = sand.u32 %s95, 1
          %s2535 = smul.addr %s2534, 128
          %s2536 = scalar_lea.vmem [#allocation7], %s2535
          %2537 = dma.done %s2533, 2048
        $region52: #{residual_block_forward.6} parent=47 // pred_fallthru
          _
        // Predicated region
        $region53: #{residual_block_forward.6} parent=47 // pred_check
          %p2538 = pneg %p138
        $region54: #{residual_block_forward.6} parent=47 // pred_check_branch
          %2540 = sbr.rel (%p2538) target = $region56
        $region55: #{residual_block_forward.6} parent=47 // pred_region
          %s2541 = sand.u32 %s123, 1
          %s2542 = scalar_lea.sflag [#allocation9], %s2541
          %s2543 = sand.u32 %s123, 1
          %s2544 = smul.addr %s2543, 2
          %s2545 = scalar_lea.vmem [#allocation8], %s2544
          %2546 = dma.done %s2542, 32
        $region56: #{residual_block_forward.6} parent=47 // pred_fallthru
          _
      $region48: #{residual_block_forward.6} parent=5 // pred_fallthru
        _
    $region6: #{residual_block_forward.6} parent=1 // loop_footer
      %s24 = sadd.s32 1, %s20
    $region7: #{residual_block_forward.6} parent=1 // loop_footer_branch
      %19 = sbr.rel target = $region3
    $region8: #{residual_block_forward.6} parent=1 // loop_exit
      _
    %2547 = vsyncpa [#allocation3], 1
    %s2548 = scalar_lea.sflag [#allocation3], 1
    %2549 = vsyncpa %s2548, 1
    %2550 = vsyncpa [#allocation6], 1
    %2551 = vsyncpa [#allocation4], 1
    %s2552 = scalar_lea.sflag [#allocation4], 1
    %2553 = vsyncpa %s2552, 1
    %2554 = vsyncpa [#allocation9], 1
    %s2555 = scalar_lea.sflag [#allocation9], 1
    %2556 = vsyncpa %s2555, 1

</llo_original>
